<compile_context>
chip_gen: v7x
topology: tpu7x:2x2x1
jax: 0.10.0
libtpu: 0.0.40
codegen_flags: <defaults>
</compile_context>

<pallas_src>
import math

import jax
import jax.numpy as jnp
from jax.experimental import pallas as pl
from jax.experimental.pallas import tpu as pltpu  # noqa: F401  (TPU backend)

# -------------------- config (small, consistent with the module) ------------
B = 2            # batch
S = 8            # sequence length
D_MODEL = 32     # config.d_model
HEAD_NUM = 4     # config.head_num
K_DIM = 8        # config.k_dim  (head_num * k_dim == d_model here)
DV = D_MODEL // HEAD_NUM
D_FF = 64        # config.d_ff
MAX_LEN = 16     # config.max_len
NUM_LAYER = 2    # config.num_layer
EMBED_NUM = 50   # embedding_num
LN_EPS = 1e-5

VEC_W = max(3 * D_MODEL, D_FF)   # width of packed per-layer vector rows (96)
N_VEC = 8                        # bqkv ln1g ln1b b1 b2 ln2g ln2b pad
CONST_ROWS = EMBED_NUM + S       # embedding table rows + positional rows

assert S <= MAX_LEN


# ---------------------------- fused Pallas kernel ----------------------------
def encoder_fused_kernel(ids_ref, mask_ref, const_ref,
                         wqkv_ref, w1_ref, w2_ref, vec_ref, out_ref):
    """Whole encoder forward: embedding gather + pos add + NUM_LAYER layers.

    ids_ref  : (B*S, 1) int32        token ids
    mask_ref : (B, 1, S) float32     key-position mask (>0 == masked)
    const_ref: (EMBED_NUM+S, D) f32  [embedding table ; precomputed pos-enc]
    wqkv_ref : (L, D, 3D)   bf16     folded + fused QKV projection weights
    w1_ref   : (L, D, D_FF) bf16
    w2_ref   : (L, D_FF, D) bf16
    vec_ref  : (L, N_VEC, VEC_W) f32 packed biases / LayerNorm params
    out_ref  : (B*S, D) f32
    """
    # ---- in-kernel embedding gather: one-hot @ table (exact, one MXU op) ----
    ids = ids_ref[...]                                                # (B*S, 1)
    iota = jax.lax.broadcasted_iota(jnp.int32, (B * S, EMBED_NUM), 1)
    onehot = jnp.where(iota == ids, 1.0, 0.0)                         # (B*S, V)
    emb_tab = const_ref[0:EMBED_NUM, :]                               # (V, D)
    src = jnp.dot(onehot, emb_tab,
                  preferred_element_type=jnp.float32,
                  precision=jax.lax.Precision.HIGHEST)                # (B*S, D)

    # ---- positional encoding (precomputed offline: W_pos[:S] + b_pos) ----
    pos = const_ref[EMBED_NUM:EMBED_NUM + S, :]                       # (S, D)
    x = src + jnp.concatenate([pos] * B, axis=0)                      # (B*S, D)

    # ---- mask predicate hoisted out of the layer/head loops ----
    mask_bss = jnp.broadcast_to(mask_ref[...], (B, S, S))             # f32
    mask_stack = jnp.concatenate([mask_bss] * HEAD_NUM, axis=0) > 0.0  # (H*B,S,S)

    scale = 1.0 / math.sqrt(K_DIM)

    for li in range(NUM_LAYER):                                       # static unroll
        vecs = vec_ref[li]                                            # (N_VEC, VEC_W)
        bqkv = vecs[0:1, 0:3 * D_MODEL]
        ln1g = vecs[1:2, 0:D_MODEL]
        ln1b = vecs[2:3, 0:D_MODEL]
        b1   = vecs[3:4, 0:D_FF]
        b2   = vecs[4:5, 0:D_MODEL]
        ln2g = vecs[5:6, 0:D_MODEL]
        ln2b = vecs[6:7, 0:D_MODEL]

        # --- fused Q/K/V projection: one bf16 matmul, f32 accumulate ---
        qkv = jnp.dot(x.astype(jnp.bfloat16), wqkv_ref[li],
                      preferred_element_type=jnp.float32) + bqkv      # (B*S, 3D)

        # --- stack heads on the leading axis (lane slices + axis-0 concat) ---
        def split_heads(base, width):
            return jnp.concatenate(
                [qkv[:, base + h * width: base + (h + 1) * width]
                 .reshape(B, S, width) for h in range(HEAD_NUM)],
                axis=0)                                               # (H*B, S, width)

        q_st = split_heads(0, K_DIM).astype(jnp.bfloat16)             # (H*B, S, K)
        k_st = split_heads(D_MODEL, K_DIM).astype(jnp.bfloat16)       # (H*B, S, K)
        v_st = split_heads(2 * D_MODEL, DV).astype(jnp.bfloat16)      # (H*B, S, DV)

        # --- one batched attention: single mask / softmax per layer ---
        s = jnp.einsum('bqk,bsk->bqs', q_st, k_st,
                       preferred_element_type=jnp.float32) * scale    # (H*B, S, S)
        # PyTorch: masked_fill(mask, 1e-10) BEFORE softmax (kept faithful).
        s = jnp.where(mask_stack, 1e-10, s)
        s = s - jnp.max(s, axis=-1, keepdims=True)
        p = jnp.exp(s)
        p = p * pl.reciprocal(jnp.sum(p, axis=-1, keepdims=True), approx=True)
        o = jnp.einsum('bqs,bsd->bqd', p.astype(jnp.bfloat16), v_st,
                       preferred_element_type=jnp.float32)            # (H*B, S, DV)

        # rebuild (B*S, D): per-head leading slices -> lane concat
        attn = jnp.concatenate(
            [o[h * B:(h + 1) * B] for h in range(HEAD_NUM)], axis=-1
        ).reshape(B * S, D_MODEL)

        # --- residual + LayerNorm 1 (f32) ---
        h1 = attn + x
        mu = jnp.mean(h1, axis=-1, keepdims=True)
        var = jnp.mean((h1 - mu) ** 2, axis=-1, keepdims=True)
        h1 = (h1 - mu) * jax.lax.rsqrt(var + LN_EPS) * ln1g + ln1b

        # --- Position_Wise_Network: fc2(relu(fc1(x))), bf16 operands ---
        ff = jnp.dot(h1.astype(jnp.bfloat16), w1_ref[li],
                     preferred_element_type=jnp.float32) + b1
        ff = jnp.maximum(ff, 0.0)
        ff = jnp.dot(ff.astype(jnp.bfloat16), w2_ref[li],
                     preferred_element_type=jnp.float32) + b2

        # --- residual + LayerNorm 2 (f32) ---
        h2 = ff + h1
        mu2 = jnp.mean(h2, axis=-1, keepdims=True)
        var2 = jnp.mean((h2 - mu2) ** 2, axis=-1, keepdims=True)
        x = (h2 - mu2) * jax.lax.rsqrt(var2 + LN_EPS) * ln2g + ln2b

    out_ref[...] = x                                                  # (B*S, D)


# --------------------------- parameter init ----------------------------------
def init_params(key):
    def nrm(k, shape, scale=0.02):
        return (scale * jax.random.normal(k, shape)).astype(jnp.float32)

    keys = jax.random.split(key, 4 + NUM_LAYER)
    params = {}
    params["embedding"] = nrm(keys[0], (EMBED_NUM, D_MODEL), 1.0)
    params["w_pos"] = nrm(keys[1], (MAX_LEN, D_MODEL))
    params["b_pos"] = nrm(keys[2], (1, D_MODEL))

    layers = []
    for li in range(NUM_LAYER):
        lk = jax.random.split(keys[4 + li], 16)
        layer = [
            nrm(lk[0], (D_MODEL, D_MODEL)), nrm(lk[1], (1, D_MODEL)),   # q_linear
            nrm(lk[2], (D_MODEL, D_MODEL)), nrm(lk[3], (1, D_MODEL)),   # k_linear
            nrm(lk[4], (D_MODEL, D_MODEL)), nrm(lk[5], (1, D_MODEL)),   # v_linear
            nrm(lk[6], (D_MODEL, HEAD_NUM * K_DIM)), nrm(lk[7], (1, HEAD_NUM * K_DIM)),  # q_multi
            nrm(lk[8], (D_MODEL, HEAD_NUM * K_DIM)), nrm(lk[9], (1, HEAD_NUM * K_DIM)),  # k_multi
            nrm(lk[10], (D_MODEL, D_MODEL)), nrm(lk[11], (1, D_MODEL)),  # v_multi
            jnp.ones((1, D_MODEL), jnp.float32), jnp.zeros((1, D_MODEL), jnp.float32),   # LN1
            nrm(lk[12], (D_MODEL, D_FF)), nrm(lk[13], (1, D_FF)),        # fc1
            nrm(lk[14], (D_FF, D_MODEL)), nrm(lk[15], (1, D_MODEL)),     # fc2
            jnp.ones((1, D_MODEL), jnp.float32), jnp.zeros((1, D_MODEL), jnp.float32),   # LN2
        ]
        layers.append(layer)
    params["layers"] = layers
    return params


def fuse_params(params):
    """Fold double projections, fuse QKV, pack vectors, precompute pos-enc."""
    def pad_vec(v):                              # (1, n) -> (1, VEC_W)
        return jnp.pad(v, ((0, 0), (0, VEC_W - v.shape[1])))

    wqkv_l, w1_l, w2_l, vec_l = [], [], [], []
    for layer in params["layers"]:
        (wq, bq, wk, bk, wv, bv,
         wqm, bqm, wkm, bkm, wvm, bvm,
         ln1g, ln1b, w1, b1, w2, b2, ln2g, ln2b) = layer
        # (x@Wq+bq)@Wqm+bqm == x@(Wq@Wqm) + (bq@Wqm+bqm)
        wq_f = wq @ wqm; bq_f = bq @ wqm + bqm
        wk_f = wk @ wkm; bk_f = bk @ wkm + bkm
        wv_f = wv @ wvm; bv_f = bv @ wvm + bvm
        wqkv = jnp.concatenate([wq_f, wk_f, wv_f], axis=1)              # (D, 3D)
        bqkv = jnp.concatenate([bq_f, bk_f, bv_f], axis=1)              # (1, 3D)

        vec = jnp.concatenate(
            [pad_vec(bqkv), pad_vec(ln1g), pad_vec(ln1b), pad_vec(b1),
             pad_vec(b2), pad_vec(ln2g), pad_vec(ln2b),
             jnp.zeros((1, VEC_W), jnp.float32)], axis=0)               # (N_VEC, VEC_W)

        wqkv_l.append(wqkv); w1_l.append(w1); w2_l.append(w2); vec_l.append(vec)

    pos = params["w_pos"][:S] + params["b_pos"]                         # (S, D)
    const = jnp.concatenate([params["embedding"], pos], axis=0)         # (V+S, D)
    return {
        "const": const.astype(jnp.float32),
        "wqkv": jnp.stack(wqkv_l).astype(jnp.bfloat16),
        "w1": jnp.stack(w1_l).astype(jnp.bfloat16),
        "w2": jnp.stack(w2_l).astype(jnp.bfloat16),
        "vec": jnp.stack(vec_l).astype(jnp.float32),
    }


# ------------------------------- cost hint ------------------------------------
_FLOPS = (2 * B * S * EMBED_NUM * D_MODEL                       # one-hot gather
          + NUM_LAYER * (2 * B * S * D_MODEL * 3 * D_MODEL      # fused QKV
                         + 2 * 2 * HEAD_NUM * B * S * S * K_DIM  # QK^T + PV
                         + 2 * 2 * B * S * D_MODEL * D_FF))      # fc1 + fc2
_TRANS = NUM_LAYER * (HEAD_NUM * B * S * S + 4 * B * S)          # exp + rsqrt/recip
_BYTES = (CONST_ROWS * D_MODEL * 4 + B * S * 4 + B * S * 4
          + NUM_LAYER * (D_MODEL * 3 * D_MODEL * 2 + D_MODEL * D_FF * 2
                         + D_FF * D_MODEL * 2 + N_VEC * VEC_W * 4)
          + B * S * D_MODEL * 4)


# ------------------------------- wrappers -------------------------------------
@jax.jit
def encoder_forward(fused, src_ids, mask_f):
    ids_col = src_ids.reshape(B * S, 1).astype(jnp.int32)
    out = pl.pallas_call(
        encoder_fused_kernel,
        out_shape=jax.ShapeDtypeStruct((B * S, D_MODEL), jnp.float32),
        cost_estimate=pl.CostEstimate(
            flops=_FLOPS, transcendentals=_TRANS, bytes_accessed=_BYTES),
    )(ids_col, mask_f, fused["const"],
      fused["wqkv"], fused["w1"], fused["w2"], fused["vec"])
    return out.reshape(B, S, D_MODEL)


# --------------------------- pure-JAX reference -------------------------------
def encoder_reference(params, src_ids, mask_bool):
    src = params["embedding"][src_ids]
    pos = jnp.eye(S, MAX_LEN, dtype=jnp.float32) @ params["w_pos"] + params["b_pos"]
    x = src + pos[None]
    mask4 = mask_bool[:, None, None, :]                        # (B,1,1,S)
    for layer in params["layers"]:
        (wq, bq, wk, bk, wv, bv, wqm, bqm, wkm, bkm, wvm, bvm,
         ln1g, ln1b, w1, b1, w2, b2, ln2g, ln2b) = layer
        q = (x @ wq + bq) @ wqm + bqm
        k = (x @ wk + bk) @ wkm + bkm
        v = (x @ wv + bv) @ wvm + bvm
        q = q.reshape(B, S, HEAD_NUM, -1).transpose(0, 2, 1, 3)
        k = k.reshape(B, S, HEAD_NUM, -1).transpose(0, 2, 1, 3)
        v = v.reshape(B, S, HEAD_NUM, -1).transpose(0, 2, 1, 3)
        s = jnp.einsum('bhqk,bhsk->bhqs', q, k) / math.sqrt(K_DIM)
        s = jnp.where(mask4, 1e-10, s)
        p = jax.nn.softmax(s, axis=-1)
        o = jnp.einsum('bhqs,bhsd->bhqd', p, v)
        o = o.transpose(0, 2, 1, 3).reshape(B, S, D_MODEL)
        x = o + x
        mu = x.mean(-1, keepdims=True); var = ((x - mu) ** 2).mean(-1, keepdims=True)
        x = (x - mu) * jax.lax.rsqrt(var + LN_EPS) * ln1g + ln1b
        ff = jnp.maximum(x @ w1 + b1, 0.0) @ w2 + b2
        x2 = ff + x
        mu2 = x2.mean(-1, keepdims=True); var2 = ((x2 - mu2) ** 2).mean(-1, keepdims=True)
        x = (x2 - mu2) * jax.lax.rsqrt(var2 + LN_EPS) * ln2g + ln2b
    return x


# ------------------------------- main ----------------------------------------
if __name__ == "__main__":
    key = jax.random.PRNGKey(0)
    k_param, k_src, k_mask = jax.random.split(key, 3)

    params = init_params(k_param)
    fused = fuse_params(params)

    src_ids = jax.random.randint(k_src, (B, S), 0, EMBED_NUM)       # token ids
    mask_bool = jax.random.bernoulli(k_mask, 0.2, (B, S))           # True = masked
    mask_f = mask_bool.astype(jnp.float32).reshape(B, 1, S)

    # TODO(synk): dropout is treated as inference-mode identity (no RNG).
    out = encoder_forward(fused, src_ids, mask_f)
    out = jax.block_until_ready(out)

    assert out.shape == (B, S, D_MODEL), out.shape
    assert bool(jnp.all(jnp.isfinite(out)))

    ref = encoder_reference(params, src_ids, mask_bool)
    max_err = float(jnp.max(jnp.abs(out - ref)))
    assert max_err < 1e-2, f"max abs err {max_err}"

    print("KERNEL_OK")
</pallas_src>

<mosaic_0001>
module attributes {stable_mosaic.version = 11 : i64} {
  func.func @encoder_fused_kernel(%arg0: memref<16x1xi32, #tpu.memory_space<vmem>>, %arg1: memref<2x1x8xf32, #tpu.memory_space<vmem>>, %arg2: memref<58x32xf32, #tpu.memory_space<vmem>>, %arg3: memref<2x32x96xbf16, #tpu.memory_space<vmem>>, %arg4: memref<2x32x64xbf16, #tpu.memory_space<vmem>>, %arg5: memref<2x64x32xbf16, #tpu.memory_space<vmem>>, %arg6: memref<2x8x96xf32, #tpu.memory_space<vmem>>, %arg7: memref<16x32xf32, #tpu.memory_space<vmem>>) attributes {dimension_semantics = [], scalar_prefetch = 0 : i64, scratch_operands = 0 : i64, tpu.core_type = #tpu.core_type<tc>} {
    %c0 = arith.constant 0 : index
    %c0_0 = arith.constant 0 : index
    %0 = vector.load %arg0[%c0, %c0_0] : memref<16x1xi32, #tpu.memory_space<vmem>>, vector<16x1xi32>
    %1 = tpu.iota {dimensions = array<i32: 1>} : vector<16x50xi32>
    %2 = vector.broadcast %0 : vector<16x1xi32> to vector<16x50xi32>
    %3 = arith.cmpi eq, %1, %2 : vector<16x50xi32>
    %cst = arith.constant 1.000000e+00 : f32
    %cst_1 = arith.constant 0.000000e+00 : f32
    %4 = vector.broadcast %cst : f32 to vector<16x50xf32>
    %5 = vector.broadcast %cst_1 : f32 to vector<16x50xf32>
    %6 = arith.select %3, %4, %5 : vector<16x50xi1>, vector<16x50xf32>
    %c0_2 = arith.constant 0 : index
    %c0_3 = arith.constant 0 : index
    %7 = vector.load %arg2[%c0_2, %c0_3] : memref<58x32xf32, #tpu.memory_space<vmem>>, vector<50x32xf32>
    %cst_4 = arith.constant dense<0.000000e+00> : vector<16x32xf32>
    %8 = tpu.matmul %6, %7, %cst_4 {dimension_numbers = #tpu.dot_dimension_numbers<[1], [0], [0], [1], [0, 0, 1, 1], [], []>, precision = #tpu.contract_precision<fp32>} : vector<16x50xf32>, vector<50x32xf32>, vector<16x32xf32> -> vector<16x32xf32>
    %c50 = arith.constant 50 : index
    %c0_5 = arith.constant 0 : index
    %9 = vector.load %arg2[%c50, %c0_5] : memref<58x32xf32, #tpu.memory_space<vmem>>, vector<8x32xf32>
    %10 = tpu.concatenate %9, %9 in 0 : vector<8x32xf32>, vector<8x32xf32> -> vector<16x32xf32>
    %11 = arith.addf %8, %10 : vector<16x32xf32>
    %c0_6 = arith.constant 0 : index
    %c0_7 = arith.constant 0 : index
    %c0_8 = arith.constant 0 : index
    %12 = vector.load %arg1[%c0_6, %c0_7, %c0_8] : memref<2x1x8xf32, #tpu.memory_space<vmem>>, vector<2x1x8xf32>
    %13 = vector.shape_cast %12 : vector<2x1x8xf32> to vector<2x1x8xf32>
    %14 = vector.broadcast %13 : vector<2x1x8xf32> to vector<2x8x8xf32>
    %15 = tpu.concatenate %14, %14, %14, %14 in 0 : vector<2x8x8xf32>, vector<2x8x8xf32>, vector<2x8x8xf32>, vector<2x8x8xf32> -> vector<8x8x8xf32>
    %cst_9 = arith.constant 0.000000e+00 : f32
    %16 = vector.broadcast %cst_9 : f32 to vector<8x8x8xf32>
    %17 = arith.cmpf ogt, %15, %16 : vector<8x8x8xf32>
    %c0_10 = arith.constant 0 : index
    %c0_11 = arith.constant 0 : index
    %c0_12 = arith.constant 0 : index
    %18 = vector.load %arg6[%c0_10, %c0_11, %c0_12] : memref<2x8x96xf32, #tpu.memory_space<vmem>>, vector<1x8x96xf32>
    %19 = vector.shape_cast %18 : vector<1x8x96xf32> to vector<8x96xf32>
    %20 = vector.extract_strided_slice %19 {offsets = [0, 0], sizes = [1, 96], strides = [1, 1]} : vector<8x96xf32> to vector<1x96xf32>
    %21 = vector.extract_strided_slice %19 {offsets = [1, 0], sizes = [1, 32], strides = [1, 1]} : vector<8x96xf32> to vector<1x32xf32>
    %22 = vector.extract_strided_slice %19 {offsets = [2, 0], sizes = [1, 32], strides = [1, 1]} : vector<8x96xf32> to vector<1x32xf32>
    %23 = vector.extract_strided_slice %19 {offsets = [3, 0], sizes = [1, 64], strides = [1, 1]} : vector<8x96xf32> to vector<1x64xf32>
    %24 = vector.extract_strided_slice %19 {offsets = [4, 0], sizes = [1, 32], strides = [1, 1]} : vector<8x96xf32> to vector<1x32xf32>
    %25 = vector.extract_strided_slice %19 {offsets = [5, 0], sizes = [1, 32], strides = [1, 1]} : vector<8x96xf32> to vector<1x32xf32>
    %26 = vector.extract_strided_slice %19 {offsets = [6, 0], sizes = [1, 32], strides = [1, 1]} : vector<8x96xf32> to vector<1x32xf32>
    %27 = arith.truncf %11 : vector<16x32xf32> to vector<16x32xbf16>
    %c0_13 = arith.constant 0 : index
    %c0_14 = arith.constant 0 : index
    %c0_15 = arith.constant 0 : index
    %28 = vector.load %arg3[%c0_13, %c0_14, %c0_15] : memref<2x32x96xbf16, #tpu.memory_space<vmem>>, vector<1x32x96xbf16>
    %29 = vector.shape_cast %28 : vector<1x32x96xbf16> to vector<32x96xbf16>
    %cst_16 = arith.constant dense<0.000000e+00> : vector<16x96xf32>
    %30 = tpu.matmul %27, %29, %cst_16 {dimension_numbers = #tpu.dot_dimension_numbers<[1], [0], [0], [1], [0, 0, 1, 1], [], []>} : vector<16x32xbf16>, vector<32x96xbf16>, vector<16x96xf32> -> vector<16x96xf32>
    %31 = vector.broadcast %20 : vector<1x96xf32> to vector<16x96xf32>
    %32 = arith.addf %30, %31 : vector<16x96xf32>
    %33 = vector.extract_strided_slice %32 {offsets = [0, 0], sizes = [16, 8], strides = [1, 1]} : vector<16x96xf32> to vector<16x8xf32>
    %34 = vector.shape_cast %33 : vector<16x8xf32> to vector<2x8x8xf32>
    %35 = vector.extract_strided_slice %32 {offsets = [0, 8], sizes = [16, 8], strides = [1, 1]} : vector<16x96xf32> to vector<16x8xf32>
    %36 = vector.shape_cast %35 : vector<16x8xf32> to vector<2x8x8xf32>
    %37 = vector.extract_strided_slice %32 {offsets = [0, 16], sizes = [16, 8], strides = [1, 1]} : vector<16x96xf32> to vector<16x8xf32>
    %38 = vector.shape_cast %37 : vector<16x8xf32> to vector<2x8x8xf32>
    %39 = vector.extract_strided_slice %32 {offsets = [0, 24], sizes = [16, 8], strides = [1, 1]} : vector<16x96xf32> to vector<16x8xf32>
    %40 = vector.shape_cast %39 : vector<16x8xf32> to vector<2x8x8xf32>
    %41 = tpu.concatenate %34, %36, %38, %40 in 0 : vector<2x8x8xf32>, vector<2x8x8xf32>, vector<2x8x8xf32>, vector<2x8x8xf32> -> vector<8x8x8xf32>
    %42 = arith.truncf %41 : vector<8x8x8xf32> to vector<8x8x8xbf16>
    %43 = vector.extract_strided_slice %32 {offsets = [0, 32], sizes = [16, 8], strides = [1, 1]} : vector<16x96xf32> to vector<16x8xf32>
    %44 = vector.shape_cast %43 : vector<16x8xf32> to vector<2x8x8xf32>
    %45 = vector.extract_strided_slice %32 {offsets = [0, 40], sizes = [16, 8], strides = [1, 1]} : vector<16x96xf32> to vector<16x8xf32>
    %46 = vector.shape_cast %45 : vector<16x8xf32> to vector<2x8x8xf32>
    %47 = vector.extract_strided_slice %32 {offsets = [0, 48], sizes = [16, 8], strides = [1, 1]} : vector<16x96xf32> to vector<16x8xf32>
    %48 = vector.shape_cast %47 : vector<16x8xf32> to vector<2x8x8xf32>
    %49 = vector.extract_strided_slice %32 {offsets = [0, 56], sizes = [16, 8], strides = [1, 1]} : vector<16x96xf32> to vector<16x8xf32>
    %50 = vector.shape_cast %49 : vector<16x8xf32> to vector<2x8x8xf32>
    %51 = tpu.concatenate %44, %46, %48, %50 in 0 : vector<2x8x8xf32>, vector<2x8x8xf32>, vector<2x8x8xf32>, vector<2x8x8xf32> -> vector<8x8x8xf32>
    %52 = arith.truncf %51 : vector<8x8x8xf32> to vector<8x8x8xbf16>
    %53 = vector.extract_strided_slice %32 {offsets = [0, 64], sizes = [16, 8], strides = [1, 1]} : vector<16x96xf32> to vector<16x8xf32>
    %54 = vector.shape_cast %53 : vector<16x8xf32> to vector<2x8x8xf32>
    %55 = vector.extract_strided_slice %32 {offsets = [0, 72], sizes = [16, 8], strides = [1, 1]} : vector<16x96xf32> to vector<16x8xf32>
    %56 = vector.shape_cast %55 : vector<16x8xf32> to vector<2x8x8xf32>
    %57 = vector.extract_strided_slice %32 {offsets = [0, 80], sizes = [16, 8], strides = [1, 1]} : vector<16x96xf32> to vector<16x8xf32>
    %58 = vector.shape_cast %57 : vector<16x8xf32> to vector<2x8x8xf32>
    %59 = vector.extract_strided_slice %32 {offsets = [0, 88], sizes = [16, 8], strides = [1, 1]} : vector<16x96xf32> to vector<16x8xf32>
    %60 = vector.shape_cast %59 : vector<16x8xf32> to vector<2x8x8xf32>
    %61 = tpu.concatenate %54, %56, %58, %60 in 0 : vector<2x8x8xf32>, vector<2x8x8xf32>, vector<2x8x8xf32>, vector<2x8x8xf32> -> vector<8x8x8xf32>
    %62 = arith.truncf %61 : vector<8x8x8xf32> to vector<8x8x8xbf16>
    "tpu.trace_start"() <{level = 10 : i32, message = "bqk,bsk->bqs"}> : () -> ()
    %cst_17 = arith.constant dense<0.000000e+00> : vector<8x8x8xf32>
    %63 = tpu.matmul %42, %52, %cst_17 {dimension_numbers = #tpu.dot_dimension_numbers<[2], [2], [1], [1], [0, 0, 0, 1, 1, 1], [0], [0]>} : vector<8x8x8xbf16>, vector<8x8x8xbf16>, vector<8x8x8xf32> -> vector<8x8x8xf32>
    "tpu.trace_stop"() : () -> ()
    %cst_18 = arith.constant 0.353553385 : f32
    %64 = vector.broadcast %cst_18 : f32 to vector<8x8x8xf32>
    %65 = arith.mulf %63, %64 : vector<8x8x8xf32>
    %cst_19 = arith.constant 1.000000e-10 : f32
    %66 = vector.broadcast %cst_19 : f32 to vector<8x8x8xf32>
    %67 = arith.select %17, %66, %65 : vector<8x8x8xi1>, vector<8x8x8xf32>
    %cst_20 = arith.constant dense<0xFF800000> : vector<8x8xf32>
    %68 = vector.multi_reduction <maximumf>, %67, %cst_20 [2] : vector<8x8x8xf32> to vector<8x8xf32>
    %69 = vector.shape_cast %68 : vector<8x8xf32> to vector<8x8x1xf32>
    %70 = vector.broadcast %69 : vector<8x8x1xf32> to vector<8x8x8xf32>
    %71 = arith.subf %67, %70 : vector<8x8x8xf32>
    %72 = math.exp %71 : vector<8x8x8xf32>
    %cst_21 = arith.constant dense<0.000000e+00> : vector<8x8xf32>
    %73 = vector.multi_reduction <add>, %72, %cst_21 [2] : vector<8x8x8xf32> to vector<8x8xf32>
    %74 = vector.shape_cast %73 : vector<8x8xf32> to vector<8x8x1xf32>
    %75 = tpu.reciprocal %74 {approx = true} : vector<8x8x1xf32> -> vector<8x8x1xf32>
    %76 = vector.broadcast %75 : vector<8x8x1xf32> to vector<8x8x8xf32>
    %77 = arith.mulf %72, %76 : vector<8x8x8xf32>
    %78 = arith.truncf %77 : vector<8x8x8xf32> to vector<8x8x8xbf16>
    "tpu.trace_start"() <{level = 10 : i32, message = "bqs,bsd->bqd"}> : () -> ()
    %cst_22 = arith.constant dense<0.000000e+00> : vector<8x8x8xf32>
    %79 = tpu.matmul %78, %62, %cst_22 {dimension_numbers = #tpu.dot_dimension_numbers<[2], [1], [1], [2], [0, 0, 0, 1, 1, 2], [0], [0]>} : vector<8x8x8xbf16>, vector<8x8x8xbf16>, vector<8x8x8xf32> -> vector<8x8x8xf32>
    "tpu.trace_stop"() : () -> ()
    %80 = vector.extract_strided_slice %79 {offsets = [0, 0, 0], sizes = [2, 8, 8], strides = [1, 1, 1]} : vector<8x8x8xf32> to vector<2x8x8xf32>
    %81 = vector.extract_strided_slice %79 {offsets = [2, 0, 0], sizes = [2, 8, 8], strides = [1, 1, 1]} : vector<8x8x8xf32> to vector<2x8x8xf32>
    %82 = vector.extract_strided_slice %79 {offsets = [4, 0, 0], sizes = [2, 8, 8], strides = [1, 1, 1]} : vector<8x8x8xf32> to vector<2x8x8xf32>
    %83 = vector.extract_strided_slice %79 {offsets = [6, 0, 0], sizes = [2, 8, 8], strides = [1, 1, 1]} : vector<8x8x8xf32> to vector<2x8x8xf32>
    %84 = tpu.concatenate %80, %81, %82, %83 in 2 : vector<2x8x8xf32>, vector<2x8x8xf32>, vector<2x8x8xf32>, vector<2x8x8xf32> -> vector<2x8x32xf32>
    %85 = vector.shape_cast %84 : vector<2x8x32xf32> to vector<16x32xf32>
    %86 = arith.addf %85, %11 : vector<16x32xf32>
    %cst_23 = arith.constant dense<0.000000e+00> : vector<16xf32>
    %87 = vector.multi_reduction <add>, %86, %cst_23 [1] : vector<16x32xf32> to vector<16xf32>
    %88 = vector.shape_cast %87 : vector<16xf32> to vector<16x1xf32>
    %cst_24 = arith.constant 3.200000e+01 : f32
    %89 = vector.broadcast %cst_24 : f32 to vector<16x1xf32>
    %90 = arith.divf %88, %89 : vector<16x1xf32>
    %91 = vector.broadcast %90 : vector<16x1xf32> to vector<16x32xf32>
    %92 = arith.subf %86, %91 : vector<16x32xf32>
    %93 = arith.mulf %92, %92 : vector<16x32xf32>
    %cst_25 = arith.constant dense<0.000000e+00> : vector<16xf32>
    %94 = vector.multi_reduction <add>, %93, %cst_25 [1] : vector<16x32xf32> to vector<16xf32>
    %95 = vector.shape_cast %94 : vector<16xf32> to vector<16x1xf32>
    %cst_26 = arith.constant 3.200000e+01 : f32
    %96 = vector.broadcast %cst_26 : f32 to vector<16x1xf32>
    %97 = arith.divf %95, %96 : vector<16x1xf32>
    %98 = vector.broadcast %90 : vector<16x1xf32> to vector<16x32xf32>
    %99 = arith.subf %86, %98 : vector<16x32xf32>
    %cst_27 = arith.constant 9.99999974E-6 : f32
    %100 = vector.broadcast %cst_27 : f32 to vector<16x1xf32>
    %101 = arith.addf %97, %100 : vector<16x1xf32>
    %102 = math.rsqrt %101 : vector<16x1xf32>
    %103 = vector.broadcast %102 : vector<16x1xf32> to vector<16x32xf32>
    %104 = arith.mulf %99, %103 : vector<16x32xf32>
    %105 = vector.broadcast %21 : vector<1x32xf32> to vector<16x32xf32>
    %106 = arith.mulf %104, %105 : vector<16x32xf32>
    %107 = vector.broadcast %22 : vector<1x32xf32> to vector<16x32xf32>
    %108 = arith.addf %106, %107 : vector<16x32xf32>
    %109 = arith.truncf %108 : vector<16x32xf32> to vector<16x32xbf16>
    %c0_28 = arith.constant 0 : index
    %c0_29 = arith.constant 0 : index
    %c0_30 = arith.constant 0 : index
    %110 = vector.load %arg4[%c0_28, %c0_29, %c0_30] : memref<2x32x64xbf16, #tpu.memory_space<vmem>>, vector<1x32x64xbf16>
    %111 = vector.shape_cast %110 : vector<1x32x64xbf16> to vector<32x64xbf16>
    %cst_31 = arith.constant dense<0.000000e+00> : vector<16x64xf32>
    %112 = tpu.matmul %109, %111, %cst_31 {dimension_numbers = #tpu.dot_dimension_numbers<[1], [0], [0], [1], [0, 0, 1, 1], [], []>} : vector<16x32xbf16>, vector<32x64xbf16>, vector<16x64xf32> -> vector<16x64xf32>
    %113 = vector.broadcast %23 : vector<1x64xf32> to vector<16x64xf32>
    %114 = arith.addf %112, %113 : vector<16x64xf32>
    %cst_32 = arith.constant 0.000000e+00 : f32
    %115 = vector.broadcast %cst_32 : f32 to vector<16x64xf32>
    %116 = arith.maximumf %114, %115 : vector<16x64xf32>
    %117 = arith.truncf %116 : vector<16x64xf32> to vector<16x64xbf16>
    %c0_33 = arith.constant 0 : index
    %c0_34 = arith.constant 0 : index
    %c0_35 = arith.constant 0 : index
    %118 = vector.load %arg5[%c0_33, %c0_34, %c0_35] : memref<2x64x32xbf16, #tpu.memory_space<vmem>>, vector<1x64x32xbf16>
    %119 = vector.shape_cast %118 : vector<1x64x32xbf16> to vector<64x32xbf16>
    %cst_36 = arith.constant dense<0.000000e+00> : vector<16x32xf32>
    %120 = tpu.matmul %117, %119, %cst_36 {dimension_numbers = #tpu.dot_dimension_numbers<[1], [0], [0], [1], [0, 0, 1, 1], [], []>} : vector<16x64xbf16>, vector<64x32xbf16>, vector<16x32xf32> -> vector<16x32xf32>
    %121 = vector.broadcast %24 : vector<1x32xf32> to vector<16x32xf32>
    %122 = arith.addf %120, %121 : vector<16x32xf32>
    %123 = arith.addf %122, %108 : vector<16x32xf32>
    %cst_37 = arith.constant dense<0.000000e+00> : vector<16xf32>
    %124 = vector.multi_reduction <add>, %123, %cst_37 [1] : vector<16x32xf32> to vector<16xf32>
    %125 = vector.shape_cast %124 : vector<16xf32> to vector<16x1xf32>
    %cst_38 = arith.constant 3.200000e+01 : f32
    %126 = vector.broadcast %cst_38 : f32 to vector<16x1xf32>
    %127 = arith.divf %125, %126 : vector<16x1xf32>
    %128 = vector.broadcast %127 : vector<16x1xf32> to vector<16x32xf32>
    %129 = arith.subf %123, %128 : vector<16x32xf32>
    %130 = arith.mulf %129, %129 : vector<16x32xf32>
    %cst_39 = arith.constant dense<0.000000e+00> : vector<16xf32>
    %131 = vector.multi_reduction <add>, %130, %cst_39 [1] : vector<16x32xf32> to vector<16xf32>
    %132 = vector.shape_cast %131 : vector<16xf32> to vector<16x1xf32>
    %cst_40 = arith.constant 3.200000e+01 : f32
    %133 = vector.broadcast %cst_40 : f32 to vector<16x1xf32>
    %134 = arith.divf %132, %133 : vector<16x1xf32>
    %135 = vector.broadcast %127 : vector<16x1xf32> to vector<16x32xf32>
    %136 = arith.subf %123, %135 : vector<16x32xf32>
    %cst_41 = arith.constant 9.99999974E-6 : f32
    %137 = vector.broadcast %cst_41 : f32 to vector<16x1xf32>
    %138 = arith.addf %134, %137 : vector<16x1xf32>
    %139 = math.rsqrt %138 : vector<16x1xf32>
    %140 = vector.broadcast %139 : vector<16x1xf32> to vector<16x32xf32>
    %141 = arith.mulf %136, %140 : vector<16x32xf32>
    %142 = vector.broadcast %25 : vector<1x32xf32> to vector<16x32xf32>
    %143 = arith.mulf %141, %142 : vector<16x32xf32>
    %144 = vector.broadcast %26 : vector<1x32xf32> to vector<16x32xf32>
    %145 = arith.addf %143, %144 : vector<16x32xf32>
    %c1 = arith.constant 1 : index
    %c0_42 = arith.constant 0 : index
    %c0_43 = arith.constant 0 : index
    %146 = vector.load %arg6[%c1, %c0_42, %c0_43] : memref<2x8x96xf32, #tpu.memory_space<vmem>>, vector<1x8x96xf32>
    %147 = vector.shape_cast %146 : vector<1x8x96xf32> to vector<8x96xf32>
    %148 = vector.extract_strided_slice %147 {offsets = [0, 0], sizes = [1, 96], strides = [1, 1]} : vector<8x96xf32> to vector<1x96xf32>
    %149 = vector.extract_strided_slice %147 {offsets = [1, 0], sizes = [1, 32], strides = [1, 1]} : vector<8x96xf32> to vector<1x32xf32>
    %150 = vector.extract_strided_slice %147 {offsets = [2, 0], sizes = [1, 32], strides = [1, 1]} : vector<8x96xf32> to vector<1x32xf32>
    %151 = vector.extract_strided_slice %147 {offsets = [3, 0], sizes = [1, 64], strides = [1, 1]} : vector<8x96xf32> to vector<1x64xf32>
    %152 = vector.extract_strided_slice %147 {offsets = [4, 0], sizes = [1, 32], strides = [1, 1]} : vector<8x96xf32> to vector<1x32xf32>
    %153 = vector.extract_strided_slice %147 {offsets = [5, 0], sizes = [1, 32], strides = [1, 1]} : vector<8x96xf32> to vector<1x32xf32>
    %154 = vector.extract_strided_slice %147 {offsets = [6, 0], sizes = [1, 32], strides = [1, 1]} : vector<8x96xf32> to vector<1x32xf32>
    %155 = arith.truncf %145 : vector<16x32xf32> to vector<16x32xbf16>
    %c1_44 = arith.constant 1 : index
    %c0_45 = arith.constant 0 : index
    %c0_46 = arith.constant 0 : index
    %156 = vector.load %arg3[%c1_44, %c0_45, %c0_46] : memref<2x32x96xbf16, #tpu.memory_space<vmem>>, vector<1x32x96xbf16>
    %157 = vector.shape_cast %156 : vector<1x32x96xbf16> to vector<32x96xbf16>
    %cst_47 = arith.constant dense<0.000000e+00> : vector<16x96xf32>
    %158 = tpu.matmul %155, %157, %cst_47 {dimension_numbers = #tpu.dot_dimension_numbers<[1], [0], [0], [1], [0, 0, 1, 1], [], []>} : vector<16x32xbf16>, vector<32x96xbf16>, vector<16x96xf32> -> vector<16x96xf32>
    %159 = vector.broadcast %148 : vector<1x96xf32> to vector<16x96xf32>
    %160 = arith.addf %158, %159 : vector<16x96xf32>
    %161 = vector.extract_strided_slice %160 {offsets = [0, 0], sizes = [16, 8], strides = [1, 1]} : vector<16x96xf32> to vector<16x8xf32>
    %162 = vector.shape_cast %161 : vector<16x8xf32> to vector<2x8x8xf32>
    %163 = vector.extract_strided_slice %160 {offsets = [0, 8], sizes = [16, 8], strides = [1, 1]} : vector<16x96xf32> to vector<16x8xf32>
    %164 = vector.shape_cast %163 : vector<16x8xf32> to vector<2x8x8xf32>
    %165 = vector.extract_strided_slice %160 {offsets = [0, 16], sizes = [16, 8], strides = [1, 1]} : vector<16x96xf32> to vector<16x8xf32>
    %166 = vector.shape_cast %165 : vector<16x8xf32> to vector<2x8x8xf32>
    %167 = vector.extract_strided_slice %160 {offsets = [0, 24], sizes = [16, 8], strides = [1, 1]} : vector<16x96xf32> to vector<16x8xf32>
    %168 = vector.shape_cast %167 : vector<16x8xf32> to vector<2x8x8xf32>
    %169 = tpu.concatenate %162, %164, %166, %168 in 0 : vector<2x8x8xf32>, vector<2x8x8xf32>, vector<2x8x8xf32>, vector<2x8x8xf32> -> vector<8x8x8xf32>
    %170 = arith.truncf %169 : vector<8x8x8xf32> to vector<8x8x8xbf16>
    %171 = vector.extract_strided_slice %160 {offsets = [0, 32], sizes = [16, 8], strides = [1, 1]} : vector<16x96xf32> to vector<16x8xf32>
    %172 = vector.shape_cast %171 : vector<16x8xf32> to vector<2x8x8xf32>
    %173 = vector.extract_strided_slice %160 {offsets = [0, 40], sizes = [16, 8], strides = [1, 1]} : vector<16x96xf32> to vector<16x8xf32>
    %174 = vector.shape_cast %173 : vector<16x8xf32> to vector<2x8x8xf32>
    %175 = vector.extract_strided_slice %160 {offsets = [0, 48], sizes = [16, 8], strides = [1, 1]} : vector<16x96xf32> to vector<16x8xf32>
    %176 = vector.shape_cast %175 : vector<16x8xf32> to vector<2x8x8xf32>
    %177 = vector.extract_strided_slice %160 {offsets = [0, 56], sizes = [16, 8], strides = [1, 1]} : vector<16x96xf32> to vector<16x8xf32>
    %178 = vector.shape_cast %177 : vector<16x8xf32> to vector<2x8x8xf32>
    %179 = tpu.concatenate %172, %174, %176, %178 in 0 : vector<2x8x8xf32>, vector<2x8x8xf32>, vector<2x8x8xf32>, vector<2x8x8xf32> -> vector<8x8x8xf32>
    %180 = arith.truncf %179 : vector<8x8x8xf32> to vector<8x8x8xbf16>
    %181 = vector.extract_strided_slice %160 {offsets = [0, 64], sizes = [16, 8], strides = [1, 1]} : vector<16x96xf32> to vector<16x8xf32>
    %182 = vector.shape_cast %181 : vector<16x8xf32> to vector<2x8x8xf32>
    %183 = vector.extract_strided_slice %160 {offsets = [0, 72], sizes = [16, 8], strides = [1, 1]} : vector<16x96xf32> to vector<16x8xf32>
    %184 = vector.shape_cast %183 : vector<16x8xf32> to vector<2x8x8xf32>
    %185 = vector.extract_strided_slice %160 {offsets = [0, 80], sizes = [16, 8], strides = [1, 1]} : vector<16x96xf32> to vector<16x8xf32>
    %186 = vector.shape_cast %185 : vector<16x8xf32> to vector<2x8x8xf32>
    %187 = vector.extract_strided_slice %160 {offsets = [0, 88], sizes = [16, 8], strides = [1, 1]} : vector<16x96xf32> to vector<16x8xf32>
    %188 = vector.shape_cast %187 : vector<16x8xf32> to vector<2x8x8xf32>
    %189 = tpu.concatenate %182, %184, %186, %188 in 0 : vector<2x8x8xf32>, vector<2x8x8xf32>, vector<2x8x8xf32>, vector<2x8x8xf32> -> vector<8x8x8xf32>
    %190 = arith.truncf %189 : vector<8x8x8xf32> to vector<8x8x8xbf16>
    "tpu.trace_start"() <{level = 10 : i32, message = "bqk,bsk->bqs"}> : () -> ()
    %cst_48 = arith.constant dense<0.000000e+00> : vector<8x8x8xf32>
    %191 = tpu.matmul %170, %180, %cst_48 {dimension_numbers = #tpu.dot_dimension_numbers<[2], [2], [1], [1], [0, 0, 0, 1, 1, 1], [0], [0]>} : vector<8x8x8xbf16>, vector<8x8x8xbf16>, vector<8x8x8xf32> -> vector<8x8x8xf32>
    "tpu.trace_stop"() : () -> ()
    %cst_49 = arith.constant 0.353553385 : f32
    %192 = vector.broadcast %cst_49 : f32 to vector<8x8x8xf32>
    %193 = arith.mulf %191, %192 : vector<8x8x8xf32>
    %cst_50 = arith.constant 1.000000e-10 : f32
    %194 = vector.broadcast %cst_50 : f32 to vector<8x8x8xf32>
    %195 = arith.select %17, %194, %193 : vector<8x8x8xi1>, vector<8x8x8xf32>
    %cst_51 = arith.constant dense<0xFF800000> : vector<8x8xf32>
    %196 = vector.multi_reduction <maximumf>, %195, %cst_51 [2] : vector<8x8x8xf32> to vector<8x8xf32>
    %197 = vector.shape_cast %196 : vector<8x8xf32> to vector<8x8x1xf32>
    %198 = vector.broadcast %197 : vector<8x8x1xf32> to vector<8x8x8xf32>
    %199 = arith.subf %195, %198 : vector<8x8x8xf32>
    %200 = math.exp %199 : vector<8x8x8xf32>
    %cst_52 = arith.constant dense<0.000000e+00> : vector<8x8xf32>
    %201 = vector.multi_reduction <add>, %200, %cst_52 [2] : vector<8x8x8xf32> to vector<8x8xf32>
    %202 = vector.shape_cast %201 : vector<8x8xf32> to vector<8x8x1xf32>
    %203 = tpu.reciprocal %202 {approx = true} : vector<8x8x1xf32> -> vector<8x8x1xf32>
    %204 = vector.broadcast %203 : vector<8x8x1xf32> to vector<8x8x8xf32>
    %205 = arith.mulf %200, %204 : vector<8x8x8xf32>
    %206 = arith.truncf %205 : vector<8x8x8xf32> to vector<8x8x8xbf16>
    "tpu.trace_start"() <{level = 10 : i32, message = "bqs,bsd->bqd"}> : () -> ()
    %cst_53 = arith.constant dense<0.000000e+00> : vector<8x8x8xf32>
    %207 = tpu.matmul %206, %190, %cst_53 {dimension_numbers = #tpu.dot_dimension_numbers<[2], [1], [1], [2], [0, 0, 0, 1, 1, 2], [0], [0]>} : vector<8x8x8xbf16>, vector<8x8x8xbf16>, vector<8x8x8xf32> -> vector<8x8x8xf32>
    "tpu.trace_stop"() : () -> ()
    %208 = vector.extract_strided_slice %207 {offsets = [0, 0, 0], sizes = [2, 8, 8], strides = [1, 1, 1]} : vector<8x8x8xf32> to vector<2x8x8xf32>
    %209 = vector.extract_strided_slice %207 {offsets = [2, 0, 0], sizes = [2, 8, 8], strides = [1, 1, 1]} : vector<8x8x8xf32> to vector<2x8x8xf32>
    %210 = vector.extract_strided_slice %207 {offsets = [4, 0, 0], sizes = [2, 8, 8], strides = [1, 1, 1]} : vector<8x8x8xf32> to vector<2x8x8xf32>
    %211 = vector.extract_strided_slice %207 {offsets = [6, 0, 0], sizes = [2, 8, 8], strides = [1, 1, 1]} : vector<8x8x8xf32> to vector<2x8x8xf32>
    %212 = tpu.concatenate %208, %209, %210, %211 in 2 : vector<2x8x8xf32>, vector<2x8x8xf32>, vector<2x8x8xf32>, vector<2x8x8xf32> -> vector<2x8x32xf32>
    %213 = vector.shape_cast %212 : vector<2x8x32xf32> to vector<16x32xf32>
    %214 = arith.addf %213, %145 : vector<16x32xf32>
    %cst_54 = arith.constant dense<0.000000e+00> : vector<16xf32>
    %215 = vector.multi_reduction <add>, %214, %cst_54 [1] : vector<16x32xf32> to vector<16xf32>
    %216 = vector.shape_cast %215 : vector<16xf32> to vector<16x1xf32>
    %cst_55 = arith.constant 3.200000e+01 : f32
    %217 = vector.broadcast %cst_55 : f32 to vector<16x1xf32>
    %218 = arith.divf %216, %217 : vector<16x1xf32>
    %219 = vector.broadcast %218 : vector<16x1xf32> to vector<16x32xf32>
    %220 = arith.subf %214, %219 : vector<16x32xf32>
    %221 = arith.mulf %220, %220 : vector<16x32xf32>
    %cst_56 = arith.constant dense<0.000000e+00> : vector<16xf32>
    %222 = vector.multi_reduction <add>, %221, %cst_56 [1] : vector<16x32xf32> to vector<16xf32>
    %223 = vector.shape_cast %222 : vector<16xf32> to vector<16x1xf32>
    %cst_57 = arith.constant 3.200000e+01 : f32
    %224 = vector.broadcast %cst_57 : f32 to vector<16x1xf32>
    %225 = arith.divf %223, %224 : vector<16x1xf32>
    %226 = vector.broadcast %218 : vector<16x1xf32> to vector<16x32xf32>
    %227 = arith.subf %214, %226 : vector<16x32xf32>
    %cst_58 = arith.constant 9.99999974E-6 : f32
    %228 = vector.broadcast %cst_58 : f32 to vector<16x1xf32>
    %229 = arith.addf %225, %228 : vector<16x1xf32>
    %230 = math.rsqrt %229 : vector<16x1xf32>
    %231 = vector.broadcast %230 : vector<16x1xf32> to vector<16x32xf32>
    %232 = arith.mulf %227, %231 : vector<16x32xf32>
    %233 = vector.broadcast %149 : vector<1x32xf32> to vector<16x32xf32>
    %234 = arith.mulf %232, %233 : vector<16x32xf32>
    %235 = vector.broadcast %150 : vector<1x32xf32> to vector<16x32xf32>
    %236 = arith.addf %234, %235 : vector<16x32xf32>
    %237 = arith.truncf %236 : vector<16x32xf32> to vector<16x32xbf16>
    %c1_59 = arith.constant 1 : index
    %c0_60 = arith.constant 0 : index
    %c0_61 = arith.constant 0 : index
    %238 = vector.load %arg4[%c1_59, %c0_60, %c0_61] : memref<2x32x64xbf16, #tpu.memory_space<vmem>>, vector<1x32x64xbf16>
    %239 = vector.shape_cast %238 : vector<1x32x64xbf16> to vector<32x64xbf16>
    %cst_62 = arith.constant dense<0.000000e+00> : vector<16x64xf32>
    %240 = tpu.matmul %237, %239, %cst_62 {dimension_numbers = #tpu.dot_dimension_numbers<[1], [0], [0], [1], [0, 0, 1, 1], [], []>} : vector<16x32xbf16>, vector<32x64xbf16>, vector<16x64xf32> -> vector<16x64xf32>
    %241 = vector.broadcast %151 : vector<1x64xf32> to vector<16x64xf32>
    %242 = arith.addf %240, %241 : vector<16x64xf32>
    %cst_63 = arith.constant 0.000000e+00 : f32
    %243 = vector.broadcast %cst_63 : f32 to vector<16x64xf32>
    %244 = arith.maximumf %242, %243 : vector<16x64xf32>
    %245 = arith.truncf %244 : vector<16x64xf32> to vector<16x64xbf16>
    %c1_64 = arith.constant 1 : index
    %c0_65 = arith.constant 0 : index
    %c0_66 = arith.constant 0 : index
    %246 = vector.load %arg5[%c1_64, %c0_65, %c0_66] : memref<2x64x32xbf16, #tpu.memory_space<vmem>>, vector<1x64x32xbf16>
    %247 = vector.shape_cast %246 : vector<1x64x32xbf16> to vector<64x32xbf16>
    %cst_67 = arith.constant dense<0.000000e+00> : vector<16x32xf32>
    %248 = tpu.matmul %245, %247, %cst_67 {dimension_numbers = #tpu.dot_dimension_numbers<[1], [0], [0], [1], [0, 0, 1, 1], [], []>} : vector<16x64xbf16>, vector<64x32xbf16>, vector<16x32xf32> -> vector<16x32xf32>
    %249 = vector.broadcast %152 : vector<1x32xf32> to vector<16x32xf32>
    %250 = arith.addf %248, %249 : vector<16x32xf32>
    %251 = arith.addf %250, %236 : vector<16x32xf32>
    %cst_68 = arith.constant dense<0.000000e+00> : vector<16xf32>
    %252 = vector.multi_reduction <add>, %251, %cst_68 [1] : vector<16x32xf32> to vector<16xf32>
    %253 = vector.shape_cast %252 : vector<16xf32> to vector<16x1xf32>
    %cst_69 = arith.constant 3.200000e+01 : f32
    %254 = vector.broadcast %cst_69 : f32 to vector<16x1xf32>
    %255 = arith.divf %253, %254 : vector<16x1xf32>
    %256 = vector.broadcast %255 : vector<16x1xf32> to vector<16x32xf32>
    %257 = arith.subf %251, %256 : vector<16x32xf32>
    %258 = arith.mulf %257, %257 : vector<16x32xf32>
    %cst_70 = arith.constant dense<0.000000e+00> : vector<16xf32>
    %259 = vector.multi_reduction <add>, %258, %cst_70 [1] : vector<16x32xf32> to vector<16xf32>
    %260 = vector.shape_cast %259 : vector<16xf32> to vector<16x1xf32>
    %cst_71 = arith.constant 3.200000e+01 : f32
    %261 = vector.broadcast %cst_71 : f32 to vector<16x1xf32>
    %262 = arith.divf %260, %261 : vector<16x1xf32>
    %263 = vector.broadcast %255 : vector<16x1xf32> to vector<16x32xf32>
    %264 = arith.subf %251, %263 : vector<16x32xf32>
    %cst_72 = arith.constant 9.99999974E-6 : f32
    %265 = vector.broadcast %cst_72 : f32 to vector<16x1xf32>
    %266 = arith.addf %262, %265 : vector<16x1xf32>
    %267 = math.rsqrt %266 : vector<16x1xf32>
    %268 = vector.broadcast %267 : vector<16x1xf32> to vector<16x32xf32>
    %269 = arith.mulf %264, %268 : vector<16x32xf32>
    %270 = vector.broadcast %153 : vector<1x32xf32> to vector<16x32xf32>
    %271 = arith.mulf %269, %270 : vector<16x32xf32>
    %272 = vector.broadcast %154 : vector<1x32xf32> to vector<16x32xf32>
    %273 = arith.addf %271, %272 : vector<16x32xf32>
    %c0_73 = arith.constant 0 : index
    %c0_74 = arith.constant 0 : index
    %274 = vector.load %arg7[%c0_73, %c0_74] : memref<16x32xf32, #tpu.memory_space<vmem>>, vector<16x32xf32>
    tpu.vector_store %arg7[%c0_73, %c0_74], %273 {strides = array<i32>} : memref<16x32xf32, #tpu.memory_space<vmem>>, vector<16x32xf32>,
    return
  }
}

</mosaic_0001>

<llo_original>
// kernel: encoder_forward.1
$region0: #{encoder_forward.1}
  #allocation0 [shape = 'u32[]', space=smem, size = 0x4, offset = 0x4, fixed_abs, tag = 'smem constant byte address 0x4 - core index']
  #allocation1 [shape = 'u32[144,128]{1,0:T(1,128)}', space=vmem, size = 0x12000, scoped, tag = 'internal scratch']
  %s0 = inlined_call_operand.vmem [shape: s32[16,1], index: 0, kind: input, shape index: {}]
  %s1 = inlined_call_operand.vmem [shape: f32[2,1,8], index: 1, kind: input, shape index: {}]
  %s2 = inlined_call_operand.vmem [shape: f32[58,32], index: 2, kind: input, shape index: {}]
  %s3 = inlined_call_operand.vmem [shape: bf16[2,32,96], index: 3, kind: input, shape index: {}]
  %s4 = inlined_call_operand.vmem [shape: bf16[2,32,64], index: 4, kind: input, shape index: {}]
  %s5 = inlined_call_operand.vmem [shape: bf16[2,64,32], index: 5, kind: input, shape index: {}]
  %s6 = inlined_call_operand.vmem [shape: f32[2,8,96], index: 6, kind: input, shape index: {}]
  %s7 = inlined_call_operand.hbm [shape: f32[16,32], index: 7, kind: output, shape index: {}]
  %s8 = sld [smem:[#allocation0]]
  $region38: #{encoder_forward.1} parent=0
    _
  %s10 = ssub.s32 1, %s8
  %s11 = scalar_select 0, %s10, %s8
  $region1: #{encoder_forward.1} parent=0
    #allocation2 [shape = 'u8[8192]{0}', space=vmem, size = 0x2000, scoped, tag = 'output window, operand 0, single buffered']
    #allocation3 [shape = 's32[1]{0}', space=sflag, size = 0x4, scoped, tag = 'scoped memory for encoder_forward.1']
    %12 = vsyncpa [#allocation3], 0
    // Predicated region
    $region2: #{encoder_forward.1} parent=1 // pred_check
      _
    $region3: #{encoder_forward.1} parent=1 // pred_check_branch
      %14 = sbr.rel (0) target = $region5
    $region4: #{encoder_forward.1} parent=1 // pred_region
      _
    $region5: #{encoder_forward.1} parent=1 // pred_fallthru
      _
    // Predicated region
    $region6: #{encoder_forward.1} parent=1 // pred_check
      _
    $region7: #{encoder_forward.1} parent=1 // pred_check_branch
      %16 = sbr.rel (0) target = $region9
    $region8: #{encoder_forward.1} parent=1 // pred_region
      _
    $region9: #{encoder_forward.1} parent=1 // pred_fallthru
      _
    // Predicated region
    $region10: #{encoder_forward.1} parent=1 // pred_check
      _
    $region11: #{encoder_forward.1} parent=1 // pred_check_branch
      %18 = sbr.rel (0) target = $region13
    $region12: #{encoder_forward.1} parent=1 // pred_region
      _
    $region13: #{encoder_forward.1} parent=1 // pred_fallthru
      _
    // Predicated region
    $region14: #{encoder_forward.1} parent=1 // pred_check
      _
    $region15: #{encoder_forward.1} parent=1 // pred_check_branch
      %20 = sbr.rel (0) target = $region17
    $region16: #{encoder_forward.1} parent=1 // pred_region
      _
    $region17: #{encoder_forward.1} parent=1 // pred_fallthru
      _
    // Predicated region
    $region18: #{encoder_forward.1} parent=1 // pred_check
      _
    $region19: #{encoder_forward.1} parent=1 // pred_check_branch
      %22 = sbr.rel (0) target = $region21
    $region20: #{encoder_forward.1} parent=1 // pred_region
      _
    $region21: #{encoder_forward.1} parent=1 // pred_fallthru
      _
    // Predicated region
    $region22: #{encoder_forward.1} parent=1 // pred_check
      _
    $region23: #{encoder_forward.1} parent=1 // pred_check_branch
      %24 = sbr.rel (0) target = $region25
    $region24: #{encoder_forward.1} parent=1 // pred_region
      _
    $region25: #{encoder_forward.1} parent=1 // pred_fallthru
      _
    // Predicated region
    $region26: #{encoder_forward.1} parent=1 // pred_check
      _
    $region27: #{encoder_forward.1} parent=1 // pred_check_branch
      %26 = sbr.rel (0) target = $region29
    $region28: #{encoder_forward.1} parent=1 // pred_region
      _
    $region29: #{encoder_forward.1} parent=1 // pred_fallthru
      _
    %v28 = vld [vmem:[%s0] sm:$0xff]
    %v29 = vld [vmem:[%s0 + $0x8] sm:$0xff]
    %v30 = vlaneseq
    %v31 = vand.u32 %v30, 127
    %32 = vset.pattern.permute.xlu0 0
    %33 = vperm.xlu0 %32, %v28
    %v34 = vpop.permute.xlu0 %33
    %35 = vset.pattern.permute.xlu0 0
    %36 = vperm.xlu0 %35, %v29
    %v37 = vpop.permute.xlu0 %36
    %vm38 = vcmp.eq.s32.totalorder %v31, %v34
    %vm39 = vcmp.eq.s32.totalorder %v31, %v37
    %v40 = vsel %vm38, 1.0, 0.0
    %v41 = vsel %vm39, 1.0, 0.0
    %v42 = vld [vmem:[%s2] sm:$0xff]
    %v43 = vld [vmem:[%s2 + $0x8] sm:$0xff]
    %v44 = vld [vmem:[%s2 + $0x10] sm:$0xff]
    %v45 = vld [vmem:[%s2 + $0x18] sm:$0xff]
    %v46 = vld [vmem:[%s2 + $0x20] sm:$0xff]
    %v47 = vld [vmem:[%s2 + $0x28] sm:$0xff]
    %v48 = vld [vmem:[%s2 + $0x30] sm:$0x3]
    %v49 = vld [vmem:[%s2 + $0x32] sm:$0xff]
    %vm50 = vcmask 408576
    %v52 = vsel %vm50, %v40, 0
    %v55 = vsel %vm50, %v41, 0
    %vm57 = vcmask 1041408
    %v59 = vsel %vm57, %v48, 0
    %61 = vmatprep.subr.mxu0 0.0
    %v62 = vand.u32 %v42, 4294901760
    %63 = vmatpush1.msra.mxu0 %v62
    %64 = vmatprep.subr.mxu0 0.0
    %v65 = vand.u32 %v43, 4294901760
    %66 = vmatpush1.msra.mxu0 %v65
    %67 = vmatprep.subr.mxu0 0.0
    %v68 = vand.u32 %v44, 4294901760
    %69 = vmatpush1.msra.mxu0 %v68
    %70 = vmatprep.subr.mxu0 0.0
    %v71 = vand.u32 %v45, 4294901760
    %72 = vmatpush1.msra.mxu0 %v71
    %73 = vmatprep.subr.mxu0 0.0
    %v74 = vand.u32 %v46, 4294901760
    %75 = vmatpush1.msra.mxu0 %v74
    %76 = vmatprep.subr.mxu0 0.0
    %v77 = vand.u32 %v47, 4294901760
    %78 = vmatpush1.msra.mxu0 %v77
    %79 = vmatprep.subr.mxu0 0.0
    %v80 = vand.u32 %v59, 4294901760
    %81 = vmatpush1.msra.mxu0 %v80
    %82 = vmatprep.subr.mxu0 0.0
    %83 = vmatpush1.msra.mxu0 0.0
    %84 = vmatprep.subr.mxu0 0.0
    %85 = vmatpush1.msra.mxu0 0.0
    %86 = vmatprep.subr.mxu0 0.0
    %87 = vmatpush1.msra.mxu0 0.0
    %88 = vmatprep.subr.mxu0 0.0
    %89 = vmatpush1.msra.mxu0 0.0
    %90 = vmatprep.subr.mxu0 0.0
    %91 = vmatpush1.msra.mxu0 0.0
    %92 = vmatprep.subr.mxu0 0.0
    %93 = vmatpush1.msra.mxu0 0.0
    %94 = vmatprep.subr.mxu0 0.0
    %95 = vmatpush1.msra.mxu0 0.0
    %96 = vmatprep.subr.mxu0 0.0
    %97 = vmatpush1.msra.mxu0 0.0
    %98 = vmatprep.subr.mxu0 0.0
    %99 = vmatpush1.msra.mxu0 0.0
    %100 = vmatprep.subr.mxu0 0.0
    %101 = vmatpush1.msra.mxu0 0.0
    %102 = vmatprep.subr.mxu0 0.0
    %103 = vmatpush1.msra.mxu0 0.0
    %104 = vmatprep.subr.mxu0 0.0
    %105 = vmatpush1.msra.mxu0 0.0
    %106 = vmatprep.subr.mxu0 0.0
    %107 = vmatpush1.msra.mxu0 0.0
    %108 = vmatprep.subr.mxu0 0.0
    %109 = vmatpush1.msra.mxu0 0.0
    %110 = vmatprep.subr.mxu0 0.0
    %111 = vmatpush1.msra.mxu0 0.0
    %112 = vmatprep.subr.mxu0 0.0
    %113 = vmatpush1.msra.mxu0 0.0
    %114 = vmatprep.subr.mxu0 0.0
    %115 = vmatpush1.msra.mxu0 0.0
    %116 = vmatprep.subr.mxu0 0.0
    %117 = vmatpush1.msra.mxu0 0.0
    %118 = vmatprep.subr.mxu0 0.0
    %119 = vmatpush1.msra.mxu0 0.0
    %120 = vmatprep.subr.mxu0 0.0
    %121 = vmatpush1.msra.mxu0 0.0
    %122 = vmatprep.subr.mxu0 0.0
    %123 = vmatpush1.msra.mxu0 0.0
    %124 = vmatprep.subr.mxu0 0.0
    %125 = vmatpush1.msra.mxu0 0.0
    %126 = vmatprep.subr.mxu0 0.0
    %127 = vmatpush1.msra.mxu0 0.0
    %128 = vmatprep.subr.mxu0 0.0
    %129 = vmatpush1.msra.mxu0 0.0
    %130 = vmatprep.subr.mxu0 0.0
    %131 = vmatpush1.msra.mxu0 0.0
    %132 = vmatprep.mubr.f32.mxu0 0.0
    %v133 = vand.u32 %v52, 4294901760
    %v134 = vsub.f32 %v52, %v133
    %v135 = vand.u32 %v134, 4294901760
    %v136 = vsub.f32 %v134, %v135
    %v137 = vand.u32 %v136, 4294901760
    %138 = vmatmul.mubr.f32.gmra.mrb[0].mxu0 %v137
    %v139 = vpop.f32.mrb[0].mxu0
    %v140 = vadd.f32 %v49, %v139
    %v141 = vpop.f32.mrb[0].mxu0
    %142 = vmatprep.mubr.f32.mxu0 0.0
    %v143 = vand.u32 %v55, 4294901760
    %v144 = vsub.f32 %v55, %v143
    %v145 = vand.u32 %v144, 4294901760
    %v146 = vsub.f32 %v144, %v145
    %v147 = vand.u32 %v146, 4294901760
    %148 = vmatmul.mubr.f32.gmra.mrb[0].mxu0 %v147
    %v149 = vpop.f32.mrb[0].mxu0
    %v150 = vadd.f32 %v49, %v149
    %v151 = vpop.f32.mrb[0].mxu0
    %152 = vdwg.mxu0
    %153 = vmatprep.subr.mxu0 0.0
    %v154 = vand.u32 %v42, 4294901760
    %v155 = vsub.f32 %v42, %v154
    %v156 = vand.u32 %v155, 4294901760
    %v157 = vsub.f32 %v155, %v156
    %v158 = vand.u32 %v157, 4294901760
    %159 = vmatpush1.msra.mxu0 %v158
    %160 = vmatprep.subr.mxu0 0.0
    %v161 = vand.u32 %v43, 4294901760
    %v162 = vsub.f32 %v43, %v161
    %v163 = vand.u32 %v162, 4294901760
    %v164 = vsub.f32 %v162, %v163
    %v165 = vand.u32 %v164, 4294901760
    %166 = vmatpush1.msra.mxu0 %v165
    %167 = vmatprep.subr.mxu0 0.0
    %v168 = vand.u32 %v44, 4294901760
    %v169 = vsub.f32 %v44, %v168
    %v170 = vand.u32 %v169, 4294901760
    %v171 = vsub.f32 %v169, %v170
    %v172 = vand.u32 %v171, 4294901760
    %173 = vmatpush1.msra.mxu0 %v172
    %174 = vmatprep.subr.mxu0 0.0
    %v175 = vand.u32 %v45, 4294901760
    %v176 = vsub.f32 %v45, %v175
    %v177 = vand.u32 %v176, 4294901760
    %v178 = vsub.f32 %v176, %v177
    %v179 = vand.u32 %v178, 4294901760
    %180 = vmatpush1.msra.mxu0 %v179
    %181 = vmatprep.subr.mxu0 0.0
    %v182 = vand.u32 %v46, 4294901760
    %v183 = vsub.f32 %v46, %v182
    %v184 = vand.u32 %v183, 4294901760
    %v185 = vsub.f32 %v183, %v184
    %v186 = vand.u32 %v185, 4294901760
    %187 = vmatpush1.msra.mxu0 %v186
    %188 = vmatprep.subr.mxu0 0.0
    %v189 = vand.u32 %v47, 4294901760
    %v190 = vsub.f32 %v47, %v189
    %v191 = vand.u32 %v190, 4294901760
    %v192 = vsub.f32 %v190, %v191
    %v193 = vand.u32 %v192, 4294901760
    %194 = vmatpush1.msra.mxu0 %v193
    %195 = vmatprep.subr.mxu0 0.0
    %v196 = vand.u32 %v59, 4294901760
    %v197 = vsub.f32 %v59, %v196
    %v198 = vand.u32 %v197, 4294901760
    %v199 = vsub.f32 %v197, %v198
    %v200 = vand.u32 %v199, 4294901760
    %201 = vmatpush1.msra.mxu0 %v200
    %202 = vmatprep.subr.mxu0 0.0
    %203 = vmatpush1.msra.mxu0 0.0
    %204 = vmatprep.subr.mxu0 0.0
    %205 = vmatpush1.msra.mxu0 0.0
    %206 = vmatprep.subr.mxu0 0.0
    %207 = vmatpush1.msra.mxu0 0.0
    %208 = vmatprep.subr.mxu0 0.0
    %209 = vmatpush1.msra.mxu0 0.0
    %210 = vmatprep.subr.mxu0 0.0
    %211 = vmatpush1.msra.mxu0 0.0
    %212 = vmatprep.subr.mxu0 0.0
    %213 = vmatpush1.msra.mxu0 0.0
    %214 = vmatprep.subr.mxu0 0.0
    %215 = vmatpush1.msra.mxu0 0.0
    %216 = vmatprep.subr.mxu0 0.0
    %217 = vmatpush1.msra.mxu0 0.0
    %218 = vmatprep.subr.mxu0 0.0
    %219 = vmatpush1.msra.mxu0 0.0
    %220 = vmatprep.subr.mxu0 0.0
    %221 = vmatpush1.msra.mxu0 0.0
    %222 = vmatprep.subr.mxu0 0.0
    %223 = vmatpush1.msra.mxu0 0.0
    %224 = vmatprep.subr.mxu0 0.0
    %225 = vmatpush1.msra.mxu0 0.0
    %226 = vmatprep.subr.mxu0 0.0
    %227 = vmatpush1.msra.mxu0 0.0
    %228 = vmatprep.subr.mxu0 0.0
    %229 = vmatpush1.msra.mxu0 0.0
    %230 = vmatprep.subr.mxu0 0.0
    %231 = vmatpush1.msra.mxu0 0.0
    %232 = vmatprep.subr.mxu0 0.0
    %233 = vmatpush1.msra.mxu0 0.0
    %234 = vmatprep.subr.mxu0 0.0
    %235 = vmatpush1.msra.mxu0 0.0
    %236 = vmatprep.subr.mxu0 0.0
    %237 = vmatpush1.msra.mxu0 0.0
    %238 = vmatprep.subr.mxu0 0.0
    %239 = vmatpush1.msra.mxu0 0.0
    %240 = vmatprep.subr.mxu0 0.0
    %241 = vmatpush1.msra.mxu0 0.0
    %242 = vmatprep.subr.mxu0 0.0
    %243 = vmatpush1.msra.mxu0 0.0
    %244 = vmatprep.subr.mxu0 0.0
    %245 = vmatpush1.msra.mxu0 0.0
    %246 = vmatprep.subr.mxu0 0.0
    %247 = vmatpush1.msra.mxu0 0.0
    %248 = vmatprep.subr.mxu0 0.0
    %249 = vmatpush1.msra.mxu0 0.0
    %250 = vmatprep.subr.mxu0 0.0
    %251 = vmatpush1.msra.mxu0 0.0
    %252 = vmatprep.mubr.f32.mxu0 0.0
    %v253 = vand.u32 %v52, 4294901760
    %254 = vmatmul.mubr.f32.gmra.mrb[0].mxu0 %v253
    %v255 = vpop.f32.mrb[0].mxu0
    %v256 = vadd.f32 %v140, %v255
    %v257 = vpop.f32.mrb[0].mxu0
    %258 = vmatprep.mubr.f32.mxu0 0.0
    %v259 = vand.u32 %v55, 4294901760
    %260 = vmatmul.mubr.f32.gmra.mrb[0].mxu0 %v259
    %v261 = vpop.f32.mrb[0].mxu0
    %v262 = vadd.f32 %v150, %v261
    %v263 = vpop.f32.mrb[0].mxu0
    %264 = vdwg.mxu0
    %265 = vmatprep.subr.mxu0 0.0
    %v266 = vand.u32 %v42, 4294901760
    %v267 = vsub.f32 %v42, %v266
    %268 = vmatpush1.msra.mxu0 %v267
    %269 = vmatprep.subr.mxu0 0.0
    %v270 = vand.u32 %v43, 4294901760
    %v271 = vsub.f32 %v43, %v270
    %272 = vmatpush1.msra.mxu0 %v271
    %273 = vmatprep.subr.mxu0 0.0
    %v274 = vand.u32 %v44, 4294901760
    %v275 = vsub.f32 %v44, %v274
    %276 = vmatpush1.msra.mxu0 %v275
    %277 = vmatprep.subr.mxu0 0.0
    %v278 = vand.u32 %v45, 4294901760
    %v279 = vsub.f32 %v45, %v278
    %280 = vmatpush1.msra.mxu0 %v279
    %281 = vmatprep.subr.mxu0 0.0
    %v282 = vand.u32 %v46, 4294901760
    %v283 = vsub.f32 %v46, %v282
    %284 = vmatpush1.msra.mxu0 %v283
    %285 = vmatprep.subr.mxu0 0.0
    %v286 = vand.u32 %v47, 4294901760
    %v287 = vsub.f32 %v47, %v286
    %288 = vmatpush1.msra.mxu0 %v287
    %289 = vmatprep.subr.mxu0 0.0
    %v290 = vand.u32 %v59, 4294901760
    %v291 = vsub.f32 %v59, %v290
    %292 = vmatpush1.msra.mxu0 %v291
    %293 = vmatprep.subr.mxu0 0.0
    %294 = vmatpush1.msra.mxu0 0.0
    %295 = vmatprep.subr.mxu0 0.0
    %296 = vmatpush1.msra.mxu0 0.0
    %297 = vmatprep.subr.mxu0 0.0
    %298 = vmatpush1.msra.mxu0 0.0
    %299 = vmatprep.subr.mxu0 0.0
    %300 = vmatpush1.msra.mxu0 0.0
    %301 = vmatprep.subr.mxu0 0.0
    %302 = vmatpush1.msra.mxu0 0.0
    %303 = vmatprep.subr.mxu0 0.0
    %304 = vmatpush1.msra.mxu0 0.0
    %305 = vmatprep.subr.mxu0 0.0
    %306 = vmatpush1.msra.mxu0 0.0
    %307 = vmatprep.subr.mxu0 0.0
    %308 = vmatpush1.msra.mxu0 0.0
    %309 = vmatprep.subr.mxu0 0.0
    %310 = vmatpush1.msra.mxu0 0.0
    %311 = vmatprep.subr.mxu0 0.0
    %312 = vmatpush1.msra.mxu0 0.0
    %313 = vmatprep.subr.mxu0 0.0
    %314 = vmatpush1.msra.mxu0 0.0
    %315 = vmatprep.subr.mxu0 0.0
    %316 = vmatpush1.msra.mxu0 0.0
    %317 = vmatprep.subr.mxu0 0.0
    %318 = vmatpush1.msra.mxu0 0.0
    %319 = vmatprep.subr.mxu0 0.0
    %320 = vmatpush1.msra.mxu0 0.0
    %321 = vmatprep.subr.mxu0 0.0
    %322 = vmatpush1.msra.mxu0 0.0
    %323 = vmatprep.subr.mxu0 0.0
    %324 = vmatpush1.msra.mxu0 0.0
    %325 = vmatprep.subr.mxu0 0.0
    %326 = vmatpush1.msra.mxu0 0.0
    %327 = vmatprep.subr.mxu0 0.0
    %328 = vmatpush1.msra.mxu0 0.0
    %329 = vmatprep.subr.mxu0 0.0
    %330 = vmatpush1.msra.mxu0 0.0
    %331 = vmatprep.subr.mxu0 0.0
    %332 = vmatpush1.msra.mxu0 0.0
    %333 = vmatprep.subr.mxu0 0.0
    %334 = vmatpush1.msra.mxu0 0.0
    %335 = vmatprep.subr.mxu0 0.0
    %336 = vmatpush1.msra.mxu0 0.0
    %337 = vmatprep.subr.mxu0 0.0
    %338 = vmatpush1.msra.mxu0 0.0
    %339 = vmatprep.subr.mxu0 0.0
    %340 = vmatpush1.msra.mxu0 0.0
    %341 = vmatprep.subr.mxu0 0.0
    %342 = vmatpush1.msra.mxu0 0.0
    %343 = vmatprep.mubr.f32.mxu0 0.0
    %v344 = vand.u32 %v52, 4294901760
    %v345 = vsub.f32 %v52, %v344
    %346 = vmatmul.mubr.f32.gmra.mrb[0].mxu0 %v345
    %v347 = vpop.f32.mrb[0].mxu0
    %v348 = vadd.f32 %v256, %v347
    %v349 = vpop.f32.mrb[0].mxu0
    %350 = vmatprep.mubr.f32.mxu0 0.0
    %v351 = vand.u32 %v55, 4294901760
    %v352 = vsub.f32 %v55, %v351
    %353 = vmatmul.mubr.f32.gmra.mrb[0].mxu0 %v352
    %v354 = vpop.f32.mrb[0].mxu0
    %v355 = vadd.f32 %v262, %v354
    %v356 = vpop.f32.mrb[0].mxu0
    %357 = vdwg.mxu0
    %358 = vmatprep.subr.mxu0 0.0
    %v359 = vand.u32 %v42, 4294901760
    %360 = vmatpush1.msra.mxu0 %v359
    %361 = vmatprep.subr.mxu0 0.0
    %v362 = vand.u32 %v43, 4294901760
    %363 = vmatpush1.msra.mxu0 %v362
    %364 = vmatprep.subr.mxu0 0.0
    %v365 = vand.u32 %v44, 4294901760
    %366 = vmatpush1.msra.mxu0 %v365
    %367 = vmatprep.subr.mxu0 0.0
    %v368 = vand.u32 %v45, 4294901760
    %369 = vmatpush1.msra.mxu0 %v368
    %370 = vmatprep.subr.mxu0 0.0
    %v371 = vand.u32 %v46, 4294901760
    %372 = vmatpush1.msra.mxu0 %v371
    %373 = vmatprep.subr.mxu0 0.0
    %v374 = vand.u32 %v47, 4294901760
    %375 = vmatpush1.msra.mxu0 %v374
    %376 = vmatprep.subr.mxu0 0.0
    %v377 = vand.u32 %v59, 4294901760
    %378 = vmatpush1.msra.mxu0 %v377
    %379 = vmatprep.subr.mxu0 0.0
    %380 = vmatpush1.msra.mxu0 0.0
    %381 = vmatprep.subr.mxu0 0.0
    %382 = vmatpush1.msra.mxu0 0.0
    %383 = vmatprep.subr.mxu0 0.0
    %384 = vmatpush1.msra.mxu0 0.0
    %385 = vmatprep.subr.mxu0 0.0
    %386 = vmatpush1.msra.mxu0 0.0
    %387 = vmatprep.subr.mxu0 0.0
    %388 = vmatpush1.msra.mxu0 0.0
    %389 = vmatprep.subr.mxu0 0.0
    %390 = vmatpush1.msra.mxu0 0.0
    %391 = vmatprep.subr.mxu0 0.0
    %392 = vmatpush1.msra.mxu0 0.0
    %393 = vmatprep.subr.mxu0 0.0
    %394 = vmatpush1.msra.mxu0 0.0
    %395 = vmatprep.subr.mxu0 0.0
    %396 = vmatpush1.msra.mxu0 0.0
    %397 = vmatprep.subr.mxu0 0.0
    %398 = vmatpush1.msra.mxu0 0.0
    %399 = vmatprep.subr.mxu0 0.0
    %400 = vmatpush1.msra.mxu0 0.0
    %401 = vmatprep.subr.mxu0 0.0
    %402 = vmatpush1.msra.mxu0 0.0
    %403 = vmatprep.subr.mxu0 0.0
    %404 = vmatpush1.msra.mxu0 0.0
    %405 = vmatprep.subr.mxu0 0.0
    %406 = vmatpush1.msra.mxu0 0.0
    %407 = vmatprep.subr.mxu0 0.0
    %408 = vmatpush1.msra.mxu0 0.0
    %409 = vmatprep.subr.mxu0 0.0
    %410 = vmatpush1.msra.mxu0 0.0
    %411 = vmatprep.subr.mxu0 0.0
    %412 = vmatpush1.msra.mxu0 0.0
    %413 = vmatprep.subr.mxu0 0.0
    %414 = vmatpush1.msra.mxu0 0.0
    %415 = vmatprep.subr.mxu0 0.0
    %416 = vmatpush1.msra.mxu0 0.0
    %417 = vmatprep.subr.mxu0 0.0
    %418 = vmatpush1.msra.mxu0 0.0
    %419 = vmatprep.subr.mxu0 0.0
    %420 = vmatpush1.msra.mxu0 0.0
    %421 = vmatprep.subr.mxu0 0.0
    %422 = vmatpush1.msra.mxu0 0.0
    %423 = vmatprep.subr.mxu0 0.0
    %424 = vmatpush1.msra.mxu0 0.0
    %425 = vmatprep.subr.mxu0 0.0
    %426 = vmatpush1.msra.mxu0 0.0
    %427 = vmatprep.subr.mxu0 0.0
    %428 = vmatpush1.msra.mxu0 0.0
    %429 = vmatprep.mubr.f32.mxu0 0.0
    %v430 = vand.u32 %v52, 4294901760
    %v431 = vsub.f32 %v52, %v430
    %v432 = vand.u32 %v431, 4294901760
    %433 = vmatmul.mubr.f32.gmra.mrb[0].mxu0 %v432
    %v434 = vpop.f32.mrb[0].mxu0
    %v435 = vadd.f32 %v348, %v434
    %v436 = vpop.f32.mrb[0].mxu0
    %437 = vmatprep.mubr.f32.mxu0 0.0
    %v438 = vand.u32 %v55, 4294901760
    %v439 = vsub.f32 %v55, %v438
    %v440 = vand.u32 %v439, 4294901760
    %441 = vmatmul.mubr.f32.gmra.mrb[0].mxu0 %v440
    %v442 = vpop.f32.mrb[0].mxu0
    %v443 = vadd.f32 %v355, %v442
    %v444 = vpop.f32.mrb[0].mxu0
    %445 = vdwg.mxu0
    %446 = vmatprep.subr.mxu0 0.0
    %v447 = vand.u32 %v42, 4294901760
    %v448 = vsub.f32 %v42, %v447
    %v449 = vand.u32 %v448, 4294901760
    %450 = vmatpush1.msra.mxu0 %v449
    %451 = vmatprep.subr.mxu0 0.0
    %v452 = vand.u32 %v43, 4294901760
    %v453 = vsub.f32 %v43, %v452
    %v454 = vand.u32 %v453, 4294901760
    %455 = vmatpush1.msra.mxu0 %v454
    %456 = vmatprep.subr.mxu0 0.0
    %v457 = vand.u32 %v44, 4294901760
    %v458 = vsub.f32 %v44, %v457
    %v459 = vand.u32 %v458, 4294901760
    %460 = vmatpush1.msra.mxu0 %v459
    %461 = vmatprep.subr.mxu0 0.0
    %v462 = vand.u32 %v45, 4294901760
    %v463 = vsub.f32 %v45, %v462
    %v464 = vand.u32 %v463, 4294901760
    %465 = vmatpush1.msra.mxu0 %v464
    %466 = vmatprep.subr.mxu0 0.0
    %v467 = vand.u32 %v46, 4294901760
    %v468 = vsub.f32 %v46, %v467
    %v469 = vand.u32 %v468, 4294901760
    %470 = vmatpush1.msra.mxu0 %v469
    %471 = vmatprep.subr.mxu0 0.0
    %v472 = vand.u32 %v47, 4294901760
    %v473 = vsub.f32 %v47, %v472
    %v474 = vand.u32 %v473, 4294901760
    %475 = vmatpush1.msra.mxu0 %v474
    %476 = vmatprep.subr.mxu0 0.0
    %v477 = vand.u32 %v59, 4294901760
    %v478 = vsub.f32 %v59, %v477
    %v479 = vand.u32 %v478, 4294901760
    %480 = vmatpush1.msra.mxu0 %v479
    %481 = vmatprep.subr.mxu0 0.0
    %482 = vmatpush1.msra.mxu0 0.0
    %483 = vmatprep.subr.mxu0 0.0
    %484 = vmatpush1.msra.mxu0 0.0
    %485 = vmatprep.subr.mxu0 0.0
    %486 = vmatpush1.msra.mxu0 0.0
    %487 = vmatprep.subr.mxu0 0.0
    %488 = vmatpush1.msra.mxu0 0.0
    %489 = vmatprep.subr.mxu0 0.0
    %490 = vmatpush1.msra.mxu0 0.0
    %491 = vmatprep.subr.mxu0 0.0
    %492 = vmatpush1.msra.mxu0 0.0
    %493 = vmatprep.subr.mxu0 0.0
    %494 = vmatpush1.msra.mxu0 0.0
    %495 = vmatprep.subr.mxu0 0.0
    %496 = vmatpush1.msra.mxu0 0.0
    %497 = vmatprep.subr.mxu0 0.0
    %498 = vmatpush1.msra.mxu0 0.0
    %499 = vmatprep.subr.mxu0 0.0
    %500 = vmatpush1.msra.mxu0 0.0
    %501 = vmatprep.subr.mxu0 0.0
    %502 = vmatpush1.msra.mxu0 0.0
    %503 = vmatprep.subr.mxu0 0.0
    %504 = vmatpush1.msra.mxu0 0.0
    %505 = vmatprep.subr.mxu0 0.0
    %506 = vmatpush1.msra.mxu0 0.0
    %507 = vmatprep.subr.mxu0 0.0
    %508 = vmatpush1.msra.mxu0 0.0
    %509 = vmatprep.subr.mxu0 0.0
    %510 = vmatpush1.msra.mxu0 0.0
    %511 = vmatprep.subr.mxu0 0.0
    %512 = vmatpush1.msra.mxu0 0.0
    %513 = vmatprep.subr.mxu0 0.0
    %514 = vmatpush1.msra.mxu0 0.0
    %515 = vmatprep.subr.mxu0 0.0
    %516 = vmatpush1.msra.mxu0 0.0
    %517 = vmatprep.subr.mxu0 0.0
    %518 = vmatpush1.msra.mxu0 0.0
    %519 = vmatprep.subr.mxu0 0.0
    %520 = vmatpush1.msra.mxu0 0.0
    %521 = vmatprep.subr.mxu0 0.0
    %522 = vmatpush1.msra.mxu0 0.0
    %523 = vmatprep.subr.mxu0 0.0
    %524 = vmatpush1.msra.mxu0 0.0
    %525 = vmatprep.subr.mxu0 0.0
    %526 = vmatpush1.msra.mxu0 0.0
    %527 = vmatprep.subr.mxu0 0.0
    %528 = vmatpush1.msra.mxu0 0.0
    %529 = vmatprep.subr.mxu0 0.0
    %530 = vmatpush1.msra.mxu0 0.0
    %531 = vmatprep.mubr.f32.mxu0 0.0
    %v532 = vand.u32 %v52, 4294901760
    %533 = vmatmul.mubr.f32.gmra.mrb[0].mxu0 %v532
    %v534 = vpop.f32.mrb[0].mxu0
    %v535 = vadd.f32 %v435, %v534
    %v536 = vpop.f32.mrb[0].mxu0
    %537 = vmatprep.mubr.f32.mxu0 0.0
    %v538 = vand.u32 %v55, 4294901760
    %539 = vmatmul.mubr.f32.gmra.mrb[0].mxu0 %v538
    %v540 = vpop.f32.mrb[0].mxu0
    %v541 = vadd.f32 %v443, %v540
    %v542 = vpop.f32.mrb[0].mxu0
    %543 = vdwg.mxu0
    %544 = vmatprep.subr.mxu0 0.0
    %v545 = vand.u32 %v42, 4294901760
    %546 = vmatpush1.msra.mxu0 %v545
    %547 = vmatprep.subr.mxu0 0.0
    %v548 = vand.u32 %v43, 4294901760
    %549 = vmatpush1.msra.mxu0 %v548
    %550 = vmatprep.subr.mxu0 0.0
    %v551 = vand.u32 %v44, 4294901760
    %552 = vmatpush1.msra.mxu0 %v551
    %553 = vmatprep.subr.mxu0 0.0
    %v554 = vand.u32 %v45, 4294901760
    %555 = vmatpush1.msra.mxu0 %v554
    %556 = vmatprep.subr.mxu0 0.0
    %v557 = vand.u32 %v46, 4294901760
    %558 = vmatpush1.msra.mxu0 %v557
    %559 = vmatprep.subr.mxu0 0.0
    %v560 = vand.u32 %v47, 4294901760
    %561 = vmatpush1.msra.mxu0 %v560
    %562 = vmatprep.subr.mxu0 0.0
    %v563 = vand.u32 %v59, 4294901760
    %564 = vmatpush1.msra.mxu0 %v563
    %565 = vmatprep.subr.mxu0 0.0
    %566 = vmatpush1.msra.mxu0 0.0
    %567 = vmatprep.subr.mxu0 0.0
    %568 = vmatpush1.msra.mxu0 0.0
    %569 = vmatprep.subr.mxu0 0.0
    %570 = vmatpush1.msra.mxu0 0.0
    %571 = vmatprep.subr.mxu0 0.0
    %572 = vmatpush1.msra.mxu0 0.0
    %573 = vmatprep.subr.mxu0 0.0
    %574 = vmatpush1.msra.mxu0 0.0
    %575 = vmatprep.subr.mxu0 0.0
    %576 = vmatpush1.msra.mxu0 0.0
    %577 = vmatprep.subr.mxu0 0.0
    %578 = vmatpush1.msra.mxu0 0.0
    %579 = vmatprep.subr.mxu0 0.0
    %580 = vmatpush1.msra.mxu0 0.0
    %581 = vmatprep.subr.mxu0 0.0
    %582 = vmatpush1.msra.mxu0 0.0
    %583 = vmatprep.subr.mxu0 0.0
    %584 = vmatpush1.msra.mxu0 0.0
    %585 = vmatprep.subr.mxu0 0.0
    %586 = vmatpush1.msra.mxu0 0.0
    %587 = vmatprep.subr.mxu0 0.0
    %588 = vmatpush1.msra.mxu0 0.0
    %589 = vmatprep.subr.mxu0 0.0
    %590 = vmatpush1.msra.mxu0 0.0
    %591 = vmatprep.subr.mxu0 0.0
    %592 = vmatpush1.msra.mxu0 0.0
    %593 = vmatprep.subr.mxu0 0.0
    %594 = vmatpush1.msra.mxu0 0.0
    %595 = vmatprep.subr.mxu0 0.0
    %596 = vmatpush1.msra.mxu0 0.0
    %597 = vmatprep.subr.mxu0 0.0
    %598 = vmatpush1.msra.mxu0 0.0
    %599 = vmatprep.subr.mxu0 0.0
    %600 = vmatpush1.msra.mxu0 0.0
    %601 = vmatprep.subr.mxu0 0.0
    %602 = vmatpush1.msra.mxu0 0.0
    %603 = vmatprep.subr.mxu0 0.0
    %604 = vmatpush1.msra.mxu0 0.0
    %605 = vmatprep.subr.mxu0 0.0
    %606 = vmatpush1.msra.mxu0 0.0
    %607 = vmatprep.subr.mxu0 0.0
    %608 = vmatpush1.msra.mxu0 0.0
    %609 = vmatprep.subr.mxu0 0.0
    %610 = vmatpush1.msra.mxu0 0.0
    %611 = vmatprep.subr.mxu0 0.0
    %612 = vmatpush1.msra.mxu0 0.0
    %613 = vmatprep.subr.mxu0 0.0
    %614 = vmatpush1.msra.mxu0 0.0
    %615 = vmatprep.mubr.f32.mxu0 0.0
    %v616 = vand.u32 %v52, 4294901760
    %617 = vmatmul.mubr.f32.gmra.mrb[0].mxu0 %v616
    %v618 = vpop.f32.mrb[0].mxu0
    %v619 = vadd.f32 %v535, %v618
    %v620 = vpop.f32.mrb[0].mxu0
    %621 = vmatprep.mubr.f32.mxu0 0.0
    %v622 = vand.u32 %v55, 4294901760
    %623 = vmatmul.mubr.f32.gmra.mrb[0].mxu0 %v622
    %v624 = vpop.f32.mrb[0].mxu0
    %v625 = vadd.f32 %v541, %v624
    %v626 = vpop.f32.mrb[0].mxu0
    %627 = vdwg.mxu0
    %v628 = vld [vmem:[%s1] sm:$0x1]
    %v629 = vld [vmem:[%s1 + $0x1] sm:$0x1]
    %v632 = vlaneseq
    %v633 = vshrl.u32 %v632, 7
    %v634 = vsub.s32 0, %v633
    %v635 = vrot.slane %v628, %v634
    %v636 = vlaneseq
    %v637 = vshrl.u32 %v636, 7
    %v638 = vsub.s32 0, %v637
    %v639 = vrot.slane %v629, %v638
    %vm642 = vcmp.gt.f32.partialorder %v635, 0.0
    %vm643 = vcmp.gt.f32.partialorder %v639, 0.0
    %v644 = vld [vmem:[%s6] sm:$0xff]
    %v645 = vpack.c.bf16 %v625, %v619
    %v646 = vld [vmem:[%s3] sm:$0xf]
    %v647 = vld [vmem:[%s3 + $0x4] sm:$0xf]
    %v648 = vld [vmem:[%s3 + $0x8] sm:$0xf]
    %v649 = vld [vmem:[%s3 + $0xc] sm:$0xf]
    %v650 = vlaneseq
    %v651 = vshrl.u32 %v650, 7
    %v652 = vsub.s32 0, %v651
    %v653 = vrot.slane %v644, %v652
    %v658 = vunpack.c.l.b16 %v646
    %v659 = vunpack.c.l.b16 %v647
    %v660 = vunpack.c.l.b16 %v648
    %v661 = vunpack.c.l.b16 %v649
    %v662 = vpack.c.b16 %v659, %v658
    %v663 = vpack.c.b16 %v661, %v660
    %vm666 = vcmask 261120
    %v668 = vsel %vm666, %v645, 0
    %670 = vmatprep.subr.bf16.mxu0 0
    %671 = vmatpush1.bf16.msra.mxu0 %v662
    %672 = vmatprep.subr.bf16.mxu0 0
    %673 = vmatpush1.bf16.msra.mxu0 %v663
    %674 = vmatprep.subr.bf16.mxu0 0
    %675 = vmatpush1.bf16.msra.mxu0 0
    %676 = vmatprep.subr.bf16.mxu0 0
    %677 = vmatpush1.bf16.msra.mxu0 0
    %678 = vmatprep.subr.bf16.mxu0 0
    %679 = vmatpush1.bf16.msra.mxu0 0
    %680 = vmatprep.subr.bf16.mxu0 0
    %681 = vmatpush1.bf16.msra.mxu0 0
    %682 = vmatprep.subr.bf16.mxu0 0
    %683 = vmatpush1.bf16.msra.mxu0 0
    %684 = vmatprep.subr.bf16.mxu0 0
    %685 = vmatpush1.bf16.msra.mxu0 0
    %686 = vmatprep.subr.bf16.mxu0 0
    %687 = vmatpush1.bf16.msra.mxu0 0
    %688 = vmatprep.subr.bf16.mxu0 0
    %689 = vmatpush1.bf16.msra.mxu0 0
    %690 = vmatprep.subr.bf16.mxu0 0
    %691 = vmatpush1.bf16.msra.mxu0 0
    %692 = vmatprep.subr.bf16.mxu0 0
    %693 = vmatpush1.bf16.msra.mxu0 0
    %694 = vmatprep.subr.bf16.mxu0 0
    %695 = vmatpush1.bf16.msra.mxu0 0
    %696 = vmatprep.subr.bf16.mxu0 0
    %697 = vmatpush1.bf16.msra.mxu0 0
    %698 = vmatprep.subr.bf16.mxu0 0
    %699 = vmatpush1.bf16.msra.mxu0 0
    %700 = vmatprep.subr.bf16.mxu0 0
    %701 = vmatpush1.bf16.msra.mxu0 0
    %702 = vmatprep.mubr.bf16.mxu0 0
    %703 = vmatmul.mubr.bf16.gmra.mrb[0].mxu0 %v668
    %v704 = vpop.f32.mrb[0].mxu0
    %v705 = vadd.f32 %v653, %v704
    %v706 = vpop.f32.mrb[0].mxu0
    %v707 = vpop.f32.mrb[0].mxu0
    %v708 = vadd.f32 %v653, %v707
    %v709 = vpop.f32.mrb[0].mxu0
    %710 = vdwg.mxu0
    %713 = vrot.lane.b32.xlu0 %v705, 120
    %v714 = vpop.permute.xlu0 %713
    %715 = vrot.lane.b32.xlu0 %v708, 120
    %v716 = vpop.permute.xlu0 %715
    %719 = vrot.lane.b32.xlu0 %v705, 112
    %v720 = vpop.permute.xlu0 %719
    %721 = vrot.lane.b32.xlu0 %v708, 112
    %v722 = vpop.permute.xlu0 %721
    %725 = vrot.lane.b32.xlu0 %v705, 104
    %v726 = vpop.permute.xlu0 %725
    %727 = vrot.lane.b32.xlu0 %v708, 104
    %v728 = vpop.permute.xlu0 %727
    %v731 = vpack.c.bf16 %v705, %v705
    %v732 = vpack.c.bf16 %v708, %v708
    %v733 = vpack.c.bf16 %v714, %v714
    %v734 = vpack.c.bf16 %v716, %v716
    %v735 = vpack.c.bf16 %v720, %v720
    %v736 = vpack.c.bf16 %v722, %v722
    %v737 = vpack.c.bf16 %v726, %v726
    %v738 = vpack.c.bf16 %v728, %v728
    %740 = vrot.lane.b32.xlu0 %v731, 96
    %v741 = vpop.permute.xlu0 %740
    %vm742 = vcmask 64512
    %v744 = vsel %vm742, %v731, 0
    %v747 = vsel %vm742, %v741, 0
    %749 = vmatprep.subr.bf16.mxu0 0
    %750 = vmatpush1.bf16.xpose.msra.mxu0 %v747
    %751 = vmatprep.subr.bf16.mxu0 0
    %752 = vmatpush1.bf16.xpose.msra.mxu0 0
    %753 = vmatprep.subr.bf16.mxu0 0
    %754 = vmatpush1.bf16.xpose.msra.mxu0 0
    %755 = vmatprep.subr.bf16.mxu0 0
    %756 = vmatpush1.bf16.xpose.msra.mxu0 0
    %757 = vmatprep.subr.bf16.mxu0 0
    %758 = vmatpush1.bf16.xpose.msra.mxu0 0
    %759 = vmatprep.subr.bf16.mxu0 0
    %760 = vmatpush1.bf16.xpose.msra.mxu0 0
    %761 = vmatprep.subr.bf16.mxu0 0
    %762 = vmatpush1.bf16.xpose.msra.mxu0 0
    %763 = vmatprep.subr.bf16.mxu0 0
    %764 = vmatpush1.bf16.xpose.msra.mxu0 0
    %765 = vmatprep.subr.bf16.mxu0 0
    %766 = vmatpush1.bf16.xpose.msra.mxu0 0
    %767 = vmatprep.subr.bf16.mxu0 0
    %768 = vmatpush1.bf16.xpose.msra.mxu0 0
    %769 = vmatprep.subr.bf16.mxu0 0
    %770 = vmatpush1.bf16.xpose.msra.mxu0 0
    %771 = vmatprep.subr.bf16.mxu0 0
    %772 = vmatpush1.bf16.xpose.msra.mxu0 0
    %773 = vmatprep.subr.bf16.mxu0 0
    %774 = vmatpush1.bf16.xpose.msra.mxu0 0
    %775 = vmatprep.subr.bf16.mxu0 0
    %776 = vmatpush1.bf16.xpose.msra.mxu0 0
    %777 = vmatprep.subr.bf16.mxu0 0
    %778 = vmatpush1.bf16.xpose.msra.mxu0 0
    %779 = vmatprep.subr.bf16.mxu0 0
    %780 = vmatpush1.bf16.xpose.msra.mxu0 0
    %781 = vmatprep.mubr.bf16.mxu0 0
    %782 = vmatmul.mubr.bf16.gmra.mrb[0].mxu0 %v744
    %v783 = vpop.f32.mrb[0].mxu0
    %v784 = vadd.f32 0.0, %v783
    %v785 = vpop.f32.mrb[0].mxu0
    %v786 = vpop.f32.mrb[0].mxu0
    %v787 = vpop.f32.mrb[0].mxu0
    %788 = vdwg.mxu0
    %790 = vrot.lane.b32.xlu0 %v732, 96
    %v791 = vpop.permute.xlu0 %790
    %v793 = vsel %vm742, %v732, 0
    %v796 = vsel %vm742, %v791, 0
    %798 = vmatprep.subr.bf16.mxu0 0
    %799 = vmatpush1.bf16.xpose.msra.mxu0 %v796
    %800 = vmatprep.subr.bf16.mxu0 0
    %801 = vmatpush1.bf16.xpose.msra.mxu0 0
    %802 = vmatprep.subr.bf16.mxu0 0
    %803 = vmatpush1.bf16.xpose.msra.mxu0 0
    %804 = vmatprep.subr.bf16.mxu0 0
    %805 = vmatpush1.bf16.xpose.msra.mxu0 0
    %806 = vmatprep.subr.bf16.mxu0 0
    %807 = vmatpush1.bf16.xpose.msra.mxu0 0
    %808 = vmatprep.subr.bf16.mxu0 0
    %809 = vmatpush1.bf16.xpose.msra.mxu0 0
    %810 = vmatprep.subr.bf16.mxu0 0
    %811 = vmatpush1.bf16.xpose.msra.mxu0 0
    %812 = vmatprep.subr.bf16.mxu0 0
    %813 = vmatpush1.bf16.xpose.msra.mxu0 0
    %814 = vmatprep.subr.bf16.mxu0 0
    %815 = vmatpush1.bf16.xpose.msra.mxu0 0
    %816 = vmatprep.subr.bf16.mxu0 0
    %817 = vmatpush1.bf16.xpose.msra.mxu0 0
    %818 = vmatprep.subr.bf16.mxu0 0
    %819 = vmatpush1.bf16.xpose.msra.mxu0 0
    %820 = vmatprep.subr.bf16.mxu0 0
    %821 = vmatpush1.bf16.xpose.msra.mxu0 0
    %822 = vmatprep.subr.bf16.mxu0 0
    %823 = vmatpush1.bf16.xpose.msra.mxu0 0
    %824 = vmatprep.subr.bf16.mxu0 0
    %825 = vmatpush1.bf16.xpose.msra.mxu0 0
    %826 = vmatprep.subr.bf16.mxu0 0
    %827 = vmatpush1.bf16.xpose.msra.mxu0 0
    %828 = vmatprep.subr.bf16.mxu0 0
    %829 = vmatpush1.bf16.xpose.msra.mxu0 0
    %830 = vmatprep.mubr.bf16.mxu0 0
    %831 = vmatmul.mubr.bf16.gmra.mrb[0].mxu0 %v793
    %v832 = vpop.f32.mrb[0].mxu0
    %v833 = vadd.f32 0.0, %v832
    %v834 = vpop.f32.mrb[0].mxu0
    %v835 = vpop.f32.mrb[0].mxu0
    %v836 = vpop.f32.mrb[0].mxu0
    %837 = vdwg.mxu0
    %839 = vrot.lane.b32.xlu0 %v733, 96
    %v840 = vpop.permute.xlu0 %839
    %v842 = vsel %vm742, %v733, 0
    %v845 = vsel %vm742, %v840, 0
    %847 = vmatprep.subr.bf16.mxu0 0
    %848 = vmatpush1.bf16.xpose.msra.mxu0 %v845
    %849 = vmatprep.subr.bf16.mxu0 0
    %850 = vmatpush1.bf16.xpose.msra.mxu0 0
    %851 = vmatprep.subr.bf16.mxu0 0
    %852 = vmatpush1.bf16.xpose.msra.mxu0 0
    %853 = vmatprep.subr.bf16.mxu0 0
    %854 = vmatpush1.bf16.xpose.msra.mxu0 0
    %855 = vmatprep.subr.bf16.mxu0 0
    %856 = vmatpush1.bf16.xpose.msra.mxu0 0
    %857 = vmatprep.subr.bf16.mxu0 0
    %858 = vmatpush1.bf16.xpose.msra.mxu0 0
    %859 = vmatprep.subr.bf16.mxu0 0
    %860 = vmatpush1.bf16.xpose.msra.mxu0 0
    %861 = vmatprep.subr.bf16.mxu0 0
    %862 = vmatpush1.bf16.xpose.msra.mxu0 0
    %863 = vmatprep.subr.bf16.mxu0 0
    %864 = vmatpush1.bf16.xpose.msra.mxu0 0
    %865 = vmatprep.subr.bf16.mxu0 0
    %866 = vmatpush1.bf16.xpose.msra.mxu0 0
    %867 = vmatprep.subr.bf16.mxu0 0
    %868 = vmatpush1.bf16.xpose.msra.mxu0 0
    %869 = vmatprep.subr.bf16.mxu0 0
    %870 = vmatpush1.bf16.xpose.msra.mxu0 0
    %871 = vmatprep.subr.bf16.mxu0 0
    %872 = vmatpush1.bf16.xpose.msra.mxu0 0
    %873 = vmatprep.subr.bf16.mxu0 0
    %874 = vmatpush1.bf16.xpose.msra.mxu0 0
    %875 = vmatprep.subr.bf16.mxu0 0
    %876 = vmatpush1.bf16.xpose.msra.mxu0 0
    %877 = vmatprep.subr.bf16.mxu0 0
    %878 = vmatpush1.bf16.xpose.msra.mxu0 0
    %879 = vmatprep.mubr.bf16.mxu0 0
    %880 = vmatmul.mubr.bf16.gmra.mrb[0].mxu0 %v842
    %v881 = vpop.f32.mrb[0].mxu0
    %v882 = vadd.f32 0.0, %v881
    %v883 = vpop.f32.mrb[0].mxu0
    %v884 = vpop.f32.mrb[0].mxu0
    %v885 = vpop.f32.mrb[0].mxu0
    %886 = vdwg.mxu0
    %888 = vrot.lane.b32.xlu0 %v734, 96
    %v889 = vpop.permute.xlu0 %888
    %v891 = vsel %vm742, %v734, 0
    %v894 = vsel %vm742, %v889, 0
    %896 = vmatprep.subr.bf16.mxu0 0
    %897 = vmatpush1.bf16.xpose.msra.mxu0 %v894
    %898 = vmatprep.subr.bf16.mxu0 0
    %899 = vmatpush1.bf16.xpose.msra.mxu0 0
    %900 = vmatprep.subr.bf16.mxu0 0
    %901 = vmatpush1.bf16.xpose.msra.mxu0 0
    %902 = vmatprep.subr.bf16.mxu0 0
    %903 = vmatpush1.bf16.xpose.msra.mxu0 0
    %904 = vmatprep.subr.bf16.mxu0 0
    %905 = vmatpush1.bf16.xpose.msra.mxu0 0
    %906 = vmatprep.subr.bf16.mxu0 0
    %907 = vmatpush1.bf16.xpose.msra.mxu0 0
    %908 = vmatprep.subr.bf16.mxu0 0
    %909 = vmatpush1.bf16.xpose.msra.mxu0 0
    %910 = vmatprep.subr.bf16.mxu0 0
    %911 = vmatpush1.bf16.xpose.msra.mxu0 0
    %912 = vmatprep.subr.bf16.mxu0 0
    %913 = vmatpush1.bf16.xpose.msra.mxu0 0
    %914 = vmatprep.subr.bf16.mxu0 0
    %915 = vmatpush1.bf16.xpose.msra.mxu0 0
    %916 = vmatprep.subr.bf16.mxu0 0
    %917 = vmatpush1.bf16.xpose.msra.mxu0 0
    %918 = vmatprep.subr.bf16.mxu0 0
    %919 = vmatpush1.bf16.xpose.msra.mxu0 0
    %920 = vmatprep.subr.bf16.mxu0 0
    %921 = vmatpush1.bf16.xpose.msra.mxu0 0
    %922 = vmatprep.subr.bf16.mxu0 0
    %923 = vmatpush1.bf16.xpose.msra.mxu0 0
    %924 = vmatprep.subr.bf16.mxu0 0
    %925 = vmatpush1.bf16.xpose.msra.mxu0 0
    %926 = vmatprep.subr.bf16.mxu0 0
    %927 = vmatpush1.bf16.xpose.msra.mxu0 0
    %928 = vmatprep.mubr.bf16.mxu0 0
    %929 = vmatmul.mubr.bf16.gmra.mrb[0].mxu0 %v891
    %v930 = vpop.f32.mrb[0].mxu0
    %v931 = vadd.f32 0.0, %v930
    %v932 = vpop.f32.mrb[0].mxu0
    %v933 = vpop.f32.mrb[0].mxu0
    %v934 = vpop.f32.mrb[0].mxu0
    %935 = vdwg.mxu0
    %937 = vrot.lane.b32.xlu0 %v735, 96
    %v938 = vpop.permute.xlu0 %937
    %v940 = vsel %vm742, %v735, 0
    %v943 = vsel %vm742, %v938, 0
    %945 = vmatprep.subr.bf16.mxu0 0
    %946 = vmatpush1.bf16.xpose.msra.mxu0 %v943
    %947 = vmatprep.subr.bf16.mxu0 0
    %948 = vmatpush1.bf16.xpose.msra.mxu0 0
    %949 = vmatprep.subr.bf16.mxu0 0
    %950 = vmatpush1.bf16.xpose.msra.mxu0 0
    %951 = vmatprep.subr.bf16.mxu0 0
    %952 = vmatpush1.bf16.xpose.msra.mxu0 0
    %953 = vmatprep.subr.bf16.mxu0 0
    %954 = vmatpush1.bf16.xpose.msra.mxu0 0
    %955 = vmatprep.subr.bf16.mxu0 0
    %956 = vmatpush1.bf16.xpose.msra.mxu0 0
    %957 = vmatprep.subr.bf16.mxu0 0
    %958 = vmatpush1.bf16.xpose.msra.mxu0 0
    %959 = vmatprep.subr.bf16.mxu0 0
    %960 = vmatpush1.bf16.xpose.msra.mxu0 0
    %961 = vmatprep.subr.bf16.mxu0 0
    %962 = vmatpush1.bf16.xpose.msra.mxu0 0
    %963 = vmatprep.subr.bf16.mxu0 0
    %964 = vmatpush1.bf16.xpose.msra.mxu0 0
    %965 = vmatprep.subr.bf16.mxu0 0
    %966 = vmatpush1.bf16.xpose.msra.mxu0 0
    %967 = vmatprep.subr.bf16.mxu0 0
    %968 = vmatpush1.bf16.xpose.msra.mxu0 0
    %969 = vmatprep.subr.bf16.mxu0 0
    %970 = vmatpush1.bf16.xpose.msra.mxu0 0
    %971 = vmatprep.subr.bf16.mxu0 0
    %972 = vmatpush1.bf16.xpose.msra.mxu0 0
    %973 = vmatprep.subr.bf16.mxu0 0
    %974 = vmatpush1.bf16.xpose.msra.mxu0 0
    %975 = vmatprep.subr.bf16.mxu0 0
    %976 = vmatpush1.bf16.xpose.msra.mxu0 0
    %977 = vmatprep.mubr.bf16.mxu0 0
    %978 = vmatmul.mubr.bf16.gmra.mrb[0].mxu0 %v940
    %v979 = vpop.f32.mrb[0].mxu0
    %v980 = vadd.f32 0.0, %v979
    %v981 = vpop.f32.mrb[0].mxu0
    %v982 = vpop.f32.mrb[0].mxu0
    %v983 = vpop.f32.mrb[0].mxu0
    %984 = vdwg.mxu0
    %986 = vrot.lane.b32.xlu0 %v736, 96
    %v987 = vpop.permute.xlu0 %986
    %v989 = vsel %vm742, %v736, 0
    %v992 = vsel %vm742, %v987, 0
    %994 = vmatprep.subr.bf16.mxu0 0
    %995 = vmatpush1.bf16.xpose.msra.mxu0 %v992
    %996 = vmatprep.subr.bf16.mxu0 0
    %997 = vmatpush1.bf16.xpose.msra.mxu0 0
    %998 = vmatprep.subr.bf16.mxu0 0
    %999 = vmatpush1.bf16.xpose.msra.mxu0 0
    %1000 = vmatprep.subr.bf16.mxu0 0
    %1001 = vmatpush1.bf16.xpose.msra.mxu0 0
    %1002 = vmatprep.subr.bf16.mxu0 0
    %1003 = vmatpush1.bf16.xpose.msra.mxu0 0
    %1004 = vmatprep.subr.bf16.mxu0 0
    %1005 = vmatpush1.bf16.xpose.msra.mxu0 0
    %1006 = vmatprep.subr.bf16.mxu0 0
    %1007 = vmatpush1.bf16.xpose.msra.mxu0 0
    %1008 = vmatprep.subr.bf16.mxu0 0
    %1009 = vmatpush1.bf16.xpose.msra.mxu0 0
    %1010 = vmatprep.subr.bf16.mxu0 0
    %1011 = vmatpush1.bf16.xpose.msra.mxu0 0
    %1012 = vmatprep.subr.bf16.mxu0 0
    %1013 = vmatpush1.bf16.xpose.msra.mxu0 0
    %1014 = vmatprep.subr.bf16.mxu0 0
    %1015 = vmatpush1.bf16.xpose.msra.mxu0 0
    %1016 = vmatprep.subr.bf16.mxu0 0
    %1017 = vmatpush1.bf16.xpose.msra.mxu0 0
    %1018 = vmatprep.subr.bf16.mxu0 0
    %1019 = vmatpush1.bf16.xpose.msra.mxu0 0
    %1020 = vmatprep.subr.bf16.mxu0 0
    %1021 = vmatpush1.bf16.xpose.msra.mxu0 0
    %1022 = vmatprep.subr.bf16.mxu0 0
    %1023 = vmatpush1.bf16.xpose.msra.mxu0 0
    %1024 = vmatprep.subr.bf16.mxu0 0
    %1025 = vmatpush1.bf16.xpose.msra.mxu0 0
    %1026 = vmatprep.mubr.bf16.mxu0 0
    %1027 = vmatmul.mubr.bf16.gmra.mrb[0].mxu0 %v989
    %v1028 = vpop.f32.mrb[0].mxu0
    %v1029 = vadd.f32 0.0, %v1028
    %v1030 = vpop.f32.mrb[0].mxu0
    %v1031 = vpop.f32.mrb[0].mxu0
    %v1032 = vpop.f32.mrb[0].mxu0
    %1033 = vdwg.mxu0
    %1035 = vrot.lane.b32.xlu0 %v737, 96
    %v1036 = vpop.permute.xlu0 %1035
    %v1038 = vsel %vm742, %v737, 0
    %v1041 = vsel %vm742, %v1036, 0
    %1043 = vmatprep.subr.bf16.mxu0 0
    %1044 = vmatpush1.bf16.xpose.msra.mxu0 %v1041
    %1045 = vmatprep.subr.bf16.mxu0 0
    %1046 = vmatpush1.bf16.xpose.msra.mxu0 0
    %1047 = vmatprep.subr.bf16.mxu0 0
    %1048 = vmatpush1.bf16.xpose.msra.mxu0 0
    %1049 = vmatprep.subr.bf16.mxu0 0
    %1050 = vmatpush1.bf16.xpose.msra.mxu0 0
    %1051 = vmatprep.subr.bf16.mxu0 0
    %1052 = vmatpush1.bf16.xpose.msra.mxu0 0
    %1053 = vmatprep.subr.bf16.mxu0 0
    %1054 = vmatpush1.bf16.xpose.msra.mxu0 0
    %1055 = vmatprep.subr.bf16.mxu0 0
    %1056 = vmatpush1.bf16.xpose.msra.mxu0 0
    %1057 = vmatprep.subr.bf16.mxu0 0
    %1058 = vmatpush1.bf16.xpose.msra.mxu0 0
    %1059 = vmatprep.subr.bf16.mxu0 0
    %1060 = vmatpush1.bf16.xpose.msra.mxu0 0
    %1061 = vmatprep.subr.bf16.mxu0 0
    %1062 = vmatpush1.bf16.xpose.msra.mxu0 0
    %1063 = vmatprep.subr.bf16.mxu0 0
    %1064 = vmatpush1.bf16.xpose.msra.mxu0 0
    %1065 = vmatprep.subr.bf16.mxu0 0
    %1066 = vmatpush1.bf16.xpose.msra.mxu0 0
    %1067 = vmatprep.subr.bf16.mxu0 0
    %1068 = vmatpush1.bf16.xpose.msra.mxu0 0
    %1069 = vmatprep.subr.bf16.mxu0 0
    %1070 = vmatpush1.bf16.xpose.msra.mxu0 0
    %1071 = vmatprep.subr.bf16.mxu0 0
    %1072 = vmatpush1.bf16.xpose.msra.mxu0 0
    %1073 = vmatprep.subr.bf16.mxu0 0
    %1074 = vmatpush1.bf16.xpose.msra.mxu0 0
    %1075 = vmatprep.mubr.bf16.mxu0 0
    %1076 = vmatmul.mubr.bf16.gmra.mrb[0].mxu0 %v1038
    %v1077 = vpop.f32.mrb[0].mxu0
    %v1078 = vadd.f32 0.0, %v1077
    %v1079 = vpop.f32.mrb[0].mxu0
    %v1080 = vpop.f32.mrb[0].mxu0
    %v1081 = vpop.f32.mrb[0].mxu0
    %1082 = vdwg.mxu0
    %1084 = vrot.lane.b32.xlu0 %v738, 96
    %v1085 = vpop.permute.xlu0 %1084
    %v1087 = vsel %vm742, %v738, 0
    %v1090 = vsel %vm742, %v1085, 0
    %1092 = vmatprep.subr.bf16.mxu0 0
    %1093 = vmatpush1.bf16.xpose.msra.mxu0 %v1090
    %1094 = vmatprep.subr.bf16.mxu0 0
    %1095 = vmatpush1.bf16.xpose.msra.mxu0 0
    %1096 = vmatprep.subr.bf16.mxu0 0
    %1097 = vmatpush1.bf16.xpose.msra.mxu0 0
    %1098 = vmatprep.subr.bf16.mxu0 0
    %1099 = vmatpush1.bf16.xpose.msra.mxu0 0
    %1100 = vmatprep.subr.bf16.mxu0 0
    %1101 = vmatpush1.bf16.xpose.msra.mxu0 0
    %1102 = vmatprep.subr.bf16.mxu0 0
    %1103 = vmatpush1.bf16.xpose.msra.mxu0 0
    %1104 = vmatprep.subr.bf16.mxu0 0
    %1105 = vmatpush1.bf16.xpose.msra.mxu0 0
    %1106 = vmatprep.subr.bf16.mxu0 0
    %1107 = vmatpush1.bf16.xpose.msra.mxu0 0
    %1108 = vmatprep.subr.bf16.mxu0 0
    %1109 = vmatpush1.bf16.xpose.msra.mxu0 0
    %1110 = vmatprep.subr.bf16.mxu0 0
    %1111 = vmatpush1.bf16.xpose.msra.mxu0 0
    %1112 = vmatprep.subr.bf16.mxu0 0
    %1113 = vmatpush1.bf16.xpose.msra.mxu0 0
    %1114 = vmatprep.subr.bf16.mxu0 0
    %1115 = vmatpush1.bf16.xpose.msra.mxu0 0
    %1116 = vmatprep.subr.bf16.mxu0 0
    %1117 = vmatpush1.bf16.xpose.msra.mxu0 0
    %1118 = vmatprep.subr.bf16.mxu0 0
    %1119 = vmatpush1.bf16.xpose.msra.mxu0 0
    %1120 = vmatprep.subr.bf16.mxu0 0
    %1121 = vmatpush1.bf16.xpose.msra.mxu0 0
    %1122 = vmatprep.subr.bf16.mxu0 0
    %1123 = vmatpush1.bf16.xpose.msra.mxu0 0
    %1124 = vmatprep.mubr.bf16.mxu0 0
    %1125 = vmatmul.mubr.bf16.gmra.mrb[0].mxu0 %v1087
    %v1126 = vpop.f32.mrb[0].mxu0
    %v1127 = vadd.f32 0.0, %v1126
    %v1128 = vpop.f32.mrb[0].mxu0
    %v1129 = vpop.f32.mrb[0].mxu0
    %v1130 = vpop.f32.mrb[0].mxu0
    %1131 = vdwg.mxu0
    %v1132 = vmul.f32 %v784, 0.35355338
    %v1133 = vmul.f32 %v833, 0.35355338
    %v1134 = vmul.f32 %v882, 0.35355338
    %v1135 = vmul.f32 %v931, 0.35355338
    %v1136 = vmul.f32 %v980, 0.35355338
    %v1137 = vmul.f32 %v1029, 0.35355338
    %v1138 = vmul.f32 %v1078, 0.35355338
    %v1139 = vmul.f32 %v1127, 0.35355338
    %v1140 = vsel %vm642, 1e-10, %v1132
    %v1141 = vsel %vm643, 1e-10, %v1133
    %v1142 = vsel %vm642, 1e-10, %v1134
    %v1143 = vsel %vm643, 1e-10, %v1135
    %v1144 = vsel %vm642, 1e-10, %v1136
    %v1145 = vsel %vm643, 1e-10, %v1137
    %v1146 = vsel %vm642, 1e-10, %v1138
    %v1147 = vsel %vm643, 1e-10, %v1139
    %v1148 = vsel %vm742, %v1140, -inf
    %1149 = vmax.xlane.f32.xlu0 %v1148
    %v1150 = vpop.xlane.xlu0 %1149
    %v1151 = vsel %vm742, %v1141, -inf
    %1152 = vmax.xlane.f32.xlu0 %v1151
    %v1153 = vpop.xlane.xlu0 %1152
    %v1154 = vsel %vm742, %v1142, -inf
    %1155 = vmax.xlane.f32.xlu0 %v1154
    %v1156 = vpop.xlane.xlu0 %1155
    %v1157 = vsel %vm742, %v1143, -inf
    %1158 = vmax.xlane.f32.xlu0 %v1157
    %v1159 = vpop.xlane.xlu0 %1158
    %v1160 = vsel %vm742, %v1144, -inf
    %1161 = vmax.xlane.f32.xlu0 %v1160
    %v1162 = vpop.xlane.xlu0 %1161
    %v1163 = vsel %vm742, %v1145, -inf
    %1164 = vmax.xlane.f32.xlu0 %v1163
    %v1165 = vpop.xlane.xlu0 %1164
    %v1166 = vsel %vm742, %v1146, -inf
    %1167 = vmax.xlane.f32.xlu0 %v1166
    %v1168 = vpop.xlane.xlu0 %1167
    %v1169 = vsel %vm742, %v1147, -inf
    %1170 = vmax.xlane.f32.xlu0 %v1169
    %v1171 = vpop.xlane.xlu0 %1170
    %v1172 = vsub.f32 %v1140, %v1150
    %v1173 = vsub.f32 %v1141, %v1153
    %v1174 = vsub.f32 %v1142, %v1156
    %v1175 = vsub.f32 %v1143, %v1159
    %v1176 = vsub.f32 %v1144, %v1162
    %v1177 = vsub.f32 %v1145, %v1165
    %v1178 = vsub.f32 %v1146, %v1168
    %v1179 = vsub.f32 %v1147, %v1171
    %v1180 = vmul.f32 %v1172, 1.442695
    %v1181 = vpow.pop %v1180
    %v1182 = vmul.f32 %v1173, 1.442695
    %v1183 = vpow.pop %v1182
    %v1184 = vmul.f32 %v1174, 1.442695
    %v1185 = vpow.pop %v1184
    %v1186 = vmul.f32 %v1175, 1.442695
    %v1187 = vpow.pop %v1186
    %v1188 = vmul.f32 %v1176, 1.442695
    %v1189 = vpow.pop %v1188
    %v1190 = vmul.f32 %v1177, 1.442695
    %v1191 = vpow.pop %v1190
    %v1192 = vmul.f32 %v1178, 1.442695
    %v1193 = vpow.pop %v1192
    %v1194 = vmul.f32 %v1179, 1.442695
    %v1195 = vpow.pop %v1194
    %v1196 = vsel %vm742, %v1181, 0.0
    %1197 = vadd.xlane.f32.xlu0 %v1196
    %v1198 = vpop.xlane.xlu0 %1197
    %v1199 = vsel %vm742, %v1183, 0.0
    %1200 = vadd.xlane.f32.xlu0 %v1199
    %v1201 = vpop.xlane.xlu0 %1200
    %v1202 = vsel %vm742, %v1185, 0.0
    %1203 = vadd.xlane.f32.xlu0 %v1202
    %v1204 = vpop.xlane.xlu0 %1203
    %v1205 = vsel %vm742, %v1187, 0.0
    %1206 = vadd.xlane.f32.xlu0 %v1205
    %v1207 = vpop.xlane.xlu0 %1206
    %v1208 = vsel %vm742, %v1189, 0.0
    %1209 = vadd.xlane.f32.xlu0 %v1208
    %v1210 = vpop.xlane.xlu0 %1209
    %v1211 = vsel %vm742, %v1191, 0.0
    %1212 = vadd.xlane.f32.xlu0 %v1211
    %v1213 = vpop.xlane.xlu0 %1212
    %v1214 = vsel %vm742, %v1193, 0.0
    %1215 = vadd.xlane.f32.xlu0 %v1214
    %v1216 = vpop.xlane.xlu0 %1215
    %v1217 = vsel %vm742, %v1195, 0.0
    %1218 = vadd.xlane.f32.xlu0 %v1217
    %v1219 = vpop.xlane.xlu0 %1218
    %v1220 = vrcp.pop %v1198
    %v1221 = vrcp.pop %v1201
    %v1222 = vrcp.pop %v1204
    %v1223 = vrcp.pop %v1207
    %v1224 = vrcp.pop %v1210
    %v1225 = vrcp.pop %v1213
    %v1226 = vrcp.pop %v1216
    %v1227 = vrcp.pop %v1219
    %v1228 = vmul.f32 %v1181, %v1220
    %v1229 = vmul.f32 %v1183, %v1221
    %v1230 = vmul.f32 %v1185, %v1222
    %v1231 = vmul.f32 %v1187, %v1223
    %v1232 = vmul.f32 %v1189, %v1224
    %v1233 = vmul.f32 %v1191, %v1225
    %v1234 = vmul.f32 %v1193, %v1226
    %v1235 = vmul.f32 %v1195, %v1227
    %v1236 = vpack.c.bf16 %v1228, %v1228
    %v1237 = vpack.c.bf16 %v1229, %v1229
    %v1238 = vpack.c.bf16 %v1230, %v1230
    %v1239 = vpack.c.bf16 %v1231, %v1231
    %v1240 = vpack.c.bf16 %v1232, %v1232
    %v1241 = vpack.c.bf16 %v1233, %v1233
    %v1242 = vpack.c.bf16 %v1234, %v1234
    %v1243 = vpack.c.bf16 %v1235, %v1235
    %1244 = vrot.lane.b32.xlu0 %v731, 64
    %v1245 = vpop.permute.xlu0 %1244
    %v1247 = vsel %vm742, %v1236, 0
    %vm1249 = vcmask 1043456
    %v1251 = vsel %vm1249, %v1245, 0
    %1253 = vmatprep.subr.bf16.mxu0 0
    %1254 = vmatpush1.bf16.msra.mxu0 %v1251
    %1255 = vmatprep.subr.bf16.mxu0 0
    %1256 = vmatpush1.bf16.msra.mxu0 0
    %1257 = vmatprep.subr.bf16.mxu0 0
    %1258 = vmatpush1.bf16.msra.mxu0 0
    %1259 = vmatprep.subr.bf16.mxu0 0
    %1260 = vmatpush1.bf16.msra.mxu0 0
    %1261 = vmatprep.subr.bf16.mxu0 0
    %1262 = vmatpush1.bf16.msra.mxu0 0
    %1263 = vmatprep.subr.bf16.mxu0 0
    %1264 = vmatpush1.bf16.msra.mxu0 0
    %1265 = vmatprep.subr.bf16.mxu0 0
    %1266 = vmatpush1.bf16.msra.mxu0 0
    %1267 = vmatprep.subr.bf16.mxu0 0
    %1268 = vmatpush1.bf16.msra.mxu0 0
    %1269 = vmatprep.subr.bf16.mxu0 0
    %1270 = vmatpush1.bf16.msra.mxu0 0
    %1271 = vmatprep.subr.bf16.mxu0 0
    %1272 = vmatpush1.bf16.msra.mxu0 0
    %1273 = vmatprep.subr.bf16.mxu0 0
    %1274 = vmatpush1.bf16.msra.mxu0 0
    %1275 = vmatprep.subr.bf16.mxu0 0
    %1276 = vmatpush1.bf16.msra.mxu0 0
    %1277 = vmatprep.subr.bf16.mxu0 0
    %1278 = vmatpush1.bf16.msra.mxu0 0
    %1279 = vmatprep.subr.bf16.mxu0 0
    %1280 = vmatpush1.bf16.msra.mxu0 0
    %1281 = vmatprep.subr.bf16.mxu0 0
    %1282 = vmatpush1.bf16.msra.mxu0 0
    %1283 = vmatprep.subr.bf16.mxu0 0
    %1284 = vmatpush1.bf16.msra.mxu0 0
    %1285 = vmatprep.mubr.bf16.mxu0 0
    %1286 = vmatmul.mubr.bf16.gmra.mrb[0].mxu0 %v1247
    %v1287 = vpop.f32.mrb[0].mxu0
    %v1288 = vadd.f32 0.0, %v1287
    %v1289 = vpop.f32.mrb[0].mxu0
    %v1290 = vpop.f32.mrb[0].mxu0
    %v1291 = vpop.f32.mrb[0].mxu0
    %1292 = vdwg.mxu0
    %1293 = vrot.lane.b32.xlu0 %v732, 64
    %v1294 = vpop.permute.xlu0 %1293
    %v1296 = vsel %vm742, %v1237, 0
    %v1299 = vsel %vm1249, %v1294, 0
    %1301 = vmatprep.subr.bf16.mxu0 0
    %1302 = vmatpush1.bf16.msra.mxu0 %v1299
    %1303 = vmatprep.subr.bf16.mxu0 0
    %1304 = vmatpush1.bf16.msra.mxu0 0
    %1305 = vmatprep.subr.bf16.mxu0 0
    %1306 = vmatpush1.bf16.msra.mxu0 0
    %1307 = vmatprep.subr.bf16.mxu0 0
    %1308 = vmatpush1.bf16.msra.mxu0 0
    %1309 = vmatprep.subr.bf16.mxu0 0
    %1310 = vmatpush1.bf16.msra.mxu0 0
    %1311 = vmatprep.subr.bf16.mxu0 0
    %1312 = vmatpush1.bf16.msra.mxu0 0
    %1313 = vmatprep.subr.bf16.mxu0 0
    %1314 = vmatpush1.bf16.msra.mxu0 0
    %1315 = vmatprep.subr.bf16.mxu0 0
    %1316 = vmatpush1.bf16.msra.mxu0 0
    %1317 = vmatprep.subr.bf16.mxu0 0
    %1318 = vmatpush1.bf16.msra.mxu0 0
    %1319 = vmatprep.subr.bf16.mxu0 0
    %1320 = vmatpush1.bf16.msra.mxu0 0
    %1321 = vmatprep.subr.bf16.mxu0 0
    %1322 = vmatpush1.bf16.msra.mxu0 0
    %1323 = vmatprep.subr.bf16.mxu0 0
    %1324 = vmatpush1.bf16.msra.mxu0 0
    %1325 = vmatprep.subr.bf16.mxu0 0
    %1326 = vmatpush1.bf16.msra.mxu0 0
    %1327 = vmatprep.subr.bf16.mxu0 0
    %1328 = vmatpush1.bf16.msra.mxu0 0
    %1329 = vmatprep.subr.bf16.mxu0 0
    %1330 = vmatpush1.bf16.msra.mxu0 0
    %1331 = vmatprep.subr.bf16.mxu0 0
    %1332 = vmatpush1.bf16.msra.mxu0 0
    %1333 = vmatprep.mubr.bf16.mxu0 0
    %1334 = vmatmul.mubr.bf16.gmra.mrb[0].mxu0 %v1296
    %v1335 = vpop.f32.mrb[0].mxu0
    %v1336 = vadd.f32 0.0, %v1335
    %v1337 = vpop.f32.mrb[0].mxu0
    %v1338 = vpop.f32.mrb[0].mxu0
    %v1339 = vpop.f32.mrb[0].mxu0
    %1340 = vdwg.mxu0
    %1341 = vrot.lane.b32.xlu0 %v733, 64
    %v1342 = vpop.permute.xlu0 %1341
    %v1344 = vsel %vm742, %v1238, 0
    %v1347 = vsel %vm1249, %v1342, 0
    %1349 = vmatprep.subr.bf16.mxu0 0
    %1350 = vmatpush1.bf16.msra.mxu0 %v1347
    %1351 = vmatprep.subr.bf16.mxu0 0
    %1352 = vmatpush1.bf16.msra.mxu0 0
    %1353 = vmatprep.subr.bf16.mxu0 0
    %1354 = vmatpush1.bf16.msra.mxu0 0
    %1355 = vmatprep.subr.bf16.mxu0 0
    %1356 = vmatpush1.bf16.msra.mxu0 0
    %1357 = vmatprep.subr.bf16.mxu0 0
    %1358 = vmatpush1.bf16.msra.mxu0 0
    %1359 = vmatprep.subr.bf16.mxu0 0
    %1360 = vmatpush1.bf16.msra.mxu0 0
    %1361 = vmatprep.subr.bf16.mxu0 0
    %1362 = vmatpush1.bf16.msra.mxu0 0
    %1363 = vmatprep.subr.bf16.mxu0 0
    %1364 = vmatpush1.bf16.msra.mxu0 0
    %1365 = vmatprep.subr.bf16.mxu0 0
    %1366 = vmatpush1.bf16.msra.mxu0 0
    %1367 = vmatprep.subr.bf16.mxu0 0
    %1368 = vmatpush1.bf16.msra.mxu0 0
    %1369 = vmatprep.subr.bf16.mxu0 0
    %1370 = vmatpush1.bf16.msra.mxu0 0
    %1371 = vmatprep.subr.bf16.mxu0 0
    %1372 = vmatpush1.bf16.msra.mxu0 0
    %1373 = vmatprep.subr.bf16.mxu0 0
    %1374 = vmatpush1.bf16.msra.mxu0 0
    %1375 = vmatprep.subr.bf16.mxu0 0
    %1376 = vmatpush1.bf16.msra.mxu0 0
    %1377 = vmatprep.subr.bf16.mxu0 0
    %1378 = vmatpush1.bf16.msra.mxu0 0
    %1379 = vmatprep.subr.bf16.mxu0 0
    %1380 = vmatpush1.bf16.msra.mxu0 0
    %1381 = vmatprep.mubr.bf16.mxu0 0
    %1382 = vmatmul.mubr.bf16.gmra.mrb[0].mxu0 %v1344
    %v1383 = vpop.f32.mrb[0].mxu0
    %v1384 = vadd.f32 0.0, %v1383
    %v1385 = vpop.f32.mrb[0].mxu0
    %v1386 = vpop.f32.mrb[0].mxu0
    %v1387 = vpop.f32.mrb[0].mxu0
    %1388 = vdwg.mxu0
    %1389 = vrot.lane.b32.xlu0 %v734, 64
    %v1390 = vpop.permute.xlu0 %1389
    %v1392 = vsel %vm742, %v1239, 0
    %v1395 = vsel %vm1249, %v1390, 0
    %1397 = vmatprep.subr.bf16.mxu0 0
    %1398 = vmatpush1.bf16.msra.mxu0 %v1395
    %1399 = vmatprep.subr.bf16.mxu0 0
    %1400 = vmatpush1.bf16.msra.mxu0 0
    %1401 = vmatprep.subr.bf16.mxu0 0
    %1402 = vmatpush1.bf16.msra.mxu0 0
    %1403 = vmatprep.subr.bf16.mxu0 0
    %1404 = vmatpush1.bf16.msra.mxu0 0
    %1405 = vmatprep.subr.bf16.mxu0 0
    %1406 = vmatpush1.bf16.msra.mxu0 0
    %1407 = vmatprep.subr.bf16.mxu0 0
    %1408 = vmatpush1.bf16.msra.mxu0 0
    %1409 = vmatprep.subr.bf16.mxu0 0
    %1410 = vmatpush1.bf16.msra.mxu0 0
    %1411 = vmatprep.subr.bf16.mxu0 0
    %1412 = vmatpush1.bf16.msra.mxu0 0
    %1413 = vmatprep.subr.bf16.mxu0 0
    %1414 = vmatpush1.bf16.msra.mxu0 0
    %1415 = vmatprep.subr.bf16.mxu0 0
    %1416 = vmatpush1.bf16.msra.mxu0 0
    %1417 = vmatprep.subr.bf16.mxu0 0
    %1418 = vmatpush1.bf16.msra.mxu0 0
    %1419 = vmatprep.subr.bf16.mxu0 0
    %1420 = vmatpush1.bf16.msra.mxu0 0
    %1421 = vmatprep.subr.bf16.mxu0 0
    %1422 = vmatpush1.bf16.msra.mxu0 0
    %1423 = vmatprep.subr.bf16.mxu0 0
    %1424 = vmatpush1.bf16.msra.mxu0 0
    %1425 = vmatprep.subr.bf16.mxu0 0
    %1426 = vmatpush1.bf16.msra.mxu0 0
    %1427 = vmatprep.subr.bf16.mxu0 0
    %1428 = vmatpush1.bf16.msra.mxu0 0
    %1429 = vmatprep.mubr.bf16.mxu0 0
    %1430 = vmatmul.mubr.bf16.gmra.mrb[0].mxu0 %v1392
    %v1431 = vpop.f32.mrb[0].mxu0
    %v1432 = vadd.f32 0.0, %v1431
    %v1433 = vpop.f32.mrb[0].mxu0
    %v1434 = vpop.f32.mrb[0].mxu0
    %v1435 = vpop.f32.mrb[0].mxu0
    %1436 = vdwg.mxu0
    %1437 = vrot.lane.b32.xlu0 %v735, 64
    %v1438 = vpop.permute.xlu0 %1437
    %v1440 = vsel %vm742, %v1240, 0
    %v1443 = vsel %vm1249, %v1438, 0
    %1445 = vmatprep.subr.bf16.mxu0 0
    %1446 = vmatpush1.bf16.msra.mxu0 %v1443
    %1447 = vmatprep.subr.bf16.mxu0 0
    %1448 = vmatpush1.bf16.msra.mxu0 0
    %1449 = vmatprep.subr.bf16.mxu0 0
    %1450 = vmatpush1.bf16.msra.mxu0 0
    %1451 = vmatprep.subr.bf16.mxu0 0
    %1452 = vmatpush1.bf16.msra.mxu0 0
    %1453 = vmatprep.subr.bf16.mxu0 0
    %1454 = vmatpush1.bf16.msra.mxu0 0
    %1455 = vmatprep.subr.bf16.mxu0 0
    %1456 = vmatpush1.bf16.msra.mxu0 0
    %1457 = vmatprep.subr.bf16.mxu0 0
    %1458 = vmatpush1.bf16.msra.mxu0 0
    %1459 = vmatprep.subr.bf16.mxu0 0
    %1460 = vmatpush1.bf16.msra.mxu0 0
    %1461 = vmatprep.subr.bf16.mxu0 0
    %1462 = vmatpush1.bf16.msra.mxu0 0
    %1463 = vmatprep.subr.bf16.mxu0 0
    %1464 = vmatpush1.bf16.msra.mxu0 0
    %1465 = vmatprep.subr.bf16.mxu0 0
    %1466 = vmatpush1.bf16.msra.mxu0 0
    %1467 = vmatprep.subr.bf16.mxu0 0
    %1468 = vmatpush1.bf16.msra.mxu0 0
    %1469 = vmatprep.subr.bf16.mxu0 0
    %1470 = vmatpush1.bf16.msra.mxu0 0
    %1471 = vmatprep.subr.bf16.mxu0 0
    %1472 = vmatpush1.bf16.msra.mxu0 0
    %1473 = vmatprep.subr.bf16.mxu0 0
    %1474 = vmatpush1.bf16.msra.mxu0 0
    %1475 = vmatprep.subr.bf16.mxu0 0
    %1476 = vmatpush1.bf16.msra.mxu0 0
    %1477 = vmatprep.mubr.bf16.mxu0 0
    %1478 = vmatmul.mubr.bf16.gmra.mrb[0].mxu0 %v1440
    %v1479 = vpop.f32.mrb[0].mxu0
    %v1480 = vadd.f32 0.0, %v1479
    %v1481 = vpop.f32.mrb[0].mxu0
    %v1482 = vpop.f32.mrb[0].mxu0
    %v1483 = vpop.f32.mrb[0].mxu0
    %1484 = vdwg.mxu0
    %1485 = vrot.lane.b32.xlu0 %v736, 64
    %v1486 = vpop.permute.xlu0 %1485
    %v1488 = vsel %vm742, %v1241, 0
    %v1491 = vsel %vm1249, %v1486, 0
    %1493 = vmatprep.subr.bf16.mxu0 0
    %1494 = vmatpush1.bf16.msra.mxu0 %v1491
    %1495 = vmatprep.subr.bf16.mxu0 0
    %1496 = vmatpush1.bf16.msra.mxu0 0
    %1497 = vmatprep.subr.bf16.mxu0 0
    %1498 = vmatpush1.bf16.msra.mxu0 0
    %1499 = vmatprep.subr.bf16.mxu0 0
    %1500 = vmatpush1.bf16.msra.mxu0 0
    %1501 = vmatprep.subr.bf16.mxu0 0
    %1502 = vmatpush1.bf16.msra.mxu0 0
    %1503 = vmatprep.subr.bf16.mxu0 0
    %1504 = vmatpush1.bf16.msra.mxu0 0
    %1505 = vmatprep.subr.bf16.mxu0 0
    %1506 = vmatpush1.bf16.msra.mxu0 0
    %1507 = vmatprep.subr.bf16.mxu0 0
    %1508 = vmatpush1.bf16.msra.mxu0 0
    %1509 = vmatprep.subr.bf16.mxu0 0
    %1510 = vmatpush1.bf16.msra.mxu0 0
    %1511 = vmatprep.subr.bf16.mxu0 0
    %1512 = vmatpush1.bf16.msra.mxu0 0
    %1513 = vmatprep.subr.bf16.mxu0 0
    %1514 = vmatpush1.bf16.msra.mxu0 0
    %1515 = vmatprep.subr.bf16.mxu0 0
    %1516 = vmatpush1.bf16.msra.mxu0 0
    %1517 = vmatprep.subr.bf16.mxu0 0
    %1518 = vmatpush1.bf16.msra.mxu0 0
    %1519 = vmatprep.subr.bf16.mxu0 0
    %1520 = vmatpush1.bf16.msra.mxu0 0
    %1521 = vmatprep.subr.bf16.mxu0 0
    %1522 = vmatpush1.bf16.msra.mxu0 0
    %1523 = vmatprep.subr.bf16.mxu0 0
    %1524 = vmatpush1.bf16.msra.mxu0 0
    %1525 = vmatprep.mubr.bf16.mxu0 0
    %1526 = vmatmul.mubr.bf16.gmra.mrb[0].mxu0 %v1488
    %v1527 = vpop.f32.mrb[0].mxu0
    %v1528 = vadd.f32 0.0, %v1527
    %v1529 = vpop.f32.mrb[0].mxu0
    %v1530 = vpop.f32.mrb[0].mxu0
    %v1531 = vpop.f32.mrb[0].mxu0
    %1532 = vdwg.mxu0
    %1533 = vrot.lane.b32.xlu0 %v737, 64
    %v1534 = vpop.permute.xlu0 %1533
    %v1536 = vsel %vm742, %v1242, 0
    %v1539 = vsel %vm1249, %v1534, 0
    %1541 = vmatprep.subr.bf16.mxu0 0
    %1542 = vmatpush1.bf16.msra.mxu0 %v1539
    %1543 = vmatprep.subr.bf16.mxu0 0
    %1544 = vmatpush1.bf16.msra.mxu0 0
    %1545 = vmatprep.subr.bf16.mxu0 0
    %1546 = vmatpush1.bf16.msra.mxu0 0
    %1547 = vmatprep.subr.bf16.mxu0 0
    %1548 = vmatpush1.bf16.msra.mxu0 0
    %1549 = vmatprep.subr.bf16.mxu0 0
    %1550 = vmatpush1.bf16.msra.mxu0 0
    %1551 = vmatprep.subr.bf16.mxu0 0
    %1552 = vmatpush1.bf16.msra.mxu0 0
    %1553 = vmatprep.subr.bf16.mxu0 0
    %1554 = vmatpush1.bf16.msra.mxu0 0
    %1555 = vmatprep.subr.bf16.mxu0 0
    %1556 = vmatpush1.bf16.msra.mxu0 0
    %1557 = vmatprep.subr.bf16.mxu0 0
    %1558 = vmatpush1.bf16.msra.mxu0 0
    %1559 = vmatprep.subr.bf16.mxu0 0
    %1560 = vmatpush1.bf16.msra.mxu0 0
    %1561 = vmatprep.subr.bf16.mxu0 0
    %1562 = vmatpush1.bf16.msra.mxu0 0
    %1563 = vmatprep.subr.bf16.mxu0 0
    %1564 = vmatpush1.bf16.msra.mxu0 0
    %1565 = vmatprep.subr.bf16.mxu0 0
    %1566 = vmatpush1.bf16.msra.mxu0 0
    %1567 = vmatprep.subr.bf16.mxu0 0
    %1568 = vmatpush1.bf16.msra.mxu0 0
    %1569 = vmatprep.subr.bf16.mxu0 0
    %1570 = vmatpush1.bf16.msra.mxu0 0
    %1571 = vmatprep.subr.bf16.mxu0 0
    %1572 = vmatpush1.bf16.msra.mxu0 0
    %1573 = vmatprep.mubr.bf16.mxu0 0
    %1574 = vmatmul.mubr.bf16.gmra.mrb[0].mxu0 %v1536
    %v1575 = vpop.f32.mrb[0].mxu0
    %v1576 = vadd.f32 0.0, %v1575
    %v1577 = vpop.f32.mrb[0].mxu0
    %v1578 = vpop.f32.mrb[0].mxu0
    %v1579 = vpop.f32.mrb[0].mxu0
    %1580 = vdwg.mxu0
    %1581 = vrot.lane.b32.xlu0 %v738, 64
    %v1582 = vpop.permute.xlu0 %1581
    %v1584 = vsel %vm742, %v1243, 0
    %v1587 = vsel %vm1249, %v1582, 0
    %1589 = vmatprep.subr.bf16.mxu0 0
    %1590 = vmatpush1.bf16.msra.mxu0 %v1587
    %1591 = vmatprep.subr.bf16.mxu0 0
    %1592 = vmatpush1.bf16.msra.mxu0 0
    %1593 = vmatprep.subr.bf16.mxu0 0
    %1594 = vmatpush1.bf16.msra.mxu0 0
    %1595 = vmatprep.subr.bf16.mxu0 0
    %1596 = vmatpush1.bf16.msra.mxu0 0
    %1597 = vmatprep.subr.bf16.mxu0 0
    %1598 = vmatpush1.bf16.msra.mxu0 0
    %1599 = vmatprep.subr.bf16.mxu0 0
    %1600 = vmatpush1.bf16.msra.mxu0 0
    %1601 = vmatprep.subr.bf16.mxu0 0
    %1602 = vmatpush1.bf16.msra.mxu0 0
    %1603 = vmatprep.subr.bf16.mxu0 0
    %1604 = vmatpush1.bf16.msra.mxu0 0
    %1605 = vmatprep.subr.bf16.mxu0 0
    %1606 = vmatpush1.bf16.msra.mxu0 0
    %1607 = vmatprep.subr.bf16.mxu0 0
    %1608 = vmatpush1.bf16.msra.mxu0 0
    %1609 = vmatprep.subr.bf16.mxu0 0
    %1610 = vmatpush1.bf16.msra.mxu0 0
    %1611 = vmatprep.subr.bf16.mxu0 0
    %1612 = vmatpush1.bf16.msra.mxu0 0
    %1613 = vmatprep.subr.bf16.mxu0 0
    %1614 = vmatpush1.bf16.msra.mxu0 0
    %1615 = vmatprep.subr.bf16.mxu0 0
    %1616 = vmatpush1.bf16.msra.mxu0 0
    %1617 = vmatprep.subr.bf16.mxu0 0
    %1618 = vmatpush1.bf16.msra.mxu0 0
    %1619 = vmatprep.subr.bf16.mxu0 0
    %1620 = vmatpush1.bf16.msra.mxu0 0
    %1621 = vmatprep.mubr.bf16.mxu0 0
    %1622 = vmatmul.mubr.bf16.gmra.mrb[0].mxu0 %v1584
    %v1623 = vpop.f32.mrb[0].mxu0
    %v1624 = vadd.f32 0.0, %v1623
    %v1625 = vpop.f32.mrb[0].mxu0
    %v1626 = vpop.f32.mrb[0].mxu0
    %v1627 = vpop.f32.mrb[0].mxu0
    %1628 = vdwg.mxu0
    %1631 = vrot.lane.b32.xlu0 %v1384, 8
    %v1632 = vpop.permute.xlu0 %1631
    %1633 = vrot.lane.b32.xlu0 %v1432, 8
    %v1634 = vpop.permute.xlu0 %1633
    %1639 = vrot.lane.b32.xlu0 %v1480, 16
    %v1640 = vpop.permute.xlu0 %1639
    %1641 = vrot.lane.b32.xlu0 %v1528, 16
    %v1642 = vpop.permute.xlu0 %1641
    %1647 = vrot.lane.b32.xlu0 %v1576, 24
    %v1648 = vpop.permute.xlu0 %1647
    %1649 = vrot.lane.b32.xlu0 %v1624, 24
    %v1650 = vpop.permute.xlu0 %1649
    %v1653 = vsel %vm742, %v1288, %v1632
    %v1654 = vsel %vm742, %v1336, %v1634
    %vm1655 = vcmask 130048
    %v1656 = vsel %vm1655, %v1653, %v1640
    %v1657 = vsel %vm1655, %v1654, %v1642
    %vm1658 = vcmask 195584
    %v1659 = vsel %vm1658, %v1656, %v1648
    %v1660 = vsel %vm1658, %v1657, %v1650
    %v1661 = vadd.f32 %v1659, %v619
    %v1662 = vadd.f32 %v1660, %v625
    %v1663 = vsel %vm666, %v1661, 0.0
    %1664 = vadd.xlane.f32.xlu0 %v1663
    %v1665 = vpop.xlane.xlu0 %1664
    %v1666 = vsel %vm666, %v1662, 0.0
    %1667 = vadd.xlane.f32.xlu0 %v1666
    %v1668 = vpop.xlane.xlu0 %1667
    %v1669 = vrcp.pop 32.0
    %v1670 = vmul.f32 %v1665, %v1669
    %v1671 = vmul.f32 %v1668, %v1669
    %v1672 = vsub.f32 %v1661, %v1670
    %v1673 = vsub.f32 %v1662, %v1671
    %v1674 = vmul.f32 %v1672, %v1672
    %v1675 = vmul.f32 %v1673, %v1673
    %v1676 = vsel %vm666, %v1674, 0.0
    %1677 = vadd.xlane.f32.xlu0 %v1676
    %v1678 = vpop.xlane.xlu0 %1677
    %v1679 = vsel %vm666, %v1675, 0.0
    %1680 = vadd.xlane.f32.xlu0 %v1679
    %v1681 = vpop.xlane.xlu0 %1680
    %v1682 = vmul.f32 %v1678, %v1669
    %v1683 = vmul.f32 %v1681, %v1669
    %v1684 = vadd.f32 %v1682, 1e-05
    %v1685 = vadd.f32 %v1683, 1e-05
    %v1686 = vrsqrt.pop %v1684
    %v1687 = vrsqrt.pop %v1685
    %v1688 = vmul.f32 %v1672, %v1686
    %v1689 = vmul.f32 %v1673, %v1687
    %v1690 = vlaneseq
    %v1691 = vshrl.u32 %v1690, 7
    %v1692 = vsub.s32 1, %v1691
    %v1693 = vrot.slane %v644, %v1692
    %v1694 = vmul.f32 %v1688, %v1693
    %v1695 = vmul.f32 %v1689, %v1693
    %v1696 = vlaneseq
    %v1697 = vshrl.u32 %v1696, 7
    %v1698 = vsub.s32 2, %v1697
    %v1699 = vrot.slane %v644, %v1698
    %v1700 = vadd.f32 %v1694, %v1699
    %v1701 = vadd.f32 %v1695, %v1699
    %v1702 = vpack.c.bf16 %v1701, %v1700
    %v1703 = vld [vmem:[%s4] sm:$0xf]
    %v1704 = vld [vmem:[%s4 + $0x4] sm:$0xf]
    %v1705 = vld [vmem:[%s4 + $0x8] sm:$0xf]
    %v1706 = vld [vmem:[%s4 + $0xc] sm:$0xf]
    %v1707 = vlaneseq
    %v1708 = vshrl.u32 %v1707, 7
    %v1709 = vsub.s32 3, %v1708
    %v1710 = vrot.slane %v644, %v1709
    %v1715 = vunpack.c.l.b16 %v1703
    %v1716 = vunpack.c.l.b16 %v1704
    %v1717 = vunpack.c.l.b16 %v1705
    %v1718 = vunpack.c.l.b16 %v1706
    %v1719 = vpack.c.b16 %v1716, %v1715
    %v1720 = vpack.c.b16 %v1718, %v1717
    %v1724 = vsel %vm666, %v1702, 0
    %1726 = vmatprep.subr.bf16.mxu0 0
    %1727 = vmatpush1.bf16.msra.mxu0 %v1719
    %1728 = vmatprep.subr.bf16.mxu0 0
    %1729 = vmatpush1.bf16.msra.mxu0 %v1720
    %1730 = vmatprep.subr.bf16.mxu0 0
    %1731 = vmatpush1.bf16.msra.mxu0 0
    %1732 = vmatprep.subr.bf16.mxu0 0
    %1733 = vmatpush1.bf16.msra.mxu0 0
    %1734 = vmatprep.subr.bf16.mxu0 0
    %1735 = vmatpush1.bf16.msra.mxu0 0
    %1736 = vmatprep.subr.bf16.mxu0 0
    %1737 = vmatpush1.bf16.msra.mxu0 0
    %1738 = vmatprep.subr.bf16.mxu0 0
    %1739 = vmatpush1.bf16.msra.mxu0 0
    %1740 = vmatprep.subr.bf16.mxu0 0
    %1741 = vmatpush1.bf16.msra.mxu0 0
    %1742 = vmatprep.subr.bf16.mxu0 0
    %1743 = vmatpush1.bf16.msra.mxu0 0
    %1744 = vmatprep.subr.bf16.mxu0 0
    %1745 = vmatpush1.bf16.msra.mxu0 0
    %1746 = vmatprep.subr.bf16.mxu0 0
    %1747 = vmatpush1.bf16.msra.mxu0 0
    %1748 = vmatprep.subr.bf16.mxu0 0
    %1749 = vmatpush1.bf16.msra.mxu0 0
    %1750 = vmatprep.subr.bf16.mxu0 0
    %1751 = vmatpush1.bf16.msra.mxu0 0
    %1752 = vmatprep.subr.bf16.mxu0 0
    %1753 = vmatpush1.bf16.msra.mxu0 0
    %1754 = vmatprep.subr.bf16.mxu0 0
    %1755 = vmatpush1.bf16.msra.mxu0 0
    %1756 = vmatprep.subr.bf16.mxu0 0
    %1757 = vmatpush1.bf16.msra.mxu0 0
    %1758 = vmatprep.mubr.bf16.mxu0 0
    %1759 = vmatmul.mubr.bf16.gmra.mrb[0].mxu0 %v1724
    %v1760 = vpop.f32.mrb[0].mxu0
    %v1761 = vadd.f32 %v1710, %v1760
    %v1762 = vpop.f32.mrb[0].mxu0
    %v1763 = vpop.f32.mrb[0].mxu0
    %v1764 = vadd.f32 %v1710, %v1763
    %v1765 = vpop.f32.mrb[0].mxu0
    %1766 = vdwg.mxu0
    %v1767 = vmax.f32 %v1761, 0.0
    %v1768 = vmax.f32 %v1764, 0.0
    %v1769 = vpack.c.bf16 %v1768, %v1767
    %v1770 = vld [vmem:[%s5] sm:$0xf]
    %v1771 = vld [vmem:[%s5 + $0x4] sm:$0xf]
    %v1772 = vld [vmem:[%s5 + $0x8] sm:$0xf]
    %v1773 = vld [vmem:[%s5 + $0xc] sm:$0xf]
    %v1774 = vld [vmem:[%s5 + $0x10] sm:$0xf]
    %v1775 = vld [vmem:[%s5 + $0x14] sm:$0xf]
    %v1776 = vld [vmem:[%s5 + $0x18] sm:$0xf]
    %v1777 = vld [vmem:[%s5 + $0x1c] sm:$0xf]
    %v1778 = vlaneseq
    %v1779 = vshrl.u32 %v1778, 7
    %v1780 = vsub.s32 4, %v1779
    %v1781 = vrot.slane %v644, %v1780
    %v1790 = vunpack.c.l.b16 %v1770
    %v1791 = vunpack.c.l.b16 %v1771
    %v1792 = vunpack.c.l.b16 %v1772
    %v1793 = vunpack.c.l.b16 %v1773
    %v1794 = vunpack.c.l.b16 %v1774
    %v1795 = vunpack.c.l.b16 %v1775
    %v1796 = vunpack.c.l.b16 %v1776
    %v1797 = vunpack.c.l.b16 %v1777
    %v1798 = vpack.c.b16 %v1791, %v1790
    %v1799 = vpack.c.b16 %v1793, %v1792
    %v1800 = vpack.c.b16 %v1795, %v1794
    %v1801 = vpack.c.b16 %v1797, %v1796
    %vm1806 = vcmask 523264
    %v1808 = vsel %vm1806, %v1769, 0
    %1810 = vmatprep.subr.bf16.mxu0 0
    %1811 = vmatpush1.bf16.msra.mxu0 %v1798
    %1812 = vmatprep.subr.bf16.mxu0 0
    %1813 = vmatpush1.bf16.msra.mxu0 %v1799
    %1814 = vmatprep.subr.bf16.mxu0 0
    %1815 = vmatpush1.bf16.msra.mxu0 %v1800
    %1816 = vmatprep.subr.bf16.mxu0 0
    %1817 = vmatpush1.bf16.msra.mxu0 %v1801
    %1818 = vmatprep.subr.bf16.mxu0 0
    %1819 = vmatpush1.bf16.msra.mxu0 0
    %1820 = vmatprep.subr.bf16.mxu0 0
    %1821 = vmatpush1.bf16.msra.mxu0 0
    %1822 = vmatprep.subr.bf16.mxu0 0
    %1823 = vmatpush1.bf16.msra.mxu0 0
    %1824 = vmatprep.subr.bf16.mxu0 0
    %1825 = vmatpush1.bf16.msra.mxu0 0
    %1826 = vmatprep.subr.bf16.mxu0 0
    %1827 = vmatpush1.bf16.msra.mxu0 0
    %1828 = vmatprep.subr.bf16.mxu0 0
    %1829 = vmatpush1.bf16.msra.mxu0 0
    %1830 = vmatprep.subr.bf16.mxu0 0
    %1831 = vmatpush1.bf16.msra.mxu0 0
    %1832 = vmatprep.subr.bf16.mxu0 0
    %1833 = vmatpush1.bf16.msra.mxu0 0
    %1834 = vmatprep.subr.bf16.mxu0 0
    %1835 = vmatpush1.bf16.msra.mxu0 0
    %1836 = vmatprep.subr.bf16.mxu0 0
    %1837 = vmatpush1.bf16.msra.mxu0 0
    %1838 = vmatprep.subr.bf16.mxu0 0
    %1839 = vmatpush1.bf16.msra.mxu0 0
    %1840 = vmatprep.subr.bf16.mxu0 0
    %1841 = vmatpush1.bf16.msra.mxu0 0
    %1842 = vmatprep.mubr.bf16.mxu0 0
    %1843 = vmatmul.mubr.bf16.gmra.mrb[0].mxu0 %v1808
    %v1844 = vpop.f32.mrb[0].mxu0
    %v1845 = vadd.f32 %v1781, %v1844
    %v1846 = vpop.f32.mrb[0].mxu0
    %v1847 = vpop.f32.mrb[0].mxu0
    %v1848 = vadd.f32 %v1781, %v1847
    %v1849 = vpop.f32.mrb[0].mxu0
    %1850 = vdwg.mxu0
    %v1851 = vadd.f32 %v1845, %v1700
    %v1852 = vadd.f32 %v1848, %v1701
    %v1853 = vsel %vm666, %v1851, 0.0
    %1854 = vadd.xlane.f32.xlu0 %v1853
    %v1855 = vpop.xlane.xlu0 %1854
    %v1856 = vsel %vm666, %v1852, 0.0
    %1857 = vadd.xlane.f32.xlu0 %v1856
    %v1858 = vpop.xlane.xlu0 %1857
    %v1859 = vmul.f32 %v1855, %v1669
    %v1860 = vmul.f32 %v1858, %v1669
    %v1861 = vsub.f32 %v1851, %v1859
    %v1862 = vsub.f32 %v1852, %v1860
    %v1863 = vmul.f32 %v1861, %v1861
    %v1864 = vmul.f32 %v1862, %v1862
    %v1865 = vsel %vm666, %v1863, 0.0
    %1866 = vadd.xlane.f32.xlu0 %v1865
    %v1867 = vpop.xlane.xlu0 %1866
    %v1868 = vsel %vm666, %v1864, 0.0
    %1869 = vadd.xlane.f32.xlu0 %v1868
    %v1870 = vpop.xlane.xlu0 %1869
    %v1871 = vmul.f32 %v1867, %v1669
    %v1872 = vmul.f32 %v1870, %v1669
    %v1873 = vadd.f32 %v1871, 1e-05
    %v1874 = vadd.f32 %v1872, 1e-05
    %v1875 = vrsqrt.pop %v1873
    %v1876 = vrsqrt.pop %v1874
    %v1877 = vmul.f32 %v1861, %v1875
    %v1878 = vmul.f32 %v1862, %v1876
    %v1879 = vlaneseq
    %v1880 = vshrl.u32 %v1879, 7
    %v1881 = vsub.s32 5, %v1880
    %v1882 = vrot.slane %v644, %v1881
    %v1883 = vmul.f32 %v1877, %v1882
    %v1884 = vmul.f32 %v1878, %v1882
    %v1885 = vlaneseq
    %v1886 = vshrl.u32 %v1885, 7
    %v1887 = vsub.s32 6, %v1886
    %v1888 = vrot.slane %v644, %v1887
    %v1889 = vadd.f32 %v1883, %v1888
    %v1890 = vadd.f32 %v1884, %v1888
    %s1891 = scalar_lea.vmem %s6, 8
    %v1892 = vld [vmem:[%s1891] sm:$0xff]
    %v1893 = vpack.c.bf16 %v1890, %v1889
    %s1894 = scalar_lea.vmem %s3, 16
    %v1895 = vld [vmem:[%s1894] sm:$0xf]
    %v1896 = vld [vmem:[%s1894 + $0x4] sm:$0xf]
    %v1897 = vld [vmem:[%s1894 + $0x8] sm:$0xf]
    %v1898 = vld [vmem:[%s1894 + $0xc] sm:$0xf]
    %v1899 = vlaneseq
    %v1900 = vshrl.u32 %v1899, 7
    %v1901 = vsub.s32 0, %v1900
    %v1902 = vrot.slane %v1892, %v1901
    %v1907 = vunpack.c.l.b16 %v1895
    %v1908 = vunpack.c.l.b16 %v1896
    %v1909 = vunpack.c.l.b16 %v1897
    %v1910 = vunpack.c.l.b16 %v1898
    %v1911 = vpack.c.b16 %v1908, %v1907
    %v1912 = vpack.c.b16 %v1910, %v1909
    %v1916 = vsel %vm666, %v1893, 0
    %1918 = vmatprep.subr.bf16.mxu0 0
    %1919 = vmatpush1.bf16.msra.mxu0 %v1911
    %1920 = vmatprep.subr.bf16.mxu0 0
    %1921 = vmatpush1.bf16.msra.mxu0 %v1912
    %1922 = vmatprep.subr.bf16.mxu0 0
    %1923 = vmatpush1.bf16.msra.mxu0 0
    %1924 = vmatprep.subr.bf16.mxu0 0
    %1925 = vmatpush1.bf16.msra.mxu0 0
    %1926 = vmatprep.subr.bf16.mxu0 0
    %1927 = vmatpush1.bf16.msra.mxu0 0
    %1928 = vmatprep.subr.bf16.mxu0 0
    %1929 = vmatpush1.bf16.msra.mxu0 0
    %1930 = vmatprep.subr.bf16.mxu0 0
    %1931 = vmatpush1.bf16.msra.mxu0 0
    %1932 = vmatprep.subr.bf16.mxu0 0
    %1933 = vmatpush1.bf16.msra.mxu0 0
    %1934 = vmatprep.subr.bf16.mxu0 0
    %1935 = vmatpush1.bf16.msra.mxu0 0
    %1936 = vmatprep.subr.bf16.mxu0 0
    %1937 = vmatpush1.bf16.msra.mxu0 0
    %1938 = vmatprep.subr.bf16.mxu0 0
    %1939 = vmatpush1.bf16.msra.mxu0 0
    %1940 = vmatprep.subr.bf16.mxu0 0
    %1941 = vmatpush1.bf16.msra.mxu0 0
    %1942 = vmatprep.subr.bf16.mxu0 0
    %1943 = vmatpush1.bf16.msra.mxu0 0
    %1944 = vmatprep.subr.bf16.mxu0 0
    %1945 = vmatpush1.bf16.msra.mxu0 0
    %1946 = vmatprep.subr.bf16.mxu0 0
    %1947 = vmatpush1.bf16.msra.mxu0 0
    %1948 = vmatprep.subr.bf16.mxu0 0
    %1949 = vmatpush1.bf16.msra.mxu0 0
    %1950 = vmatprep.mubr.bf16.mxu0 0
    %1951 = vmatmul.mubr.bf16.gmra.mrb[0].mxu0 %v1916
    %v1952 = vpop.f32.mrb[0].mxu0
    %v1953 = vadd.f32 %v1902, %v1952
    %v1954 = vpop.f32.mrb[0].mxu0
    %v1955 = vpop.f32.mrb[0].mxu0
    %v1956 = vadd.f32 %v1902, %v1955
    %v1957 = vpop.f32.mrb[0].mxu0
    %1958 = vdwg.mxu0
    %1961 = vrot.lane.b32.xlu0 %v1953, 120
    %v1962 = vpop.permute.xlu0 %1961
    %1963 = vrot.lane.b32.xlu0 %v1956, 120
    %v1964 = vpop.permute.xlu0 %1963
    %1967 = vrot.lane.b32.xlu0 %v1953, 112
    %v1968 = vpop.permute.xlu0 %1967
    %1969 = vrot.lane.b32.xlu0 %v1956, 112
    %v1970 = vpop.permute.xlu0 %1969
    %1973 = vrot.lane.b32.xlu0 %v1953, 104
    %v1974 = vpop.permute.xlu0 %1973
    %1975 = vrot.lane.b32.xlu0 %v1956, 104
    %v1976 = vpop.permute.xlu0 %1975
    %v1979 = vpack.c.bf16 %v1953, %v1953
    %v1980 = vpack.c.bf16 %v1956, %v1956
    %v1981 = vpack.c.bf16 %v1962, %v1962
    %v1982 = vpack.c.bf16 %v1964, %v1964
    %v1983 = vpack.c.bf16 %v1968, %v1968
    %v1984 = vpack.c.bf16 %v1970, %v1970
    %v1985 = vpack.c.bf16 %v1974, %v1974
    %v1986 = vpack.c.bf16 %v1976, %v1976
    %1988 = vrot.lane.b32.xlu0 %v1979, 96
    %v1989 = vpop.permute.xlu0 %1988
    %v1991 = vsel %vm742, %v1979, 0
    %v1994 = vsel %vm742, %v1989, 0
    %1996 = vmatprep.subr.bf16.mxu0 0
    %1997 = vmatpush1.bf16.xpose.msra.mxu0 %v1994
    %1998 = vmatprep.subr.bf16.mxu0 0
    %1999 = vmatpush1.bf16.xpose.msra.mxu0 0
    %2000 = vmatprep.subr.bf16.mxu0 0
    %2001 = vmatpush1.bf16.xpose.msra.mxu0 0
    %2002 = vmatprep.subr.bf16.mxu0 0
    %2003 = vmatpush1.bf16.xpose.msra.mxu0 0
    %2004 = vmatprep.subr.bf16.mxu0 0
    %2005 = vmatpush1.bf16.xpose.msra.mxu0 0
    %2006 = vmatprep.subr.bf16.mxu0 0
    %2007 = vmatpush1.bf16.xpose.msra.mxu0 0
    %2008 = vmatprep.subr.bf16.mxu0 0
    %2009 = vmatpush1.bf16.xpose.msra.mxu0 0
    %2010 = vmatprep.subr.bf16.mxu0 0
    %2011 = vmatpush1.bf16.xpose.msra.mxu0 0
    %2012 = vmatprep.subr.bf16.mxu0 0
    %2013 = vmatpush1.bf16.xpose.msra.mxu0 0
    %2014 = vmatprep.subr.bf16.mxu0 0
    %2015 = vmatpush1.bf16.xpose.msra.mxu0 0
    %2016 = vmatprep.subr.bf16.mxu0 0
    %2017 = vmatpush1.bf16.xpose.msra.mxu0 0
    %2018 = vmatprep.subr.bf16.mxu0 0
    %2019 = vmatpush1.bf16.xpose.msra.mxu0 0
    %2020 = vmatprep.subr.bf16.mxu0 0
    %2021 = vmatpush1.bf16.xpose.msra.mxu0 0
    %2022 = vmatprep.subr.bf16.mxu0 0
    %2023 = vmatpush1.bf16.xpose.msra.mxu0 0
    %2024 = vmatprep.subr.bf16.mxu0 0
    %2025 = vmatpush1.bf16.xpose.msra.mxu0 0
    %2026 = vmatprep.subr.bf16.mxu0 0
    %2027 = vmatpush1.bf16.xpose.msra.mxu0 0
    %2028 = vmatprep.mubr.bf16.mxu0 0
    %2029 = vmatmul.mubr.bf16.gmra.mrb[0].mxu0 %v1991
    %v2030 = vpop.f32.mrb[0].mxu0
    %v2031 = vadd.f32 0.0, %v2030
    %v2032 = vpop.f32.mrb[0].mxu0
    %v2033 = vpop.f32.mrb[0].mxu0
    %v2034 = vpop.f32.mrb[0].mxu0
    %2035 = vdwg.mxu0
    %2037 = vrot.lane.b32.xlu0 %v1980, 96
    %v2038 = vpop.permute.xlu0 %2037
    %v2040 = vsel %vm742, %v1980, 0
    %v2043 = vsel %vm742, %v2038, 0
    %2045 = vmatprep.subr.bf16.mxu0 0
    %2046 = vmatpush1.bf16.xpose.msra.mxu0 %v2043
    %2047 = vmatprep.subr.bf16.mxu0 0
    %2048 = vmatpush1.bf16.xpose.msra.mxu0 0
    %2049 = vmatprep.subr.bf16.mxu0 0
    %2050 = vmatpush1.bf16.xpose.msra.mxu0 0
    %2051 = vmatprep.subr.bf16.mxu0 0
    %2052 = vmatpush1.bf16.xpose.msra.mxu0 0
    %2053 = vmatprep.subr.bf16.mxu0 0
    %2054 = vmatpush1.bf16.xpose.msra.mxu0 0
    %2055 = vmatprep.subr.bf16.mxu0 0
    %2056 = vmatpush1.bf16.xpose.msra.mxu0 0
    %2057 = vmatprep.subr.bf16.mxu0 0
    %2058 = vmatpush1.bf16.xpose.msra.mxu0 0
    %2059 = vmatprep.subr.bf16.mxu0 0
    %2060 = vmatpush1.bf16.xpose.msra.mxu0 0
    %2061 = vmatprep.subr.bf16.mxu0 0
    %2062 = vmatpush1.bf16.xpose.msra.mxu0 0
    %2063 = vmatprep.subr.bf16.mxu0 0
    %2064 = vmatpush1.bf16.xpose.msra.mxu0 0
    %2065 = vmatprep.subr.bf16.mxu0 0
    %2066 = vmatpush1.bf16.xpose.msra.mxu0 0
    %2067 = vmatprep.subr.bf16.mxu0 0
    %2068 = vmatpush1.bf16.xpose.msra.mxu0 0
    %2069 = vmatprep.subr.bf16.mxu0 0
    %2070 = vmatpush1.bf16.xpose.msra.mxu0 0
    %2071 = vmatprep.subr.bf16.mxu0 0
    %2072 = vmatpush1.bf16.xpose.msra.mxu0 0
    %2073 = vmatprep.subr.bf16.mxu0 0
    %2074 = vmatpush1.bf16.xpose.msra.mxu0 0
    %2075 = vmatprep.subr.bf16.mxu0 0
    %2076 = vmatpush1.bf16.xpose.msra.mxu0 0
    %2077 = vmatprep.mubr.bf16.mxu0 0
    %2078 = vmatmul.mubr.bf16.gmra.mrb[0].mxu0 %v2040
    %v2079 = vpop.f32.mrb[0].mxu0
    %v2080 = vadd.f32 0.0, %v2079
    %v2081 = vpop.f32.mrb[0].mxu0
    %v2082 = vpop.f32.mrb[0].mxu0
    %v2083 = vpop.f32.mrb[0].mxu0
    %2084 = vdwg.mxu0
    %2086 = vrot.lane.b32.xlu0 %v1981, 96
    %v2087 = vpop.permute.xlu0 %2086
    %v2089 = vsel %vm742, %v1981, 0
    %v2092 = vsel %vm742, %v2087, 0
    %2094 = vmatprep.subr.bf16.mxu0 0
    %2095 = vmatpush1.bf16.xpose.msra.mxu0 %v2092
    %2096 = vmatprep.subr.bf16.mxu0 0
    %2097 = vmatpush1.bf16.xpose.msra.mxu0 0
    %2098 = vmatprep.subr.bf16.mxu0 0
    %2099 = vmatpush1.bf16.xpose.msra.mxu0 0
    %2100 = vmatprep.subr.bf16.mxu0 0
    %2101 = vmatpush1.bf16.xpose.msra.mxu0 0
    %2102 = vmatprep.subr.bf16.mxu0 0
    %2103 = vmatpush1.bf16.xpose.msra.mxu0 0
    %2104 = vmatprep.subr.bf16.mxu0 0
    %2105 = vmatpush1.bf16.xpose.msra.mxu0 0
    %2106 = vmatprep.subr.bf16.mxu0 0
    %2107 = vmatpush1.bf16.xpose.msra.mxu0 0
    %2108 = vmatprep.subr.bf16.mxu0 0
    %2109 = vmatpush1.bf16.xpose.msra.mxu0 0
    %2110 = vmatprep.subr.bf16.mxu0 0
    %2111 = vmatpush1.bf16.xpose.msra.mxu0 0
    %2112 = vmatprep.subr.bf16.mxu0 0
    %2113 = vmatpush1.bf16.xpose.msra.mxu0 0
    %2114 = vmatprep.subr.bf16.mxu0 0
    %2115 = vmatpush1.bf16.xpose.msra.mxu0 0
    %2116 = vmatprep.subr.bf16.mxu0 0
    %2117 = vmatpush1.bf16.xpose.msra.mxu0 0
    %2118 = vmatprep.subr.bf16.mxu0 0
    %2119 = vmatpush1.bf16.xpose.msra.mxu0 0
    %2120 = vmatprep.subr.bf16.mxu0 0
    %2121 = vmatpush1.bf16.xpose.msra.mxu0 0
    %2122 = vmatprep.subr.bf16.mxu0 0
    %2123 = vmatpush1.bf16.xpose.msra.mxu0 0
    %2124 = vmatprep.subr.bf16.mxu0 0
    %2125 = vmatpush1.bf16.xpose.msra.mxu0 0
    %2126 = vmatprep.mubr.bf16.mxu0 0
    %2127 = vmatmul.mubr.bf16.gmra.mrb[0].mxu0 %v2089
    %v2128 = vpop.f32.mrb[0].mxu0
    %v2129 = vadd.f32 0.0, %v2128
    %v2130 = vpop.f32.mrb[0].mxu0
    %v2131 = vpop.f32.mrb[0].mxu0
    %v2132 = vpop.f32.mrb[0].mxu0
    %2133 = vdwg.mxu0
    %2135 = vrot.lane.b32.xlu0 %v1982, 96
    %v2136 = vpop.permute.xlu0 %2135
    %v2138 = vsel %vm742, %v1982, 0
    %v2141 = vsel %vm742, %v2136, 0
    %2143 = vmatprep.subr.bf16.mxu0 0
    %2144 = vmatpush1.bf16.xpose.msra.mxu0 %v2141
    %2145 = vmatprep.subr.bf16.mxu0 0
    %2146 = vmatpush1.bf16.xpose.msra.mxu0 0
    %2147 = vmatprep.subr.bf16.mxu0 0
    %2148 = vmatpush1.bf16.xpose.msra.mxu0 0
    %2149 = vmatprep.subr.bf16.mxu0 0
    %2150 = vmatpush1.bf16.xpose.msra.mxu0 0
    %2151 = vmatprep.subr.bf16.mxu0 0
    %2152 = vmatpush1.bf16.xpose.msra.mxu0 0
    %2153 = vmatprep.subr.bf16.mxu0 0
    %2154 = vmatpush1.bf16.xpose.msra.mxu0 0
    %2155 = vmatprep.subr.bf16.mxu0 0
    %2156 = vmatpush1.bf16.xpose.msra.mxu0 0
    %2157 = vmatprep.subr.bf16.mxu0 0
    %2158 = vmatpush1.bf16.xpose.msra.mxu0 0
    %2159 = vmatprep.subr.bf16.mxu0 0
    %2160 = vmatpush1.bf16.xpose.msra.mxu0 0
    %2161 = vmatprep.subr.bf16.mxu0 0
    %2162 = vmatpush1.bf16.xpose.msra.mxu0 0
    %2163 = vmatprep.subr.bf16.mxu0 0
    %2164 = vmatpush1.bf16.xpose.msra.mxu0 0
    %2165 = vmatprep.subr.bf16.mxu0 0
    %2166 = vmatpush1.bf16.xpose.msra.mxu0 0
    %2167 = vmatprep.subr.bf16.mxu0 0
    %2168 = vmatpush1.bf16.xpose.msra.mxu0 0
    %2169 = vmatprep.subr.bf16.mxu0 0
    %2170 = vmatpush1.bf16.xpose.msra.mxu0 0
    %2171 = vmatprep.subr.bf16.mxu0 0
    %2172 = vmatpush1.bf16.xpose.msra.mxu0 0
    %2173 = vmatprep.subr.bf16.mxu0 0
    %2174 = vmatpush1.bf16.xpose.msra.mxu0 0
    %2175 = vmatprep.mubr.bf16.mxu0 0
    %2176 = vmatmul.mubr.bf16.gmra.mrb[0].mxu0 %v2138
    %v2177 = vpop.f32.mrb[0].mxu0
    %v2178 = vadd.f32 0.0, %v2177
    %v2179 = vpop.f32.mrb[0].mxu0
    %v2180 = vpop.f32.mrb[0].mxu0
    %v2181 = vpop.f32.mrb[0].mxu0
    %2182 = vdwg.mxu0
    %2184 = vrot.lane.b32.xlu0 %v1983, 96
    %v2185 = vpop.permute.xlu0 %2184
    %v2187 = vsel %vm742, %v1983, 0
    %v2190 = vsel %vm742, %v2185, 0
    %2192 = vmatprep.subr.bf16.mxu0 0
    %2193 = vmatpush1.bf16.xpose.msra.mxu0 %v2190
    %2194 = vmatprep.subr.bf16.mxu0 0
    %2195 = vmatpush1.bf16.xpose.msra.mxu0 0
    %2196 = vmatprep.subr.bf16.mxu0 0
    %2197 = vmatpush1.bf16.xpose.msra.mxu0 0
    %2198 = vmatprep.subr.bf16.mxu0 0
    %2199 = vmatpush1.bf16.xpose.msra.mxu0 0
    %2200 = vmatprep.subr.bf16.mxu0 0
    %2201 = vmatpush1.bf16.xpose.msra.mxu0 0
    %2202 = vmatprep.subr.bf16.mxu0 0
    %2203 = vmatpush1.bf16.xpose.msra.mxu0 0
    %2204 = vmatprep.subr.bf16.mxu0 0
    %2205 = vmatpush1.bf16.xpose.msra.mxu0 0
    %2206 = vmatprep.subr.bf16.mxu0 0
    %2207 = vmatpush1.bf16.xpose.msra.mxu0 0
    %2208 = vmatprep.subr.bf16.mxu0 0
    %2209 = vmatpush1.bf16.xpose.msra.mxu0 0
    %2210 = vmatprep.subr.bf16.mxu0 0
    %2211 = vmatpush1.bf16.xpose.msra.mxu0 0
    %2212 = vmatprep.subr.bf16.mxu0 0
    %2213 = vmatpush1.bf16.xpose.msra.mxu0 0
    %2214 = vmatprep.subr.bf16.mxu0 0
    %2215 = vmatpush1.bf16.xpose.msra.mxu0 0
    %2216 = vmatprep.subr.bf16.mxu0 0
    %2217 = vmatpush1.bf16.xpose.msra.mxu0 0
    %2218 = vmatprep.subr.bf16.mxu0 0
    %2219 = vmatpush1.bf16.xpose.msra.mxu0 0
    %2220 = vmatprep.subr.bf16.mxu0 0
    %2221 = vmatpush1.bf16.xpose.msra.mxu0 0
    %2222 = vmatprep.subr.bf16.mxu0 0
    %2223 = vmatpush1.bf16.xpose.msra.mxu0 0
    %2224 = vmatprep.mubr.bf16.mxu0 0
    %2225 = vmatmul.mubr.bf16.gmra.mrb[0].mxu0 %v2187
    %v2226 = vpop.f32.mrb[0].mxu0
    %v2227 = vadd.f32 0.0, %v2226
    %v2228 = vpop.f32.mrb[0].mxu0
    %v2229 = vpop.f32.mrb[0].mxu0
    %v2230 = vpop.f32.mrb[0].mxu0
    %2231 = vdwg.mxu0
    %2233 = vrot.lane.b32.xlu0 %v1984, 96
    %v2234 = vpop.permute.xlu0 %2233
    %v2236 = vsel %vm742, %v1984, 0
    %v2239 = vsel %vm742, %v2234, 0
    %2241 = vmatprep.subr.bf16.mxu0 0
    %2242 = vmatpush1.bf16.xpose.msra.mxu0 %v2239
    %2243 = vmatprep.subr.bf16.mxu0 0
    %2244 = vmatpush1.bf16.xpose.msra.mxu0 0
    %2245 = vmatprep.subr.bf16.mxu0 0
    %2246 = vmatpush1.bf16.xpose.msra.mxu0 0
    %2247 = vmatprep.subr.bf16.mxu0 0
    %2248 = vmatpush1.bf16.xpose.msra.mxu0 0
    %2249 = vmatprep.subr.bf16.mxu0 0
    %2250 = vmatpush1.bf16.xpose.msra.mxu0 0
    %2251 = vmatprep.subr.bf16.mxu0 0
    %2252 = vmatpush1.bf16.xpose.msra.mxu0 0
    %2253 = vmatprep.subr.bf16.mxu0 0
    %2254 = vmatpush1.bf16.xpose.msra.mxu0 0
    %2255 = vmatprep.subr.bf16.mxu0 0
    %2256 = vmatpush1.bf16.xpose.msra.mxu0 0
    %2257 = vmatprep.subr.bf16.mxu0 0
    %2258 = vmatpush1.bf16.xpose.msra.mxu0 0
    %2259 = vmatprep.subr.bf16.mxu0 0
    %2260 = vmatpush1.bf16.xpose.msra.mxu0 0
    %2261 = vmatprep.subr.bf16.mxu0 0
    %2262 = vmatpush1.bf16.xpose.msra.mxu0 0
    %2263 = vmatprep.subr.bf16.mxu0 0
    %2264 = vmatpush1.bf16.xpose.msra.mxu0 0
    %2265 = vmatprep.subr.bf16.mxu0 0
    %2266 = vmatpush1.bf16.xpose.msra.mxu0 0
    %2267 = vmatprep.subr.bf16.mxu0 0
    %2268 = vmatpush1.bf16.xpose.msra.mxu0 0
    %2269 = vmatprep.subr.bf16.mxu0 0
    %2270 = vmatpush1.bf16.xpose.msra.mxu0 0
    %2271 = vmatprep.subr.bf16.mxu0 0
    %2272 = vmatpush1.bf16.xpose.msra.mxu0 0
    %2273 = vmatprep.mubr.bf16.mxu0 0
    %2274 = vmatmul.mubr.bf16.gmra.mrb[0].mxu0 %v2236
    %v2275 = vpop.f32.mrb[0].mxu0
    %v2276 = vadd.f32 0.0, %v2275
    %v2277 = vpop.f32.mrb[0].mxu0
    %v2278 = vpop.f32.mrb[0].mxu0
    %v2279 = vpop.f32.mrb[0].mxu0
    %2280 = vdwg.mxu0
    %2282 = vrot.lane.b32.xlu0 %v1985, 96
    %v2283 = vpop.permute.xlu0 %2282
    %v2285 = vsel %vm742, %v1985, 0
    %v2288 = vsel %vm742, %v2283, 0
    %2290 = vmatprep.subr.bf16.mxu0 0
    %2291 = vmatpush1.bf16.xpose.msra.mxu0 %v2288
    %2292 = vmatprep.subr.bf16.mxu0 0
    %2293 = vmatpush1.bf16.xpose.msra.mxu0 0
    %2294 = vmatprep.subr.bf16.mxu0 0
    %2295 = vmatpush1.bf16.xpose.msra.mxu0 0
    %2296 = vmatprep.subr.bf16.mxu0 0
    %2297 = vmatpush1.bf16.xpose.msra.mxu0 0
    %2298 = vmatprep.subr.bf16.mxu0 0
    %2299 = vmatpush1.bf16.xpose.msra.mxu0 0
    %2300 = vmatprep.subr.bf16.mxu0 0
    %2301 = vmatpush1.bf16.xpose.msra.mxu0 0
    %2302 = vmatprep.subr.bf16.mxu0 0
    %2303 = vmatpush1.bf16.xpose.msra.mxu0 0
    %2304 = vmatprep.subr.bf16.mxu0 0
    %2305 = vmatpush1.bf16.xpose.msra.mxu0 0
    %2306 = vmatprep.subr.bf16.mxu0 0
    %2307 = vmatpush1.bf16.xpose.msra.mxu0 0
    %2308 = vmatprep.subr.bf16.mxu0 0
    %2309 = vmatpush1.bf16.xpose.msra.mxu0 0
    %2310 = vmatprep.subr.bf16.mxu0 0
    %2311 = vmatpush1.bf16.xpose.msra.mxu0 0
    %2312 = vmatprep.subr.bf16.mxu0 0
    %2313 = vmatpush1.bf16.xpose.msra.mxu0 0
    %2314 = vmatprep.subr.bf16.mxu0 0
    %2315 = vmatpush1.bf16.xpose.msra.mxu0 0
    %2316 = vmatprep.subr.bf16.mxu0 0
    %2317 = vmatpush1.bf16.xpose.msra.mxu0 0
    %2318 = vmatprep.subr.bf16.mxu0 0
    %2319 = vmatpush1.bf16.xpose.msra.mxu0 0
    %2320 = vmatprep.subr.bf16.mxu0 0
    %2321 = vmatpush1.bf16.xpose.msra.mxu0 0
    %2322 = vmatprep.mubr.bf16.mxu0 0
    %2323 = vmatmul.mubr.bf16.gmra.mrb[0].mxu0 %v2285
    %v2324 = vpop.f32.mrb[0].mxu0
    %v2325 = vadd.f32 0.0, %v2324
    %v2326 = vpop.f32.mrb[0].mxu0
    %v2327 = vpop.f32.mrb[0].mxu0
    %v2328 = vpop.f32.mrb[0].mxu0
    %2329 = vdwg.mxu0
    %2331 = vrot.lane.b32.xlu0 %v1986, 96
    %v2332 = vpop.permute.xlu0 %2331
    %v2334 = vsel %vm742, %v1986, 0
    %v2337 = vsel %vm742, %v2332, 0
    %2339 = vmatprep.subr.bf16.mxu0 0
    %2340 = vmatpush1.bf16.xpose.msra.mxu0 %v2337
    %2341 = vmatprep.subr.bf16.mxu0 0
    %2342 = vmatpush1.bf16.xpose.msra.mxu0 0
    %2343 = vmatprep.subr.bf16.mxu0 0
    %2344 = vmatpush1.bf16.xpose.msra.mxu0 0
    %2345 = vmatprep.subr.bf16.mxu0 0
    %2346 = vmatpush1.bf16.xpose.msra.mxu0 0
    %2347 = vmatprep.subr.bf16.mxu0 0
    %2348 = vmatpush1.bf16.xpose.msra.mxu0 0
    %2349 = vmatprep.subr.bf16.mxu0 0
    %2350 = vmatpush1.bf16.xpose.msra.mxu0 0
    %2351 = vmatprep.subr.bf16.mxu0 0
    %2352 = vmatpush1.bf16.xpose.msra.mxu0 0
    %2353 = vmatprep.subr.bf16.mxu0 0
    %2354 = vmatpush1.bf16.xpose.msra.mxu0 0
    %2355 = vmatprep.subr.bf16.mxu0 0
    %2356 = vmatpush1.bf16.xpose.msra.mxu0 0
    %2357 = vmatprep.subr.bf16.mxu0 0
    %2358 = vmatpush1.bf16.xpose.msra.mxu0 0
    %2359 = vmatprep.subr.bf16.mxu0 0
    %2360 = vmatpush1.bf16.xpose.msra.mxu0 0
    %2361 = vmatprep.subr.bf16.mxu0 0
    %2362 = vmatpush1.bf16.xpose.msra.mxu0 0
    %2363 = vmatprep.subr.bf16.mxu0 0
    %2364 = vmatpush1.bf16.xpose.msra.mxu0 0
    %2365 = vmatprep.subr.bf16.mxu0 0
    %2366 = vmatpush1.bf16.xpose.msra.mxu0 0
    %2367 = vmatprep.subr.bf16.mxu0 0
    %2368 = vmatpush1.bf16.xpose.msra.mxu0 0
    %2369 = vmatprep.subr.bf16.mxu0 0
    %2370 = vmatpush1.bf16.xpose.msra.mxu0 0
    %2371 = vmatprep.mubr.bf16.mxu0 0
    %2372 = vmatmul.mubr.bf16.gmra.mrb[0].mxu0 %v2334
    %v2373 = vpop.f32.mrb[0].mxu0
    %v2374 = vadd.f32 0.0, %v2373
    %v2375 = vpop.f32.mrb[0].mxu0
    %v2376 = vpop.f32.mrb[0].mxu0
    %v2377 = vpop.f32.mrb[0].mxu0
    %2378 = vdwg.mxu0
    %v2379 = vmul.f32 %v2031, 0.35355338
    %v2380 = vmul.f32 %v2080, 0.35355338
    %v2381 = vmul.f32 %v2129, 0.35355338
    %v2382 = vmul.f32 %v2178, 0.35355338
    %v2383 = vmul.f32 %v2227, 0.35355338
    %v2384 = vmul.f32 %v2276, 0.35355338
    %v2385 = vmul.f32 %v2325, 0.35355338
    %v2386 = vmul.f32 %v2374, 0.35355338
    %v2387 = vsel %vm642, 1e-10, %v2379
    %v2388 = vsel %vm643, 1e-10, %v2380
    %v2389 = vsel %vm642, 1e-10, %v2381
    %v2390 = vsel %vm643, 1e-10, %v2382
    %v2391 = vsel %vm642, 1e-10, %v2383
    %v2392 = vsel %vm643, 1e-10, %v2384
    %v2393 = vsel %vm642, 1e-10, %v2385
    %v2394 = vsel %vm643, 1e-10, %v2386
    %v2395 = vsel %vm742, %v2387, -inf
    %2396 = vmax.xlane.f32.xlu0 %v2395
    %v2397 = vpop.xlane.xlu0 %2396
    %v2398 = vsel %vm742, %v2388, -inf
    %2399 = vmax.xlane.f32.xlu0 %v2398
    %v2400 = vpop.xlane.xlu0 %2399
    %v2401 = vsel %vm742, %v2389, -inf
    %2402 = vmax.xlane.f32.xlu0 %v2401
    %v2403 = vpop.xlane.xlu0 %2402
    %v2404 = vsel %vm742, %v2390, -inf
    %2405 = vmax.xlane.f32.xlu0 %v2404
    %v2406 = vpop.xlane.xlu0 %2405
    %v2407 = vsel %vm742, %v2391, -inf
    %2408 = vmax.xlane.f32.xlu0 %v2407
    %v2409 = vpop.xlane.xlu0 %2408
    %v2410 = vsel %vm742, %v2392, -inf
    %2411 = vmax.xlane.f32.xlu0 %v2410
    %v2412 = vpop.xlane.xlu0 %2411
    %v2413 = vsel %vm742, %v2393, -inf
    %2414 = vmax.xlane.f32.xlu0 %v2413
    %v2415 = vpop.xlane.xlu0 %2414
    %v2416 = vsel %vm742, %v2394, -inf
    %2417 = vmax.xlane.f32.xlu0 %v2416
    %v2418 = vpop.xlane.xlu0 %2417
    %v2419 = vsub.f32 %v2387, %v2397
    %v2420 = vsub.f32 %v2388, %v2400
    %v2421 = vsub.f32 %v2389, %v2403
    %v2422 = vsub.f32 %v2390, %v2406
    %v2423 = vsub.f32 %v2391, %v2409
    %v2424 = vsub.f32 %v2392, %v2412
    %v2425 = vsub.f32 %v2393, %v2415
    %v2426 = vsub.f32 %v2394, %v2418
    %v2427 = vmul.f32 %v2419, 1.442695
    %v2428 = vpow.pop %v2427
    %v2429 = vmul.f32 %v2420, 1.442695
    %v2430 = vpow.pop %v2429
    %v2431 = vmul.f32 %v2421, 1.442695
    %v2432 = vpow.pop %v2431
    %v2433 = vmul.f32 %v2422, 1.442695
    %v2434 = vpow.pop %v2433
    %v2435 = vmul.f32 %v2423, 1.442695
    %v2436 = vpow.pop %v2435
    %v2437 = vmul.f32 %v2424, 1.442695
    %v2438 = vpow.pop %v2437
    %v2439 = vmul.f32 %v2425, 1.442695
    %v2440 = vpow.pop %v2439
    %v2441 = vmul.f32 %v2426, 1.442695
    %v2442 = vpow.pop %v2441
    %v2443 = vsel %vm742, %v2428, 0.0
    %2444 = vadd.xlane.f32.xlu0 %v2443
    %v2445 = vpop.xlane.xlu0 %2444
    %v2446 = vsel %vm742, %v2430, 0.0
    %2447 = vadd.xlane.f32.xlu0 %v2446
    %v2448 = vpop.xlane.xlu0 %2447
    %v2449 = vsel %vm742, %v2432, 0.0
    %2450 = vadd.xlane.f32.xlu0 %v2449
    %v2451 = vpop.xlane.xlu0 %2450
    %v2452 = vsel %vm742, %v2434, 0.0
    %2453 = vadd.xlane.f32.xlu0 %v2452
    %v2454 = vpop.xlane.xlu0 %2453
    %v2455 = vsel %vm742, %v2436, 0.0
    %2456 = vadd.xlane.f32.xlu0 %v2455
    %v2457 = vpop.xlane.xlu0 %2456
    %v2458 = vsel %vm742, %v2438, 0.0
    %2459 = vadd.xlane.f32.xlu0 %v2458
    %v2460 = vpop.xlane.xlu0 %2459
    %v2461 = vsel %vm742, %v2440, 0.0
    %2462 = vadd.xlane.f32.xlu0 %v2461
    %v2463 = vpop.xlane.xlu0 %2462
    %v2464 = vsel %vm742, %v2442, 0.0
    %2465 = vadd.xlane.f32.xlu0 %v2464
    %v2466 = vpop.xlane.xlu0 %2465
    %v2467 = vrcp.pop %v2445
    %v2468 = vrcp.pop %v2448
    %v2469 = vrcp.pop %v2451
    %v2470 = vrcp.pop %v2454
    %v2471 = vrcp.pop %v2457
    %v2472 = vrcp.pop %v2460
    %v2473 = vrcp.pop %v2463
    %v2474 = vrcp.pop %v2466
    %v2475 = vmul.f32 %v2428, %v2467
    %v2476 = vmul.f32 %v2430, %v2468
    %v2477 = vmul.f32 %v2432, %v2469
    %v2478 = vmul.f32 %v2434, %v2470
    %v2479 = vmul.f32 %v2436, %v2471
    %v2480 = vmul.f32 %v2438, %v2472
    %v2481 = vmul.f32 %v2440, %v2473
    %v2482 = vmul.f32 %v2442, %v2474
    %v2483 = vpack.c.bf16 %v2475, %v2475
    %v2484 = vpack.c.bf16 %v2476, %v2476
    %v2485 = vpack.c.bf16 %v2477, %v2477
    %v2486 = vpack.c.bf16 %v2478, %v2478
    %v2487 = vpack.c.bf16 %v2479, %v2479
    %v2488 = vpack.c.bf16 %v2480, %v2480
    %v2489 = vpack.c.bf16 %v2481, %v2481
    %v2490 = vpack.c.bf16 %v2482, %v2482
    %2491 = vrot.lane.b32.xlu0 %v1979, 64
    %v2492 = vpop.permute.xlu0 %2491
    %v2494 = vsel %vm742, %v2483, 0
    %v2497 = vsel %vm1249, %v2492, 0
    %2499 = vmatprep.subr.bf16.mxu0 0
    %2500 = vmatpush1.bf16.msra.mxu0 %v2497
    %2501 = vmatprep.subr.bf16.mxu0 0
    %2502 = vmatpush1.bf16.msra.mxu0 0
    %2503 = vmatprep.subr.bf16.mxu0 0
    %2504 = vmatpush1.bf16.msra.mxu0 0
    %2505 = vmatprep.subr.bf16.mxu0 0
    %2506 = vmatpush1.bf16.msra.mxu0 0
    %2507 = vmatprep.subr.bf16.mxu0 0
    %2508 = vmatpush1.bf16.msra.mxu0 0
    %2509 = vmatprep.subr.bf16.mxu0 0
    %2510 = vmatpush1.bf16.msra.mxu0 0
    %2511 = vmatprep.subr.bf16.mxu0 0
    %2512 = vmatpush1.bf16.msra.mxu0 0
    %2513 = vmatprep.subr.bf16.mxu0 0
    %2514 = vmatpush1.bf16.msra.mxu0 0
    %2515 = vmatprep.subr.bf16.mxu0 0
    %2516 = vmatpush1.bf16.msra.mxu0 0
    %2517 = vmatprep.subr.bf16.mxu0 0
    %2518 = vmatpush1.bf16.msra.mxu0 0
    %2519 = vmatprep.subr.bf16.mxu0 0
    %2520 = vmatpush1.bf16.msra.mxu0 0
    %2521 = vmatprep.subr.bf16.mxu0 0
    %2522 = vmatpush1.bf16.msra.mxu0 0
    %2523 = vmatprep.subr.bf16.mxu0 0
    %2524 = vmatpush1.bf16.msra.mxu0 0
    %2525 = vmatprep.subr.bf16.mxu0 0
    %2526 = vmatpush1.bf16.msra.mxu0 0
    %2527 = vmatprep.subr.bf16.mxu0 0
    %2528 = vmatpush1.bf16.msra.mxu0 0
    %2529 = vmatprep.subr.bf16.mxu0 0
    %2530 = vmatpush1.bf16.msra.mxu0 0
    %2531 = vmatprep.mubr.bf16.mxu0 0
    %2532 = vmatmul.mubr.bf16.gmra.mrb[0].mxu0 %v2494
    %v2533 = vpop.f32.mrb[0].mxu0
    %v2534 = vadd.f32 0.0, %v2533
    %v2535 = vpop.f32.mrb[0].mxu0
    %v2536 = vpop.f32.mrb[0].mxu0
    %v2537 = vpop.f32.mrb[0].mxu0
    %2538 = vdwg.mxu0
    %2539 = vrot.lane.b32.xlu0 %v1980, 64
    %v2540 = vpop.permute.xlu0 %2539
    %v2542 = vsel %vm742, %v2484, 0
    %v2545 = vsel %vm1249, %v2540, 0
    %2547 = vmatprep.subr.bf16.mxu0 0
    %2548 = vmatpush1.bf16.msra.mxu0 %v2545
    %2549 = vmatprep.subr.bf16.mxu0 0
    %2550 = vmatpush1.bf16.msra.mxu0 0
    %2551 = vmatprep.subr.bf16.mxu0 0
    %2552 = vmatpush1.bf16.msra.mxu0 0
    %2553 = vmatprep.subr.bf16.mxu0 0
    %2554 = vmatpush1.bf16.msra.mxu0 0
    %2555 = vmatprep.subr.bf16.mxu0 0
    %2556 = vmatpush1.bf16.msra.mxu0 0
    %2557 = vmatprep.subr.bf16.mxu0 0
    %2558 = vmatpush1.bf16.msra.mxu0 0
    %2559 = vmatprep.subr.bf16.mxu0 0
    %2560 = vmatpush1.bf16.msra.mxu0 0
    %2561 = vmatprep.subr.bf16.mxu0 0
    %2562 = vmatpush1.bf16.msra.mxu0 0
    %2563 = vmatprep.subr.bf16.mxu0 0
    %2564 = vmatpush1.bf16.msra.mxu0 0
    %2565 = vmatprep.subr.bf16.mxu0 0
    %2566 = vmatpush1.bf16.msra.mxu0 0
    %2567 = vmatprep.subr.bf16.mxu0 0
    %2568 = vmatpush1.bf16.msra.mxu0 0
    %2569 = vmatprep.subr.bf16.mxu0 0
    %2570 = vmatpush1.bf16.msra.mxu0 0
    %2571 = vmatprep.subr.bf16.mxu0 0
    %2572 = vmatpush1.bf16.msra.mxu0 0
    %2573 = vmatprep.subr.bf16.mxu0 0
    %2574 = vmatpush1.bf16.msra.mxu0 0
    %2575 = vmatprep.subr.bf16.mxu0 0
    %2576 = vmatpush1.bf16.msra.mxu0 0
    %2577 = vmatprep.subr.bf16.mxu0 0
    %2578 = vmatpush1.bf16.msra.mxu0 0
    %2579 = vmatprep.mubr.bf16.mxu0 0
    %2580 = vmatmul.mubr.bf16.gmra.mrb[0].mxu0 %v2542
    %v2581 = vpop.f32.mrb[0].mxu0
    %v2582 = vadd.f32 0.0, %v2581
    %v2583 = vpop.f32.mrb[0].mxu0
    %v2584 = vpop.f32.mrb[0].mxu0
    %v2585 = vpop.f32.mrb[0].mxu0
    %2586 = vdwg.mxu0
    %2587 = vrot.lane.b32.xlu0 %v1981, 64
    %v2588 = vpop.permute.xlu0 %2587
    %v2590 = vsel %vm742, %v2485, 0
    %v2593 = vsel %vm1249, %v2588, 0
    %2595 = vmatprep.subr.bf16.mxu0 0
    %2596 = vmatpush1.bf16.msra.mxu0 %v2593
    %2597 = vmatprep.subr.bf16.mxu0 0
    %2598 = vmatpush1.bf16.msra.mxu0 0
    %2599 = vmatprep.subr.bf16.mxu0 0
    %2600 = vmatpush1.bf16.msra.mxu0 0
    %2601 = vmatprep.subr.bf16.mxu0 0
    %2602 = vmatpush1.bf16.msra.mxu0 0
    %2603 = vmatprep.subr.bf16.mxu0 0
    %2604 = vmatpush1.bf16.msra.mxu0 0
    %2605 = vmatprep.subr.bf16.mxu0 0
    %2606 = vmatpush1.bf16.msra.mxu0 0
    %2607 = vmatprep.subr.bf16.mxu0 0
    %2608 = vmatpush1.bf16.msra.mxu0 0
    %2609 = vmatprep.subr.bf16.mxu0 0
    %2610 = vmatpush1.bf16.msra.mxu0 0
    %2611 = vmatprep.subr.bf16.mxu0 0
    %2612 = vmatpush1.bf16.msra.mxu0 0
    %2613 = vmatprep.subr.bf16.mxu0 0
    %2614 = vmatpush1.bf16.msra.mxu0 0
    %2615 = vmatprep.subr.bf16.mxu0 0
    %2616 = vmatpush1.bf16.msra.mxu0 0
    %2617 = vmatprep.subr.bf16.mxu0 0
    %2618 = vmatpush1.bf16.msra.mxu0 0
    %2619 = vmatprep.subr.bf16.mxu0 0
    %2620 = vmatpush1.bf16.msra.mxu0 0
    %2621 = vmatprep.subr.bf16.mxu0 0
    %2622 = vmatpush1.bf16.msra.mxu0 0
    %2623 = vmatprep.subr.bf16.mxu0 0
    %2624 = vmatpush1.bf16.msra.mxu0 0
    %2625 = vmatprep.subr.bf16.mxu0 0
    %2626 = vmatpush1.bf16.msra.mxu0 0
    %2627 = vmatprep.mubr.bf16.mxu0 0
    %2628 = vmatmul.mubr.bf16.gmra.mrb[0].mxu0 %v2590
    %v2629 = vpop.f32.mrb[0].mxu0
    %v2630 = vadd.f32 0.0, %v2629
    %v2631 = vpop.f32.mrb[0].mxu0
    %v2632 = vpop.f32.mrb[0].mxu0
    %v2633 = vpop.f32.mrb[0].mxu0
    %2634 = vdwg.mxu0
    %2635 = vrot.lane.b32.xlu0 %v1982, 64
    %v2636 = vpop.permute.xlu0 %2635
    %v2638 = vsel %vm742, %v2486, 0
    %v2641 = vsel %vm1249, %v2636, 0
    %2643 = vmatprep.subr.bf16.mxu0 0
    %2644 = vmatpush1.bf16.msra.mxu0 %v2641
    %2645 = vmatprep.subr.bf16.mxu0 0
    %2646 = vmatpush1.bf16.msra.mxu0 0
    %2647 = vmatprep.subr.bf16.mxu0 0
    %2648 = vmatpush1.bf16.msra.mxu0 0
    %2649 = vmatprep.subr.bf16.mxu0 0
    %2650 = vmatpush1.bf16.msra.mxu0 0
    %2651 = vmatprep.subr.bf16.mxu0 0
    %2652 = vmatpush1.bf16.msra.mxu0 0
    %2653 = vmatprep.subr.bf16.mxu0 0
    %2654 = vmatpush1.bf16.msra.mxu0 0
    %2655 = vmatprep.subr.bf16.mxu0 0
    %2656 = vmatpush1.bf16.msra.mxu0 0
    %2657 = vmatprep.subr.bf16.mxu0 0
    %2658 = vmatpush1.bf16.msra.mxu0 0
    %2659 = vmatprep.subr.bf16.mxu0 0
    %2660 = vmatpush1.bf16.msra.mxu0 0
    %2661 = vmatprep.subr.bf16.mxu0 0
    %2662 = vmatpush1.bf16.msra.mxu0 0
    %2663 = vmatprep.subr.bf16.mxu0 0
    %2664 = vmatpush1.bf16.msra.mxu0 0
    %2665 = vmatprep.subr.bf16.mxu0 0
    %2666 = vmatpush1.bf16.msra.mxu0 0
    %2667 = vmatprep.subr.bf16.mxu0 0
    %2668 = vmatpush1.bf16.msra.mxu0 0
    %2669 = vmatprep.subr.bf16.mxu0 0
    %2670 = vmatpush1.bf16.msra.mxu0 0
    %2671 = vmatprep.subr.bf16.mxu0 0
    %2672 = vmatpush1.bf16.msra.mxu0 0
    %2673 = vmatprep.subr.bf16.mxu0 0
    %2674 = vmatpush1.bf16.msra.mxu0 0
    %2675 = vmatprep.mubr.bf16.mxu0 0
    %2676 = vmatmul.mubr.bf16.gmra.mrb[0].mxu0 %v2638
    %v2677 = vpop.f32.mrb[0].mxu0
    %v2678 = vadd.f32 0.0, %v2677
    %v2679 = vpop.f32.mrb[0].mxu0
    %v2680 = vpop.f32.mrb[0].mxu0
    %v2681 = vpop.f32.mrb[0].mxu0
    %2682 = vdwg.mxu0
    %2683 = vrot.lane.b32.xlu0 %v1983, 64
    %v2684 = vpop.permute.xlu0 %2683
    %v2686 = vsel %vm742, %v2487, 0
    %v2689 = vsel %vm1249, %v2684, 0
    %2691 = vmatprep.subr.bf16.mxu0 0
    %2692 = vmatpush1.bf16.msra.mxu0 %v2689
    %2693 = vmatprep.subr.bf16.mxu0 0
    %2694 = vmatpush1.bf16.msra.mxu0 0
    %2695 = vmatprep.subr.bf16.mxu0 0
    %2696 = vmatpush1.bf16.msra.mxu0 0
    %2697 = vmatprep.subr.bf16.mxu0 0
    %2698 = vmatpush1.bf16.msra.mxu0 0
    %2699 = vmatprep.subr.bf16.mxu0 0
    %2700 = vmatpush1.bf16.msra.mxu0 0
    %2701 = vmatprep.subr.bf16.mxu0 0
    %2702 = vmatpush1.bf16.msra.mxu0 0
    %2703 = vmatprep.subr.bf16.mxu0 0
    %2704 = vmatpush1.bf16.msra.mxu0 0
    %2705 = vmatprep.subr.bf16.mxu0 0
    %2706 = vmatpush1.bf16.msra.mxu0 0
    %2707 = vmatprep.subr.bf16.mxu0 0
    %2708 = vmatpush1.bf16.msra.mxu0 0
    %2709 = vmatprep.subr.bf16.mxu0 0
    %2710 = vmatpush1.bf16.msra.mxu0 0
    %2711 = vmatprep.subr.bf16.mxu0 0
    %2712 = vmatpush1.bf16.msra.mxu0 0
    %2713 = vmatprep.subr.bf16.mxu0 0
    %2714 = vmatpush1.bf16.msra.mxu0 0
    %2715 = vmatprep.subr.bf16.mxu0 0
    %2716 = vmatpush1.bf16.msra.mxu0 0
    %2717 = vmatprep.subr.bf16.mxu0 0
    %2718 = vmatpush1.bf16.msra.mxu0 0
    %2719 = vmatprep.subr.bf16.mxu0 0
    %2720 = vmatpush1.bf16.msra.mxu0 0
    %2721 = vmatprep.subr.bf16.mxu0 0
    %2722 = vmatpush1.bf16.msra.mxu0 0
    %2723 = vmatprep.mubr.bf16.mxu0 0
    %2724 = vmatmul.mubr.bf16.gmra.mrb[0].mxu0 %v2686
    %v2725 = vpop.f32.mrb[0].mxu0
    %v2726 = vadd.f32 0.0, %v2725
    %v2727 = vpop.f32.mrb[0].mxu0
    %v2728 = vpop.f32.mrb[0].mxu0
    %v2729 = vpop.f32.mrb[0].mxu0
    %2730 = vdwg.mxu0
    %2731 = vrot.lane.b32.xlu0 %v1984, 64
    %v2732 = vpop.permute.xlu0 %2731
    %v2734 = vsel %vm742, %v2488, 0
    %v2737 = vsel %vm1249, %v2732, 0
    %2739 = vmatprep.subr.bf16.mxu0 0
    %2740 = vmatpush1.bf16.msra.mxu0 %v2737
    %2741 = vmatprep.subr.bf16.mxu0 0
    %2742 = vmatpush1.bf16.msra.mxu0 0
    %2743 = vmatprep.subr.bf16.mxu0 0
    %2744 = vmatpush1.bf16.msra.mxu0 0
    %2745 = vmatprep.subr.bf16.mxu0 0
    %2746 = vmatpush1.bf16.msra.mxu0 0
    %2747 = vmatprep.subr.bf16.mxu0 0
    %2748 = vmatpush1.bf16.msra.mxu0 0
    %2749 = vmatprep.subr.bf16.mxu0 0
    %2750 = vmatpush1.bf16.msra.mxu0 0
    %2751 = vmatprep.subr.bf16.mxu0 0
    %2752 = vmatpush1.bf16.msra.mxu0 0
    %2753 = vmatprep.subr.bf16.mxu0 0
    %2754 = vmatpush1.bf16.msra.mxu0 0
    %2755 = vmatprep.subr.bf16.mxu0 0
    %2756 = vmatpush1.bf16.msra.mxu0 0
    %2757 = vmatprep.subr.bf16.mxu0 0
    %2758 = vmatpush1.bf16.msra.mxu0 0
    %2759 = vmatprep.subr.bf16.mxu0 0
    %2760 = vmatpush1.bf16.msra.mxu0 0
    %2761 = vmatprep.subr.bf16.mxu0 0
    %2762 = vmatpush1.bf16.msra.mxu0 0
    %2763 = vmatprep.subr.bf16.mxu0 0
    %2764 = vmatpush1.bf16.msra.mxu0 0
    %2765 = vmatprep.subr.bf16.mxu0 0
    %2766 = vmatpush1.bf16.msra.mxu0 0
    %2767 = vmatprep.subr.bf16.mxu0 0
    %2768 = vmatpush1.bf16.msra.mxu0 0
    %2769 = vmatprep.subr.bf16.mxu0 0
    %2770 = vmatpush1.bf16.msra.mxu0 0
    %2771 = vmatprep.mubr.bf16.mxu0 0
    %2772 = vmatmul.mubr.bf16.gmra.mrb[0].mxu0 %v2734
    %v2773 = vpop.f32.mrb[0].mxu0
    %v2774 = vadd.f32 0.0, %v2773
    %v2775 = vpop.f32.mrb[0].mxu0
    %v2776 = vpop.f32.mrb[0].mxu0
    %v2777 = vpop.f32.mrb[0].mxu0
    %2778 = vdwg.mxu0
    %2779 = vrot.lane.b32.xlu0 %v1985, 64
    %v2780 = vpop.permute.xlu0 %2779
    %v2782 = vsel %vm742, %v2489, 0
    %v2785 = vsel %vm1249, %v2780, 0
    %2787 = vmatprep.subr.bf16.mxu0 0
    %2788 = vmatpush1.bf16.msra.mxu0 %v2785
    %2789 = vmatprep.subr.bf16.mxu0 0
    %2790 = vmatpush1.bf16.msra.mxu0 0
    %2791 = vmatprep.subr.bf16.mxu0 0
    %2792 = vmatpush1.bf16.msra.mxu0 0
    %2793 = vmatprep.subr.bf16.mxu0 0
    %2794 = vmatpush1.bf16.msra.mxu0 0
    %2795 = vmatprep.subr.bf16.mxu0 0
    %2796 = vmatpush1.bf16.msra.mxu0 0
    %2797 = vmatprep.subr.bf16.mxu0 0
    %2798 = vmatpush1.bf16.msra.mxu0 0
    %2799 = vmatprep.subr.bf16.mxu0 0
    %2800 = vmatpush1.bf16.msra.mxu0 0
    %2801 = vmatprep.subr.bf16.mxu0 0
    %2802 = vmatpush1.bf16.msra.mxu0 0
    %2803 = vmatprep.subr.bf16.mxu0 0
    %2804 = vmatpush1.bf16.msra.mxu0 0
    %2805 = vmatprep.subr.bf16.mxu0 0
    %2806 = vmatpush1.bf16.msra.mxu0 0
    %2807 = vmatprep.subr.bf16.mxu0 0
    %2808 = vmatpush1.bf16.msra.mxu0 0
    %2809 = vmatprep.subr.bf16.mxu0 0
    %2810 = vmatpush1.bf16.msra.mxu0 0
    %2811 = vmatprep.subr.bf16.mxu0 0
    %2812 = vmatpush1.bf16.msra.mxu0 0
    %2813 = vmatprep.subr.bf16.mxu0 0
    %2814 = vmatpush1.bf16.msra.mxu0 0
    %2815 = vmatprep.subr.bf16.mxu0 0
    %2816 = vmatpush1.bf16.msra.mxu0 0
    %2817 = vmatprep.subr.bf16.mxu0 0
    %2818 = vmatpush1.bf16.msra.mxu0 0
    %2819 = vmatprep.mubr.bf16.mxu0 0
    %2820 = vmatmul.mubr.bf16.gmra.mrb[0].mxu0 %v2782
    %v2821 = vpop.f32.mrb[0].mxu0
    %v2822 = vadd.f32 0.0, %v2821
    %v2823 = vpop.f32.mrb[0].mxu0
    %v2824 = vpop.f32.mrb[0].mxu0
    %v2825 = vpop.f32.mrb[0].mxu0
    %2826 = vdwg.mxu0
    %2827 = vrot.lane.b32.xlu0 %v1986, 64
    %v2828 = vpop.permute.xlu0 %2827
    %v2830 = vsel %vm742, %v2490, 0
    %v2833 = vsel %vm1249, %v2828, 0
    %2835 = vmatprep.subr.bf16.mxu0 0
    %2836 = vmatpush1.bf16.msra.mxu0 %v2833
    %2837 = vmatprep.subr.bf16.mxu0 0
    %2838 = vmatpush1.bf16.msra.mxu0 0
    %2839 = vmatprep.subr.bf16.mxu0 0
    %2840 = vmatpush1.bf16.msra.mxu0 0
    %2841 = vmatprep.subr.bf16.mxu0 0
    %2842 = vmatpush1.bf16.msra.mxu0 0
    %2843 = vmatprep.subr.bf16.mxu0 0
    %2844 = vmatpush1.bf16.msra.mxu0 0
    %2845 = vmatprep.subr.bf16.mxu0 0
    %2846 = vmatpush1.bf16.msra.mxu0 0
    %2847 = vmatprep.subr.bf16.mxu0 0
    %2848 = vmatpush1.bf16.msra.mxu0 0
    %2849 = vmatprep.subr.bf16.mxu0 0
    %2850 = vmatpush1.bf16.msra.mxu0 0
    %2851 = vmatprep.subr.bf16.mxu0 0
    %2852 = vmatpush1.bf16.msra.mxu0 0
    %2853 = vmatprep.subr.bf16.mxu0 0
    %2854 = vmatpush1.bf16.msra.mxu0 0
    %2855 = vmatprep.subr.bf16.mxu0 0
    %2856 = vmatpush1.bf16.msra.mxu0 0
    %2857 = vmatprep.subr.bf16.mxu0 0
    %2858 = vmatpush1.bf16.msra.mxu0 0
    %2859 = vmatprep.subr.bf16.mxu0 0
    %2860 = vmatpush1.bf16.msra.mxu0 0
    %2861 = vmatprep.subr.bf16.mxu0 0
    %2862 = vmatpush1.bf16.msra.mxu0 0
    %2863 = vmatprep.subr.bf16.mxu0 0
    %2864 = vmatpush1.bf16.msra.mxu0 0
    %2865 = vmatprep.subr.bf16.mxu0 0
    %2866 = vmatpush1.bf16.msra.mxu0 0
    %2867 = vmatprep.mubr.bf16.mxu0 0
    %2868 = vmatmul.mubr.bf16.gmra.mrb[0].mxu0 %v2830
    %v2869 = vpop.f32.mrb[0].mxu0
    %v2870 = vadd.f32 0.0, %v2869
    %v2871 = vpop.f32.mrb[0].mxu0
    %v2872 = vpop.f32.mrb[0].mxu0
    %v2873 = vpop.f32.mrb[0].mxu0
    %2874 = vdwg.mxu0
    %2877 = vrot.lane.b32.xlu0 %v2630, 8
    %v2878 = vpop.permute.xlu0 %2877
    %2879 = vrot.lane.b32.xlu0 %v2678, 8
    %v2880 = vpop.permute.xlu0 %2879
    %2885 = vrot.lane.b32.xlu0 %v2726, 16
    %v2886 = vpop.permute.xlu0 %2885
    %2887 = vrot.lane.b32.xlu0 %v2774, 16
    %v2888 = vpop.permute.xlu0 %2887
    %2893 = vrot.lane.b32.xlu0 %v2822, 24
    %v2894 = vpop.permute.xlu0 %2893
    %2895 = vrot.lane.b32.xlu0 %v2870, 24
    %v2896 = vpop.permute.xlu0 %2895
    %v2899 = vsel %vm742, %v2534, %v2878
    %v2900 = vsel %vm742, %v2582, %v2880
    %v2901 = vsel %vm1655, %v2899, %v2886
    %v2902 = vsel %vm1655, %v2900, %v2888
    %v2903 = vsel %vm1658, %v2901, %v2894
    %v2904 = vsel %vm1658, %v2902, %v2896
    %v2905 = vadd.f32 %v2903, %v1889
    %v2906 = vadd.f32 %v2904, %v1890
    %v2907 = vsel %vm666, %v2905, 0.0
    %2908 = vadd.xlane.f32.xlu0 %v2907
    %v2909 = vpop.xlane.xlu0 %2908
    %v2910 = vsel %vm666, %v2906, 0.0
    %2911 = vadd.xlane.f32.xlu0 %v2910
    %v2912 = vpop.xlane.xlu0 %2911
    %v2913 = vmul.f32 %v2909, %v1669
    %v2914 = vmul.f32 %v2912, %v1669
    %v2915 = vsub.f32 %v2905, %v2913
    %v2916 = vsub.f32 %v2906, %v2914
    %v2917 = vmul.f32 %v2915, %v2915
    %v2918 = vmul.f32 %v2916, %v2916
    %v2919 = vsel %vm666, %v2917, 0.0
    %2920 = vadd.xlane.f32.xlu0 %v2919
    %v2921 = vpop.xlane.xlu0 %2920
    %v2922 = vsel %vm666, %v2918, 0.0
    %2923 = vadd.xlane.f32.xlu0 %v2922
    %v2924 = vpop.xlane.xlu0 %2923
    %v2925 = vmul.f32 %v2921, %v1669
    %v2926 = vmul.f32 %v2924, %v1669
    %v2927 = vadd.f32 %v2925, 1e-05
    %v2928 = vadd.f32 %v2926, 1e-05
    %v2929 = vrsqrt.pop %v2927
    %v2930 = vrsqrt.pop %v2928
    %v2931 = vmul.f32 %v2915, %v2929
    %v2932 = vmul.f32 %v2916, %v2930
    %v2933 = vlaneseq
    %v2934 = vshrl.u32 %v2933, 7
    %v2935 = vsub.s32 1, %v2934
    %v2936 = vrot.slane %v1892, %v2935
    %v2937 = vmul.f32 %v2931, %v2936
    %v2938 = vmul.f32 %v2932, %v2936
    %v2939 = vlaneseq
    %v2940 = vshrl.u32 %v2939, 7
    %v2941 = vsub.s32 2, %v2940
    %v2942 = vrot.slane %v1892, %v2941
    %v2943 = vadd.f32 %v2937, %v2942
    %v2944 = vadd.f32 %v2938, %v2942
    %v2945 = vpack.c.bf16 %v2944, %v2943
    %s2946 = scalar_lea.vmem %s4, 16
    %v2947 = vld [vmem:[%s2946] sm:$0xf]
    %v2948 = vld [vmem:[%s2946 + $0x4] sm:$0xf]
    %v2949 = vld [vmem:[%s2946 + $0x8] sm:$0xf]
    %v2950 = vld [vmem:[%s2946 + $0xc] sm:$0xf]
    %v2951 = vlaneseq
    %v2952 = vshrl.u32 %v2951, 7
    %v2953 = vsub.s32 3, %v2952
    %v2954 = vrot.slane %v1892, %v2953
    %v2959 = vunpack.c.l.b16 %v2947
    %v2960 = vunpack.c.l.b16 %v2948
    %v2961 = vunpack.c.l.b16 %v2949
    %v2962 = vunpack.c.l.b16 %v2950
    %v2963 = vpack.c.b16 %v2960, %v2959
    %v2964 = vpack.c.b16 %v2962, %v2961
    %v2968 = vsel %vm666, %v2945, 0
    %2970 = vmatprep.subr.bf16.mxu0 0
    %2971 = vmatpush1.bf16.msra.mxu0 %v2963
    %2972 = vmatprep.subr.bf16.mxu0 0
    %2973 = vmatpush1.bf16.msra.mxu0 %v2964
    %2974 = vmatprep.subr.bf16.mxu0 0
    %2975 = vmatpush1.bf16.msra.mxu0 0
    %2976 = vmatprep.subr.bf16.mxu0 0
    %2977 = vmatpush1.bf16.msra.mxu0 0
    %2978 = vmatprep.subr.bf16.mxu0 0
    %2979 = vmatpush1.bf16.msra.mxu0 0
    %2980 = vmatprep.subr.bf16.mxu0 0
    %2981 = vmatpush1.bf16.msra.mxu0 0
    %2982 = vmatprep.subr.bf16.mxu0 0
    %2983 = vmatpush1.bf16.msra.mxu0 0
    %2984 = vmatprep.subr.bf16.mxu0 0
    %2985 = vmatpush1.bf16.msra.mxu0 0
    %2986 = vmatprep.subr.bf16.mxu0 0
    %2987 = vmatpush1.bf16.msra.mxu0 0
    %2988 = vmatprep.subr.bf16.mxu0 0
    %2989 = vmatpush1.bf16.msra.mxu0 0
    %2990 = vmatprep.subr.bf16.mxu0 0
    %2991 = vmatpush1.bf16.msra.mxu0 0
    %2992 = vmatprep.subr.bf16.mxu0 0
    %2993 = vmatpush1.bf16.msra.mxu0 0
    %2994 = vmatprep.subr.bf16.mxu0 0
    %2995 = vmatpush1.bf16.msra.mxu0 0
    %2996 = vmatprep.subr.bf16.mxu0 0
    %2997 = vmatpush1.bf16.msra.mxu0 0
    %2998 = vmatprep.subr.bf16.mxu0 0
    %2999 = vmatpush1.bf16.msra.mxu0 0
    %3000 = vmatprep.subr.bf16.mxu0 0
    %3001 = vmatpush1.bf16.msra.mxu0 0
    %3002 = vmatprep.mubr.bf16.mxu0 0
    %3003 = vmatmul.mubr.bf16.gmra.mrb[0].mxu0 %v2968
    %v3004 = vpop.f32.mrb[0].mxu0
    %v3005 = vadd.f32 %v2954, %v3004
    %v3006 = vpop.f32.mrb[0].mxu0
    %v3007 = vpop.f32.mrb[0].mxu0
    %v3008 = vadd.f32 %v2954, %v3007
    %v3009 = vpop.f32.mrb[0].mxu0
    %3010 = vdwg.mxu0
    %v3011 = vmax.f32 %v3005, 0.0
    %v3012 = vmax.f32 %v3008, 0.0
    %v3013 = vpack.c.bf16 %v3012, %v3011
    %s3014 = scalar_lea.vmem %s5, 32
    %v3015 = vld [vmem:[%s3014] sm:$0xf]
    %v3016 = vld [vmem:[%s3014 + $0x4] sm:$0xf]
    %v3017 = vld [vmem:[%s3014 + $0x8] sm:$0xf]
    %v3018 = vld [vmem:[%s3014 + $0xc] sm:$0xf]
    %v3019 = vld [vmem:[%s3014 + $0x10] sm:$0xf]
    %v3020 = vld [vmem:[%s3014 + $0x14] sm:$0xf]
    %v3021 = vld [vmem:[%s3014 + $0x18] sm:$0xf]
    %v3022 = vld [vmem:[%s3014 + $0x1c] sm:$0xf]
    %v3023 = vlaneseq
    %v3024 = vshrl.u32 %v3023, 7
    %v3025 = vsub.s32 4, %v3024
    %v3026 = vrot.slane %v1892, %v3025
    %v3035 = vunpack.c.l.b16 %v3015
    %v3036 = vunpack.c.l.b16 %v3016
    %v3037 = vunpack.c.l.b16 %v3017
    %v3038 = vunpack.c.l.b16 %v3018
    %v3039 = vunpack.c.l.b16 %v3019
    %v3040 = vunpack.c.l.b16 %v3020
    %v3041 = vunpack.c.l.b16 %v3021
    %v3042 = vunpack.c.l.b16 %v3022
    %v3043 = vpack.c.b16 %v3036, %v3035
    %v3044 = vpack.c.b16 %v3038, %v3037
    %v3045 = vpack.c.b16 %v3040, %v3039
    %v3046 = vpack.c.b16 %v3042, %v3041
    %v3052 = vsel %vm1806, %v3013, 0
    %3054 = vmatprep.subr.bf16.mxu0 0
    %3055 = vmatpush1.bf16.msra.mxu0 %v3043
    %3056 = vmatprep.subr.bf16.mxu0 0
    %3057 = vmatpush1.bf16.msra.mxu0 %v3044
    %3058 = vmatprep.subr.bf16.mxu0 0
    %3059 = vmatpush1.bf16.msra.mxu0 %v3045
    %3060 = vmatprep.subr.bf16.mxu0 0
    %3061 = vmatpush1.bf16.msra.mxu0 %v3046
    %3062 = vmatprep.subr.bf16.mxu0 0
    %3063 = vmatpush1.bf16.msra.mxu0 0
    %3064 = vmatprep.subr.bf16.mxu0 0
    %3065 = vmatpush1.bf16.msra.mxu0 0
    %3066 = vmatprep.subr.bf16.mxu0 0
    %3067 = vmatpush1.bf16.msra.mxu0 0
    %3068 = vmatprep.subr.bf16.mxu0 0
    %3069 = vmatpush1.bf16.msra.mxu0 0
    %3070 = vmatprep.subr.bf16.mxu0 0
    %3071 = vmatpush1.bf16.msra.mxu0 0
    %3072 = vmatprep.subr.bf16.mxu0 0
    %3073 = vmatpush1.bf16.msra.mxu0 0
    %3074 = vmatprep.subr.bf16.mxu0 0
    %3075 = vmatpush1.bf16.msra.mxu0 0
    %3076 = vmatprep.subr.bf16.mxu0 0
    %3077 = vmatpush1.bf16.msra.mxu0 0
    %3078 = vmatprep.subr.bf16.mxu0 0
    %3079 = vmatpush1.bf16.msra.mxu0 0
    %3080 = vmatprep.subr.bf16.mxu0 0
    %3081 = vmatpush1.bf16.msra.mxu0 0
    %3082 = vmatprep.subr.bf16.mxu0 0
    %3083 = vmatpush1.bf16.msra.mxu0 0
    %3084 = vmatprep.subr.bf16.mxu0 0
    %3085 = vmatpush1.bf16.msra.mxu0 0
    %3086 = vmatprep.mubr.bf16.mxu0 0
    %3087 = vmatmul.mubr.bf16.gmra.mrb[0].mxu0 %v3052
    %v3088 = vpop.f32.mrb[0].mxu0
    %v3089 = vadd.f32 %v3026, %v3088
    %v3090 = vpop.f32.mrb[0].mxu0
    %v3091 = vpop.f32.mrb[0].mxu0
    %v3092 = vadd.f32 %v3026, %v3091
    %v3093 = vpop.f32.mrb[0].mxu0
    %3094 = vdwg.mxu0
    %v3095 = vadd.f32 %v3089, %v2943
    %v3096 = vadd.f32 %v3092, %v2944
    %v3097 = vsel %vm666, %v3095, 0.0
    %3098 = vadd.xlane.f32.xlu0 %v3097
    %v3099 = vpop.xlane.xlu0 %3098
    %v3100 = vsel %vm666, %v3096, 0.0
    %3101 = vadd.xlane.f32.xlu0 %v3100
    %v3102 = vpop.xlane.xlu0 %3101
    %v3103 = vmul.f32 %v3099, %v1669
    %v3104 = vmul.f32 %v3102, %v1669
    %v3105 = vsub.f32 %v3095, %v3103
    %v3106 = vsub.f32 %v3096, %v3104
    %v3107 = vmul.f32 %v3105, %v3105
    %v3108 = vmul.f32 %v3106, %v3106
    %v3109 = vsel %vm666, %v3107, 0.0
    %3110 = vadd.xlane.f32.xlu0 %v3109
    %v3111 = vpop.xlane.xlu0 %3110
    %v3112 = vsel %vm666, %v3108, 0.0
    %3113 = vadd.xlane.f32.xlu0 %v3112
    %v3114 = vpop.xlane.xlu0 %3113
    %v3115 = vmul.f32 %v3111, %v1669
    %v3116 = vmul.f32 %v3114, %v1669
    %v3117 = vadd.f32 %v3115, 1e-05
    %v3118 = vadd.f32 %v3116, 1e-05
    %v3119 = vrsqrt.pop %v3117
    %v3120 = vrsqrt.pop %v3118
    %v3121 = vmul.f32 %v3105, %v3119
    %v3122 = vmul.f32 %v3106, %v3120
    %v3123 = vlaneseq
    %v3124 = vshrl.u32 %v3123, 7
    %v3125 = vsub.s32 5, %v3124
    %v3126 = vrot.slane %v1892, %v3125
    %v3127 = vmul.f32 %v3121, %v3126
    %v3128 = vmul.f32 %v3122, %v3126
    %v3129 = vlaneseq
    %v3130 = vshrl.u32 %v3129, 7
    %v3131 = vsub.s32 6, %v3130
    %v3132 = vrot.slane %v1892, %v3131
    %v3133 = vadd.f32 %v3127, %v3132
    %v3134 = vadd.f32 %v3128, %v3132
    %3135 = vst.msk [vmem:[#allocation2] sm:$0xff] %vm666, %v3133
    %3136 = vst.msk [vmem:[#allocation2 + $0x8] sm:$0xff] %vm666, %v3134
    // Predicated region
    $region30: #{encoder_forward.1} parent=1 // pred_check
      _
    $region31: #{encoder_forward.1} parent=1 // pred_check_branch
      %3138 = sbr.rel (0) target = $region33
    $region32: #{encoder_forward.1} parent=1 // pred_region
      %s3140 = ssub.s32 256, 256
      %3141 = vsyncadd [#allocation3], %s3140
      %s3142 = sshll.u32 [#allocation2], 4
      %s3143 = int_to_ptr.vmem [resolvable:$true] %s3142
      %3148 = dma.vmem_to_hbm [thread:$0]  %s3143, 256, %s7, [#allocation3], 128, 128, 8
    $region33: #{encoder_forward.1} parent=1 // pred_fallthru
      _
    // Predicated region
    $region34: #{encoder_forward.1} parent=1 // pred_check
      _
    $region35: #{encoder_forward.1} parent=1 // pred_check_branch
      %3150 = sbr.rel (0) target = $region37
    $region36: #{encoder_forward.1} parent=1 // pred_region
      %3151 = dma.done [#allocation3], 256
    $region37: #{encoder_forward.1} parent=1 // pred_fallthru
      _
    %3152 = vsyncpa [#allocation3], 1

</llo_original>
